<compile_context>
chip_gen: v6e
topology: v6e:2x2x1
jax: 0.10.0
libtpu: 0.0.40
codegen_flags: <defaults>
</compile_context>

<pallas_src>
import functools

import jax
import jax.numpy as jnp
from jax.experimental import pallas as pl
from jax.experimental.pallas import tpu as pltpu


def _round_up(x, m):
    return (x + m - 1) // m * m


def _largest_divisor_leq(total, cap):
    g = max(1, min(cap, total))
    while total % g:
        g -= 1
    return g


def _pick_group(total, requested, per_item_bytes, vmem_budget):
    """Largest divisor of `total` <= requested, capped by a double-buffered VMEM budget,
    preferring >= 2 grid steps so the parallel axis can split across TensorCores."""
    cap = max(1, vmem_budget // max(1, 2 * per_item_bytes))
    g = _largest_divisor_leq(total, min(requested, cap))
    if g == total and total > 1:
        g = _largest_divisor_leq(total, max(1, total // 2))
    return g


# ----------------------------------------------------------------------------
# Kernel 1: fused 1x1 convs (conv_map + fused q/k conv + v conv).
#   n_aux = ReLU(noisy @ Wmap_n + aux @ Wmap_a + b)
#   [q | k] = n_aux @ Wqk        (q-scale folded into the q half of Wqk)
#   v = noisy @ Wv
# bf16 MXU inputs, f32 accumulation, bf16 outputs.
# ----------------------------------------------------------------------------
def _proj_kernel(noisy_ref, aux_ref, wmn_ref, wma_ref, bmap_ref,
                 wqk_ref, wv_ref, q_ref, k_ref, v_ref):
    noisy = noisy_ref[...]                                   # (T, C) bf16
    aux = aux_ref[...]                                       # (T, C) bf16
    pre = (jnp.dot(noisy, wmn_ref[...], preferred_element_type=jnp.float32)
           + jnp.dot(aux, wma_ref[...], preferred_element_type=jnp.float32)
           + bmap_ref[...])
    n_aux = jnp.maximum(pre, 0.0).astype(jnp.bfloat16)       # ReLU, back to bf16
    qk = jnp.dot(n_aux, wqk_ref[...],
                 preferred_element_type=jnp.float32)         # (T, 2C) single MXU pass
    C = q_ref.shape[-1]
    q_ref[...] = qk[:, :C].astype(jnp.bfloat16)
    k_ref[...] = qk[:, C:].astype(jnp.bfloat16)
    v_ref[...] = jnp.dot(noisy, wv_ref[...],
                         preferred_element_type=jnp.float32).astype(jnp.bfloat16)


def project(noisy_flat, aux_flat, wmn, wma, bmap, wqk, wv, tile_n=1024):
    N, C = noisy_flat.shape
    # clamp tile for small inputs; keep >= 2 grid steps when there is enough work
    tile_n = min(tile_n, max(256, _round_up(N, 256) // 2))
    N_pad = _round_up(N, tile_n)
    if N_pad != N:
        pad = ((0, N_pad - N), (0, 0))
        noisy_flat = jnp.pad(noisy_flat, pad)
        aux_flat = jnp.pad(aux_flat, pad)

    row_spec = pl.BlockSpec((tile_n, C), lambda i: (i, 0))

    def full(a):
        return pl.BlockSpec(a.shape, lambda i: (0,) * a.ndim)

    out_sds = jax.ShapeDtypeStruct((N_pad, C), jnp.bfloat16)
    q, k, v = pl.pallas_call(
        _proj_kernel,
        out_shape=(out_sds, out_sds, out_sds),
        grid_spec=pltpu.PrefetchScalarGridSpec(
            num_scalar_prefetch=0,
            grid=(N_pad // tile_n,),
            in_specs=[row_spec, row_spec, full(wmn), full(wma), full(bmap),
                      full(wqk), full(wv)],
            out_specs=[row_spec, row_spec, row_spec]),
        compiler_params=pltpu.CompilerParams(
            dimension_semantics=("parallel",),
            vmem_limit_bytes=32 * 1024 * 1024),
    )(noisy_flat, aux_flat, wmn, wma, bmap, wqk, wv)
    return q[:N], k[:N], v[:N]


# ----------------------------------------------------------------------------
# Kernel 2: block-halo attention, all heads per grid step.
#   Blocks: q (G, nq, c), k/v (G, NK, c), rel (NK, c), out (G, nq, c) bf16.
#   Heads are contiguous head-major channel slices (torch layout); each head is a
#   small batched MXU matmul pair with an online exact softmax in between.
#   Key axis is padded to NK=128 lanes; dummy keys masked with -1e30.
# ----------------------------------------------------------------------------
def _attn_kernel(q_ref, k_ref, v_ref, rel_ref, o_ref, *, heads, nk_valid):
    q = q_ref[...]                                           # (G, nq, c) bf16 (pre-scaled)
    k = k_ref[...] + rel_ref[...]                            # (G, NK, c) bf16 + rel bias
    v = v_ref[...]                                           # (G, NK, c) bf16
    c = q.shape[-1]
    d = c // heads
    nk_pad = k.shape[1]

    key_mask = None
    if nk_valid < nk_pad:                                    # mask padded/dummy keys
        key_idx = jax.lax.broadcasted_iota(jnp.int32, (1, 1, nk_pad), 2)
        key_mask = key_idx < nk_valid

    for h in range(heads):                                   # static unroll
        sl = slice(h * d, (h + 1) * d)
        sim = jnp.einsum('gqd,gkd->gqk', q[..., sl], k[..., sl],
                         preferred_element_type=jnp.float32)  # (G, nq, NK) f32
        if key_mask is not None:
            sim = jnp.where(key_mask, sim, -1e30)
        sim = sim - jnp.max(sim, axis=-1, keepdims=True)
        p = jnp.exp(sim)
        p = p * pl.reciprocal(jnp.sum(p, axis=-1, keepdims=True), approx=True)
        out_h = jnp.einsum('gqk,gkd->gqd', p.astype(v.dtype), v[..., sl],
                           preferred_element_type=jnp.float32)
        o_ref[:, :, sl] = out_h.astype(o_ref.dtype)          # head-merged, c-wide block


def block_attention(q, k, v, rel, *, nk_valid, heads, group=64,
                    vmem_budget=16 << 20):
    Bp, nq, c = q.shape
    _, NK, _ = k.shape
    per_item = (2 * nq * c + 2 * NK * c) * 2                 # bf16 q,out,k,v per element
    g = _pick_group(Bp, group, per_item, vmem_budget)

    kern = functools.partial(_attn_kernel, heads=heads, nk_valid=nk_valid)
    out = pl.pallas_call(
        kern,
        out_shape=jax.ShapeDtypeStruct((Bp, nq, c), jnp.bfloat16),
        grid_spec=pltpu.PrefetchScalarGridSpec(
            num_scalar_prefetch=0,
            grid=(Bp // g,),
            in_specs=[pl.BlockSpec((g, nq, c), lambda i: (i, 0, 0)),
                      pl.BlockSpec((g, NK, c), lambda i: (i, 0, 0)),
                      pl.BlockSpec((g, NK, c), lambda i: (i, 0, 0)),
                      pl.BlockSpec((NK, c), lambda i: (0, 0))],
            out_specs=pl.BlockSpec((g, nq, c), lambda i: (i, 0, 0))),
        compiler_params=pltpu.CompilerParams(
            dimension_semantics=("parallel",),
            vmem_limit_bytes=32 * 1024 * 1024),
    )(q, k, v, rel)
    return out


# ----------------------------------------------------------------------------
# Parameter prep: split conv_map weight, fuse (scaled) Wq with Wk, cast to bf16.
# ----------------------------------------------------------------------------
def prepare_params(wmap, bmap, wq, wk, wv, rel_h, rel_w, heads):
    ch = wq.shape[0]
    d = ch // heads
    wqk = jnp.concatenate([wq.T * d ** (-0.5), wk.T], axis=1)   # (C, 2C), scale folded
    return dict(
        wmap_noisy_t=wmap[:, :ch].T.astype(jnp.bfloat16),
        wmap_aux_t=wmap[:, ch:].T.astype(jnp.bfloat16),
        bmap=bmap[None, :].astype(jnp.float32),
        wqk_t=wqk.astype(jnp.bfloat16),
        wv_t=wv.T.astype(jnp.bfloat16),
        rel_h=rel_h.astype(jnp.float32),
        rel_w=rel_w.astype(jnp.float32),
    )


# ----------------------------------------------------------------------------
# AFGSA forward (glue in plain JAX: layout changes, unfold patch gather)
# ----------------------------------------------------------------------------
def afgsa_forward(noisy, aux, params, block=5, halo=3, heads=4, sr=1,
                  proj_tile=1024, attn_group=64):
    assert sr == 1, "sr > 1 (MaxPool sampler + grouped ConvTranspose) not implemented"
    b, c, h, w = noisy.shape
    assert c % heads == 0 and h % block == 0 and w % block == 0
    d = c // heads
    nh, nw = h // block, w // block
    kk = block + 2 * halo
    nq, nk = block * block, kk * kk
    NK = _round_up(nk, 128)        # 121 -> 128 lane-aligned key tile
    Bp = b * nh * nw
    Hp, Wp = h + 2 * halo, w + 2 * halo

    noisy_flat = jnp.transpose(noisy, (0, 2, 3, 1)).reshape(b * h * w, c).astype(jnp.bfloat16)
    aux_flat = jnp.transpose(aux, (0, 2, 3, 1)).reshape(b * h * w, c).astype(jnp.bfloat16)

    q_flat, k_flat, v_flat = project(
        noisy_flat, aux_flat,
        params['wmap_noisy_t'], params['wmap_aux_t'], params['bmap'],
        params['wqk_t'], params['wv_t'], tile_n=proj_tile)

    # q: 'b c (h k1) (w k2) -> (b h w) (k1 k2) c'   (scale already in Wqk)
    q_blk = (q_flat.reshape(b, nh, block, nw, block, c)
             .transpose(0, 1, 3, 2, 4, 5).reshape(Bp, nq, c))

    # k, v: F.unfold(kernel=block+2*halo, stride=block, padding=halo), with the key
    # axis padded to NK directly in the gather (dummy positions masked in-kernel).
    # TODO(synk): replace with in-kernel halo-window DMA to avoid the ~4.8x K/V dup.
    t = jnp.arange(nk)
    r = jnp.arange(nh)[:, None, None] * block + (t // kk)[None, None, :]
    s = jnp.arange(nw)[None, :, None] * block + (t % kk)[None, None, :]
    win = r * Wp + s                                          # (nh, nw, nk)
    win = jnp.pad(win, ((0, 0), (0, 0), (0, NK - nk)))        # dummies -> index 0

    def extract(xflat):  # (b*h*w, c) bf16 -> (Bp, NK, c) bf16
        xm = xflat.reshape(b, h, w, c)
        xp = jnp.pad(xm, ((0, 0), (halo, halo), (halo, halo), (0, 0)))
        xp = xp.reshape(b, Hp * Wp, c)
        return xp[:, win, :].reshape(Bp, NK, c)

    k_blk = extract(k_flat)
    v_blk = extract(v_flat)

    # relative position bias (same for every head), head-major across channels,
    # padded to NK keys; added to K inside the kernel.
    hc2 = d // 2
    rel_d = jnp.concatenate(
        [jnp.broadcast_to(params['rel_h'][:, None, :], (kk, kk, hc2)),
         jnp.broadcast_to(params['rel_w'][None, :, :], (kk, kk, hc2))],
        axis=-1).reshape(nk, d)
    rel = jnp.tile(rel_d, (1, heads))                         # (nk, c)
    rel = jnp.pad(rel, ((0, NK - nk), (0, 0))).astype(jnp.bfloat16)

    out_blk = block_attention(q_blk, k_blk, v_blk, rel, nk_valid=nk,
                              heads=heads, group=attn_group)  # (Bp, nq, c) bf16

    # '(b h w) (k1 k2) c -> b c (h k1) (w k2)'
    out = (out_blk.reshape(b, nh, nw, block, block, c)
           .transpose(0, 5, 1, 3, 2, 4).reshape(b, c, h, w))
    return out.astype(jnp.float32)


# ----------------------------------------------------------------------------
# Pure-JAX reference (same bf16 projection policy; f32 attention math)
# ----------------------------------------------------------------------------
def afgsa_reference(noisy, aux, params, block=5, halo=3, heads=4):
    b, c, h, w = noisy.shape
    d = c // heads
    nh, nw = h // block, w // block
    kk = block + 2 * halo
    nq, nk = block * block, kk * kk
    Bp = b * nh * nw

    noisy_flat = jnp.transpose(noisy, (0, 2, 3, 1)).reshape(b * h * w, c).astype(jnp.bfloat16)
    aux_flat = jnp.transpose(aux, (0, 2, 3, 1)).reshape(b * h * w, c).astype(jnp.bfloat16)

    pre = (jnp.dot(noisy_flat, params['wmap_noisy_t'], preferred_element_type=jnp.float32)
           + jnp.dot(aux_flat, params['wmap_aux_t'], preferred_element_type=jnp.float32)
           + params['bmap'])
    n_aux = jnp.maximum(pre, 0.0).astype(jnp.bfloat16)
    wq_t = params['wqk_t'][:, :c]
    wk_t = params['wqk_t'][:, c:]
    q_map = jnp.dot(n_aux, wq_t,
                    preferred_element_type=jnp.float32).astype(jnp.bfloat16).reshape(b, h, w, c)
    k_map = jnp.dot(n_aux, wk_t,
                    preferred_element_type=jnp.float32).astype(jnp.bfloat16).reshape(b, h, w, c)
    v_map = jnp.dot(noisy_flat, params['wv_t'],
                    preferred_element_type=jnp.float32).astype(jnp.bfloat16).reshape(b, h, w, c)

    q_blk = (q_map.reshape(b, nh, block, nw, block, c)
             .transpose(0, 1, 3, 2, 4, 5).reshape(Bp, nq, c))

    def extract(xm):
        xp = jnp.pad(xm, ((0, 0), (halo, halo), (halo, halo), (0, 0)))
        rows = jnp.arange(nh)[:, None] * block + jnp.arange(kk)[None, :]
        cols = jnp.arange(nw)[:, None] * block + jnp.arange(kk)[None, :]
        patches = xp[:, rows[:, None, :, None], cols[None, :, None, :], :]
        return patches.reshape(Bp, nk, c)

    k_blk = extract(k_map)
    v_blk = extract(v_map)

    qh = q_blk.reshape(Bp, nq, heads, d).transpose(0, 2, 1, 3)
    kh = k_blk.reshape(Bp, nk, heads, d).transpose(0, 2, 1, 3)
    vh = v_blk.reshape(Bp, nk, heads, d).transpose(0, 2, 1, 3)

    hc2 = d // 2
    rel = jnp.concatenate(
        [jnp.broadcast_to(params['rel_h'][:, None, :], (kk, kk, hc2)),
         jnp.broadcast_to(params['rel_w'][None, :, :], (kk, kk, hc2))],
        axis=-1).reshape(nk, d).astype(jnp.bfloat16)
    kh = kh + rel[None, None]

    sim = jnp.einsum('bhid,bhjd->bhij', qh.astype(jnp.float32), kh.astype(jnp.float32))
    attn = jax.nn.softmax(sim, axis=-1)
    out = jnp.einsum('bhij,bhjd->bhid', attn, vh.astype(jnp.float32))
    out = out.transpose(0, 2, 1, 3).reshape(Bp, nq, c)
    out = (out.reshape(b, nh, nw, block, block, c)
           .transpose(0, 5, 1, 3, 2, 4).reshape(b, c, h, w))
    return out


# ----------------------------------------------------------------------------
if __name__ == "__main__":
    b, ch, H, W = 2, 32, 10, 10
    block, halo, heads = 5, 3, 4
    head_ch = ch // heads
    kk = block + 2 * halo

    key = jax.random.PRNGKey(0)
    keys = jax.random.split(key, 9)

    # deterministic parameter init (shapes from the module __init__)
    wmap = jax.random.normal(keys[0], (ch, 2 * ch), jnp.float32) * (2.0 / (2 * ch)) ** 0.5
    bmap = jax.random.normal(keys[1], (ch,), jnp.float32) * 0.01
    wq = jax.random.normal(keys[2], (ch, ch), jnp.float32) * (2.0 / ch) ** 0.5
    wk = jax.random.normal(keys[3], (ch, ch), jnp.float32) * (2.0 / ch) ** 0.5
    wv = jax.random.normal(keys[4], (ch, ch), jnp.float32) * (2.0 / ch) ** 0.5
    rel_h = jax.random.normal(keys[5], (kk, head_ch // 2), jnp.float32)
    rel_w = jax.random.normal(keys[6], (kk, head_ch // 2), jnp.float32)

    params = prepare_params(wmap, bmap, wq, wk, wv, rel_h, rel_w, heads)

    noisy = jax.random.normal(keys[7], (b, ch, H, W), jnp.float32)
    aux = jax.random.normal(keys[8], (b, ch, H, W), jnp.float32)

    fwd = jax.jit(functools.partial(afgsa_forward, block=block, halo=halo, heads=heads))
    out = jax.block_until_ready(fwd(noisy, aux, params))

    ref = jax.block_until_ready(
        afgsa_reference(noisy, aux, params, block=block, halo=halo, heads=heads))

    assert out.shape == (b, ch, H, W), out.shape
    max_err = float(jnp.max(jnp.abs(out - ref)))
    assert jnp.allclose(out, ref, atol=6e-2, rtol=6e-2), f"max_err={max_err}"

    print("KERNEL_OK")
</pallas_src>

<mosaic_0001>
module attributes {stable_mosaic.version = 11 : i64} {
  func.func @_proj_kernel(%arg0: i32, %arg1: memref<256x32xbf16, #tpu.memory_space<vmem>>, %arg2: memref<256x32xbf16, #tpu.memory_space<vmem>>, %arg3: memref<32x32xbf16, #tpu.memory_space<vmem>>, %arg4: memref<32x32xbf16, #tpu.memory_space<vmem>>, %arg5: memref<1x32xf32, #tpu.memory_space<vmem>>, %arg6: memref<32x64xbf16, #tpu.memory_space<vmem>>, %arg7: memref<32x32xbf16, #tpu.memory_space<vmem>>, %arg8: memref<256x32xbf16, #tpu.memory_space<vmem>>, %arg9: memref<256x32xbf16, #tpu.memory_space<vmem>>, %arg10: memref<256x32xbf16, #tpu.memory_space<vmem>>) attributes {dimension_semantics = [#tpu.dimension_semantics<parallel>], iteration_bounds = array<i64: 1>, scalar_prefetch = 0 : i64, scratch_operands = 0 : i64, tpu.core_type = #tpu.core_type<tc>, window_params = [{transform_indices = @transform_0, window_bounds = array<i64: 256, 32>}, {transform_indices = @transform_1, window_bounds = array<i64: 256, 32>}, {pipeline_mode = #tpu.pipeline_mode<synchronous>, transform_indices = @transform_2, window_bounds = array<i64: 32, 32>}, {pipeline_mode = #tpu.pipeline_mode<synchronous>, transform_indices = @transform_3, window_bounds = array<i64: 32, 32>}, {pipeline_mode = #tpu.pipeline_mode<synchronous>, transform_indices = @transform_4, window_bounds = array<i64: 1, 32>}, {pipeline_mode = #tpu.pipeline_mode<synchronous>, transform_indices = @transform_5, window_bounds = array<i64: 32, 64>}, {pipeline_mode = #tpu.pipeline_mode<synchronous>, transform_indices = @transform_6, window_bounds = array<i64: 32, 32>}, {transform_indices = @transform_7, window_bounds = array<i64: 256, 32>}, {transform_indices = @transform_8, window_bounds = array<i64: 256, 32>}, {transform_indices = @transform_9, window_bounds = array<i64: 256, 32>}]} {
    %c0 = arith.constant 0 : index
    %c0_0 = arith.constant 0 : index
    %0 = vector.load %arg1[%c0, %c0_0] : memref<256x32xbf16, #tpu.memory_space<vmem>>, vector<256x32xbf16>
    %c0_1 = arith.constant 0 : index
    %c0_2 = arith.constant 0 : index
    %1 = vector.load %arg2[%c0_1, %c0_2] : memref<256x32xbf16, #tpu.memory_space<vmem>>, vector<256x32xbf16>
    %c0_3 = arith.constant 0 : index
    %c0_4 = arith.constant 0 : index
    %2 = vector.load %arg3[%c0_3, %c0_4] : memref<32x32xbf16, #tpu.memory_space<vmem>>, vector<32x32xbf16>
    %cst = arith.constant dense<0.000000e+00> : vector<256x32xf32>
    %3 = tpu.matmul %0, %2, %cst {dimension_numbers = #tpu.dot_dimension_numbers<[1], [0], [0], [1], [0, 0, 1, 1], [], []>} : vector<256x32xbf16>, vector<32x32xbf16>, vector<256x32xf32> -> vector<256x32xf32>
    %c0_5 = arith.constant 0 : index
    %c0_6 = arith.constant 0 : index
    %4 = vector.load %arg4[%c0_5, %c0_6] : memref<32x32xbf16, #tpu.memory_space<vmem>>, vector<32x32xbf16>
    %cst_7 = arith.constant dense<0.000000e+00> : vector<256x32xf32>
    %5 = tpu.matmul %1, %4, %cst_7 {dimension_numbers = #tpu.dot_dimension_numbers<[1], [0], [0], [1], [0, 0, 1, 1], [], []>} : vector<256x32xbf16>, vector<32x32xbf16>, vector<256x32xf32> -> vector<256x32xf32>
    %6 = arith.addf %3, %5 : vector<256x32xf32>
    %c0_8 = arith.constant 0 : index
    %c0_9 = arith.constant 0 : index
    %7 = vector.load %arg5[%c0_8, %c0_9] : memref<1x32xf32, #tpu.memory_space<vmem>>, vector<1x32xf32>
    %8 = vector.broadcast %7 : vector<1x32xf32> to vector<256x32xf32>
    %9 = arith.addf %6, %8 : vector<256x32xf32>
    %cst_10 = arith.constant 0.000000e+00 : f32
    %10 = vector.broadcast %cst_10 : f32 to vector<256x32xf32>
    %11 = arith.maximumf %9, %10 : vector<256x32xf32>
    %12 = arith.truncf %11 : vector<256x32xf32> to vector<256x32xbf16>
    %c0_11 = arith.constant 0 : index
    %c0_12 = arith.constant 0 : index
    %13 = vector.load %arg6[%c0_11, %c0_12] : memref<32x64xbf16, #tpu.memory_space<vmem>>, vector<32x64xbf16>
    %cst_13 = arith.constant dense<0.000000e+00> : vector<256x64xf32>
    %14 = tpu.matmul %12, %13, %cst_13 {dimension_numbers = #tpu.dot_dimension_numbers<[1], [0], [0], [1], [0, 0, 1, 1], [], []>} : vector<256x32xbf16>, vector<32x64xbf16>, vector<256x64xf32> -> vector<256x64xf32>
    %15 = vector.extract_strided_slice %14 {offsets = [0, 0], sizes = [256, 32], strides = [1, 1]} : vector<256x64xf32> to vector<256x32xf32>
    %16 = arith.truncf %15 : vector<256x32xf32> to vector<256x32xbf16>
    %c0_14 = arith.constant 0 : index
    %c0_15 = arith.constant 0 : index
    %17 = vector.load %arg8[%c0_14, %c0_15] : memref<256x32xbf16, #tpu.memory_space<vmem>>, vector<256x32xbf16>
    tpu.vector_store %arg8[%c0_14, %c0_15], %16 {strides = array<i32>} : memref<256x32xbf16, #tpu.memory_space<vmem>>, vector<256x32xbf16>,
    %18 = vector.extract_strided_slice %14 {offsets = [0, 32], sizes = [256, 32], strides = [1, 1]} : vector<256x64xf32> to vector<256x32xf32>
    %19 = arith.truncf %18 : vector<256x32xf32> to vector<256x32xbf16>
    %c0_16 = arith.constant 0 : index
    %c0_17 = arith.constant 0 : index
    %20 = vector.load %arg9[%c0_16, %c0_17] : memref<256x32xbf16, #tpu.memory_space<vmem>>, vector<256x32xbf16>
    tpu.vector_store %arg9[%c0_16, %c0_17], %19 {strides = array<i32>} : memref<256x32xbf16, #tpu.memory_space<vmem>>, vector<256x32xbf16>,
    %c0_18 = arith.constant 0 : index
    %c0_19 = arith.constant 0 : index
    %21 = vector.load %arg7[%c0_18, %c0_19] : memref<32x32xbf16, #tpu.memory_space<vmem>>, vector<32x32xbf16>
    %cst_20 = arith.constant dense<0.000000e+00> : vector<256x32xf32>
    %22 = tpu.matmul %0, %21, %cst_20 {dimension_numbers = #tpu.dot_dimension_numbers<[1], [0], [0], [1], [0, 0, 1, 1], [], []>} : vector<256x32xbf16>, vector<32x32xbf16>, vector<256x32xf32> -> vector<256x32xf32>
    %23 = arith.truncf %22 : vector<256x32xf32> to vector<256x32xbf16>
    %c0_21 = arith.constant 0 : index
    %c0_22 = arith.constant 0 : index
    %24 = vector.load %arg10[%c0_21, %c0_22] : memref<256x32xbf16, #tpu.memory_space<vmem>>, vector<256x32xbf16>
    tpu.vector_store %arg10[%c0_21, %c0_22], %23 {strides = array<i32>} : memref<256x32xbf16, #tpu.memory_space<vmem>>, vector<256x32xbf16>,
    return
  }
  func.func @transform_0(%arg0: i32) -> (i32, i32) {
    %c0_i32 = arith.constant 0 : i32
    %c0_i32_0 = arith.constant 0 : i32
    return %arg0, %c0_i32 : i32, i32
  }
  func.func @transform_1(%arg0: i32) -> (i32, i32) {
    %c0_i32 = arith.constant 0 : i32
    %c0_i32_0 = arith.constant 0 : i32
    return %arg0, %c0_i32 : i32, i32
  }
  func.func @transform_2(%arg0: i32) -> (i32, i32) {
    %c0_i32 = arith.constant 0 : i32
    %c0_i32_0 = arith.constant 0 : i32
    %c0_i32_1 = arith.constant 0 : i32
    return %c0_i32, %c0_i32_0 : i32, i32
  }
  func.func @transform_3(%arg0: i32) -> (i32, i32) {
    %c0_i32 = arith.constant 0 : i32
    %c0_i32_0 = arith.constant 0 : i32
    %c0_i32_1 = arith.constant 0 : i32
    return %c0_i32, %c0_i32_0 : i32, i32
  }
  func.func @transform_4(%arg0: i32) -> (i32, i32) {
    %c0_i32 = arith.constant 0 : i32
    %c0_i32_0 = arith.constant 0 : i32
    %c0_i32_1 = arith.constant 0 : i32
    return %c0_i32, %c0_i32_0 : i32, i32
  }
  func.func @transform_5(%arg0: i32) -> (i32, i32) {
    %c0_i32 = arith.constant 0 : i32
    %c0_i32_0 = arith.constant 0 : i32
    %c0_i32_1 = arith.constant 0 : i32
    return %c0_i32, %c0_i32_0 : i32, i32
  }
  func.func @transform_6(%arg0: i32) -> (i32, i32) {
    %c0_i32 = arith.constant 0 : i32
    %c0_i32_0 = arith.constant 0 : i32
    %c0_i32_1 = arith.constant 0 : i32
    return %c0_i32, %c0_i32_0 : i32, i32
  }
  func.func @transform_7(%arg0: i32) -> (i32, i32) {
    %c0_i32 = arith.constant 0 : i32
    %c0_i32_0 = arith.constant 0 : i32
    return %arg0, %c0_i32 : i32, i32
  }
  func.func @transform_8(%arg0: i32) -> (i32, i32) {
    %c0_i32 = arith.constant 0 : i32
    %c0_i32_0 = arith.constant 0 : i32
    return %arg0, %c0_i32 : i32, i32
  }
  func.func @transform_9(%arg0: i32) -> (i32, i32) {
    %c0_i32 = arith.constant 0 : i32
    %c0_i32_0 = arith.constant 0 : i32
    return %arg0, %c0_i32 : i32, i32
  }
}

module attributes {stable_mosaic.version = 11 : i64} {
  func.func @_attn_kernel(%arg0: i32, %arg1: memref<4x25x32xbf16, #tpu.memory_space<vmem>>, %arg2: memref<4x128x32xbf16, #tpu.memory_space<vmem>>, %arg3: memref<4x128x32xbf16, #tpu.memory_space<vmem>>, %arg4: memref<128x32xbf16, #tpu.memory_space<vmem>>, %arg5: memref<4x25x32xbf16, #tpu.memory_space<vmem>>) attributes {dimension_semantics = [#tpu.dimension_semantics<parallel>], iteration_bounds = array<i64: 2>, scalar_prefetch = 0 : i64, scratch_operands = 0 : i64, tpu.core_type = #tpu.core_type<tc>, window_params = [{transform_indices = @transform_0, window_bounds = array<i64: 4, 25, 32>}, {transform_indices = @transform_1, window_bounds = array<i64: 4, 128, 32>}, {transform_indices = @transform_2, window_bounds = array<i64: 4, 128, 32>}, {pipeline_mode = #tpu.pipeline_mode<synchronous>, transform_indices = @transform_3, window_bounds = array<i64: 128, 32>}, {transform_indices = @transform_4, window_bounds = array<i64: 4, 25, 32>}]} {
    %c0 = arith.constant 0 : index
    %c0_0 = arith.constant 0 : index
    %c0_1 = arith.constant 0 : index
    %0 = vector.load %arg1[%c0, %c0_0, %c0_1] : memref<4x25x32xbf16, #tpu.memory_space<vmem>>, vector<4x25x32xbf16>
    %c0_2 = arith.constant 0 : index
    %c0_3 = arith.constant 0 : index
    %c0_4 = arith.constant 0 : index
    %1 = vector.load %arg2[%c0_2, %c0_3, %c0_4] : memref<4x128x32xbf16, #tpu.memory_space<vmem>>, vector<4x128x32xbf16>
    %c0_5 = arith.constant 0 : index
    %c0_6 = arith.constant 0 : index
    %2 = vector.load %arg4[%c0_5, %c0_6] : memref<128x32xbf16, #tpu.memory_space<vmem>>, vector<128x32xbf16>
    %3 = vector.shape_cast %2 : vector<128x32xbf16> to vector<1x128x32xbf16>
    %4 = vector.broadcast %3 : vector<1x128x32xbf16> to vector<4x128x32xbf16>
    %5 = arith.addf %1, %4 : vector<4x128x32xbf16>
    %c0_7 = arith.constant 0 : index
    %c0_8 = arith.constant 0 : index
    %c0_9 = arith.constant 0 : index
    %6 = vector.load %arg3[%c0_7, %c0_8, %c0_9] : memref<4x128x32xbf16, #tpu.memory_space<vmem>>, vector<4x128x32xbf16>
    %7 = tpu.iota {dimensions = array<i32: 2>} : vector<1x1x128xi32>
    %c121_i32 = arith.constant 121 : i32
    %8 = vector.broadcast %c121_i32 : i32 to vector<1x1x128xi32>
    %9 = arith.cmpi slt, %7, %8 : vector<1x1x128xi32>
    %10 = vector.extract_strided_slice %0 {offsets = [0, 0, 0], sizes = [4, 25, 8], strides = [1, 1, 1]} : vector<4x25x32xbf16> to vector<4x25x8xbf16>
    %11 = vector.extract_strided_slice %5 {offsets = [0, 0, 0], sizes = [4, 128, 8], strides = [1, 1, 1]} : vector<4x128x32xbf16> to vector<4x128x8xbf16>
    "tpu.trace_start"() <{level = 10 : i32, message = "gqd,gkd->gqk"}> : () -> ()
    %cst = arith.constant dense<0.000000e+00> : vector<4x25x128xf32>
    %12 = tpu.matmul %10, %11, %cst {dimension_numbers = #tpu.dot_dimension_numbers<[2], [2], [1], [1], [0, 0, 0, 1, 1, 1], [0], [0]>} : vector<4x25x8xbf16>, vector<4x128x8xbf16>, vector<4x25x128xf32> -> vector<4x25x128xf32>
    %cst_10 = arith.constant -1.000000e+30 : f32
    "tpu.trace_stop"() : () -> ()
    %13 = vector.shape_cast %9 : vector<1x1x128xi1> to vector<1x1x128xi1>
    %14 = vector.broadcast %13 : vector<1x1x128xi1> to vector<4x25x128xi1>
    %15 = vector.broadcast %cst_10 : f32 to vector<4x25x128xf32>
    %16 = arith.select %14, %12, %15 : vector<4x25x128xi1>, vector<4x25x128xf32>
    %cst_11 = arith.constant dense<0xFF800000> : vector<4x25xf32>
    %17 = vector.multi_reduction <maximumf>, %16, %cst_11 [2] : vector<4x25x128xf32> to vector<4x25xf32>
    %18 = vector.shape_cast %17 : vector<4x25xf32> to vector<4x25x1xf32>
    %19 = vector.broadcast %18 : vector<4x25x1xf32> to vector<4x25x128xf32>
    %20 = arith.subf %16, %19 : vector<4x25x128xf32>
    %21 = math.exp %20 : vector<4x25x128xf32>
    %cst_12 = arith.constant dense<0.000000e+00> : vector<4x25xf32>
    %22 = vector.multi_reduction <add>, %21, %cst_12 [2] : vector<4x25x128xf32> to vector<4x25xf32>
    %23 = vector.shape_cast %22 : vector<4x25xf32> to vector<4x25x1xf32>
    %24 = tpu.reciprocal %23 {approx = true} : vector<4x25x1xf32> -> vector<4x25x1xf32>
    %25 = vector.broadcast %24 : vector<4x25x1xf32> to vector<4x25x128xf32>
    %26 = arith.mulf %21, %25 : vector<4x25x128xf32>
    %27 = arith.truncf %26 : vector<4x25x128xf32> to vector<4x25x128xbf16>
    %28 = vector.extract_strided_slice %6 {offsets = [0, 0, 0], sizes = [4, 128, 8], strides = [1, 1, 1]} : vector<4x128x32xbf16> to vector<4x128x8xbf16>
    "tpu.trace_start"() <{level = 10 : i32, message = "gqk,gkd->gqd"}> : () -> ()
    %cst_13 = arith.constant dense<0.000000e+00> : vector<4x25x8xf32>
    %29 = tpu.matmul %27, %28, %cst_13 {dimension_numbers = #tpu.dot_dimension_numbers<[2], [1], [1], [2], [0, 0, 0, 1, 1, 2], [0], [0]>} : vector<4x25x128xbf16>, vector<4x128x8xbf16>, vector<4x25x8xf32> -> vector<4x25x8xf32>
    "tpu.trace_stop"() : () -> ()
    %30 = arith.truncf %29 : vector<4x25x8xf32> to vector<4x25x8xbf16>
    %c0_14 = arith.constant 0 : index
    %c0_15 = arith.constant 0 : index
    %c0_16 = arith.constant 0 : index
    %31 = vector.load %arg5[%c0_14, %c0_15, %c0_16] : memref<4x25x32xbf16, #tpu.memory_space<vmem>>, vector<4x25x8xbf16>
    tpu.vector_store %arg5[%c0_14, %c0_15, %c0_16], %30 {strides = array<i32>} : memref<4x25x32xbf16, #tpu.memory_space<vmem>>, vector<4x25x8xbf16>,
    %32 = vector.extract_strided_slice %0 {offsets = [0, 0, 8], sizes = [4, 25, 8], strides = [1, 1, 1]} : vector<4x25x32xbf16> to vector<4x25x8xbf16>
    %33 = vector.extract_strided_slice %5 {offsets = [0, 0, 8], sizes = [4, 128, 8], strides = [1, 1, 1]} : vector<4x128x32xbf16> to vector<4x128x8xbf16>
    "tpu.trace_start"() <{level = 10 : i32, message = "gqd,gkd->gqk"}> : () -> ()
    %cst_17 = arith.constant dense<0.000000e+00> : vector<4x25x128xf32>
    %34 = tpu.matmul %32, %33, %cst_17 {dimension_numbers = #tpu.dot_dimension_numbers<[2], [2], [1], [1], [0, 0, 0, 1, 1, 1], [0], [0]>} : vector<4x25x8xbf16>, vector<4x128x8xbf16>, vector<4x25x128xf32> -> vector<4x25x128xf32>
    %cst_18 = arith.constant -1.000000e+30 : f32
    "tpu.trace_stop"() : () -> ()
    %35 = vector.shape_cast %9 : vector<1x1x128xi1> to vector<1x1x128xi1>
    %36 = vector.broadcast %35 : vector<1x1x128xi1> to vector<4x25x128xi1>
    %37 = vector.broadcast %cst_18 : f32 to vector<4x25x128xf32>
    %38 = arith.select %36, %34, %37 : vector<4x25x128xi1>, vector<4x25x128xf32>
    %cst_19 = arith.constant dense<0xFF800000> : vector<4x25xf32>
    %39 = vector.multi_reduction <maximumf>, %38, %cst_19 [2] : vector<4x25x128xf32> to vector<4x25xf32>
    %40 = vector.shape_cast %39 : vector<4x25xf32> to vector<4x25x1xf32>
    %41 = vector.broadcast %40 : vector<4x25x1xf32> to vector<4x25x128xf32>
    %42 = arith.subf %38, %41 : vector<4x25x128xf32>
    %43 = math.exp %42 : vector<4x25x128xf32>
    %cst_20 = arith.constant dense<0.000000e+00> : vector<4x25xf32>
    %44 = vector.multi_reduction <add>, %43, %cst_20 [2] : vector<4x25x128xf32> to vector<4x25xf32>
    %45 = vector.shape_cast %44 : vector<4x25xf32> to vector<4x25x1xf32>
    %46 = tpu.reciprocal %45 {approx = true} : vector<4x25x1xf32> -> vector<4x25x1xf32>
    %47 = vector.broadcast %46 : vector<4x25x1xf32> to vector<4x25x128xf32>
    %48 = arith.mulf %43, %47 : vector<4x25x128xf32>
    %49 = arith.truncf %48 : vector<4x25x128xf32> to vector<4x25x128xbf16>
    %50 = vector.extract_strided_slice %6 {offsets = [0, 0, 8], sizes = [4, 128, 8], strides = [1, 1, 1]} : vector<4x128x32xbf16> to vector<4x128x8xbf16>
    "tpu.trace_start"() <{level = 10 : i32, message = "gqk,gkd->gqd"}> : () -> ()
    %cst_21 = arith.constant dense<0.000000e+00> : vector<4x25x8xf32>
    %51 = tpu.matmul %49, %50, %cst_21 {dimension_numbers = #tpu.dot_dimension_numbers<[2], [1], [1], [2], [0, 0, 0, 1, 1, 2], [0], [0]>} : vector<4x25x128xbf16>, vector<4x128x8xbf16>, vector<4x25x8xf32> -> vector<4x25x8xf32>
    "tpu.trace_stop"() : () -> ()
    %52 = arith.truncf %51 : vector<4x25x8xf32> to vector<4x25x8xbf16>
    %c0_22 = arith.constant 0 : index
    %c0_23 = arith.constant 0 : index
    %c8 = arith.constant 8 : index
    %53 = vector.load %arg5[%c0_22, %c0_23, %c8] : memref<4x25x32xbf16, #tpu.memory_space<vmem>>, vector<4x25x8xbf16>
    tpu.vector_store %arg5[%c0_22, %c0_23, %c8], %52 {strides = array<i32>} : memref<4x25x32xbf16, #tpu.memory_space<vmem>>, vector<4x25x8xbf16>,
    %54 = vector.extract_strided_slice %0 {offsets = [0, 0, 16], sizes = [4, 25, 8], strides = [1, 1, 1]} : vector<4x25x32xbf16> to vector<4x25x8xbf16>
    %55 = vector.extract_strided_slice %5 {offsets = [0, 0, 16], sizes = [4, 128, 8], strides = [1, 1, 1]} : vector<4x128x32xbf16> to vector<4x128x8xbf16>
    "tpu.trace_start"() <{level = 10 : i32, message = "gqd,gkd->gqk"}> : () -> ()
    %cst_24 = arith.constant dense<0.000000e+00> : vector<4x25x128xf32>
    %56 = tpu.matmul %54, %55, %cst_24 {dimension_numbers = #tpu.dot_dimension_numbers<[2], [2], [1], [1], [0, 0, 0, 1, 1, 1], [0], [0]>} : vector<4x25x8xbf16>, vector<4x128x8xbf16>, vector<4x25x128xf32> -> vector<4x25x128xf32>
    %cst_25 = arith.constant -1.000000e+30 : f32
    "tpu.trace_stop"() : () -> ()
    %57 = vector.shape_cast %9 : vector<1x1x128xi1> to vector<1x1x128xi1>
    %58 = vector.broadcast %57 : vector<1x1x128xi1> to vector<4x25x128xi1>
    %59 = vector.broadcast %cst_25 : f32 to vector<4x25x128xf32>
    %60 = arith.select %58, %56, %59 : vector<4x25x128xi1>, vector<4x25x128xf32>
    %cst_26 = arith.constant dense<0xFF800000> : vector<4x25xf32>
    %61 = vector.multi_reduction <maximumf>, %60, %cst_26 [2] : vector<4x25x128xf32> to vector<4x25xf32>
    %62 = vector.shape_cast %61 : vector<4x25xf32> to vector<4x25x1xf32>
    %63 = vector.broadcast %62 : vector<4x25x1xf32> to vector<4x25x128xf32>
    %64 = arith.subf %60, %63 : vector<4x25x128xf32>
    %65 = math.exp %64 : vector<4x25x128xf32>
    %cst_27 = arith.constant dense<0.000000e+00> : vector<4x25xf32>
    %66 = vector.multi_reduction <add>, %65, %cst_27 [2] : vector<4x25x128xf32> to vector<4x25xf32>
    %67 = vector.shape_cast %66 : vector<4x25xf32> to vector<4x25x1xf32>
    %68 = tpu.reciprocal %67 {approx = true} : vector<4x25x1xf32> -> vector<4x25x1xf32>
    %69 = vector.broadcast %68 : vector<4x25x1xf32> to vector<4x25x128xf32>
    %70 = arith.mulf %65, %69 : vector<4x25x128xf32>
    %71 = arith.truncf %70 : vector<4x25x128xf32> to vector<4x25x128xbf16>
    %72 = vector.extract_strided_slice %6 {offsets = [0, 0, 16], sizes = [4, 128, 8], strides = [1, 1, 1]} : vector<4x128x32xbf16> to vector<4x128x8xbf16>
    "tpu.trace_start"() <{level = 10 : i32, message = "gqk,gkd->gqd"}> : () -> ()
    %cst_28 = arith.constant dense<0.000000e+00> : vector<4x25x8xf32>
    %73 = tpu.matmul %71, %72, %cst_28 {dimension_numbers = #tpu.dot_dimension_numbers<[2], [1], [1], [2], [0, 0, 0, 1, 1, 2], [0], [0]>} : vector<4x25x128xbf16>, vector<4x128x8xbf16>, vector<4x25x8xf32> -> vector<4x25x8xf32>
    "tpu.trace_stop"() : () -> ()
    %74 = arith.truncf %73 : vector<4x25x8xf32> to vector<4x25x8xbf16>
    %c0_29 = arith.constant 0 : index
    %c0_30 = arith.constant 0 : index
    %c16 = arith.constant 16 : index
    %75 = vector.load %arg5[%c0_29, %c0_30, %c16] : memref<4x25x32xbf16, #tpu.memory_space<vmem>>, vector<4x25x8xbf16>
    tpu.vector_store %arg5[%c0_29, %c0_30, %c16], %74 {strides = array<i32>} : memref<4x25x32xbf16, #tpu.memory_space<vmem>>, vector<4x25x8xbf16>,
    %76 = vector.extract_strided_slice %0 {offsets = [0, 0, 24], sizes = [4, 25, 8], strides = [1, 1, 1]} : vector<4x25x32xbf16> to vector<4x25x8xbf16>
    %77 = vector.extract_strided_slice %5 {offsets = [0, 0, 24], sizes = [4, 128, 8], strides = [1, 1, 1]} : vector<4x128x32xbf16> to vector<4x128x8xbf16>
    "tpu.trace_start"() <{level = 10 : i32, message = "gqd,gkd->gqk"}> : () -> ()
    %cst_31 = arith.constant dense<0.000000e+00> : vector<4x25x128xf32>
    %78 = tpu.matmul %76, %77, %cst_31 {dimension_numbers = #tpu.dot_dimension_numbers<[2], [2], [1], [1], [0, 0, 0, 1, 1, 1], [0], [0]>} : vector<4x25x8xbf16>, vector<4x128x8xbf16>, vector<4x25x128xf32> -> vector<4x25x128xf32>
    %cst_32 = arith.constant -1.000000e+30 : f32
    "tpu.trace_stop"() : () -> ()
    %79 = vector.shape_cast %9 : vector<1x1x128xi1> to vector<1x1x128xi1>
    %80 = vector.broadcast %79 : vector<1x1x128xi1> to vector<4x25x128xi1>
    %81 = vector.broadcast %cst_32 : f32 to vector<4x25x128xf32>
    %82 = arith.select %80, %78, %81 : vector<4x25x128xi1>, vector<4x25x128xf32>
    %cst_33 = arith.constant dense<0xFF800000> : vector<4x25xf32>
    %83 = vector.multi_reduction <maximumf>, %82, %cst_33 [2] : vector<4x25x128xf32> to vector<4x25xf32>
    %84 = vector.shape_cast %83 : vector<4x25xf32> to vector<4x25x1xf32>
    %85 = vector.broadcast %84 : vector<4x25x1xf32> to vector<4x25x128xf32>
    %86 = arith.subf %82, %85 : vector<4x25x128xf32>
    %87 = math.exp %86 : vector<4x25x128xf32>
    %cst_34 = arith.constant dense<0.000000e+00> : vector<4x25xf32>
    %88 = vector.multi_reduction <add>, %87, %cst_34 [2] : vector<4x25x128xf32> to vector<4x25xf32>
    %89 = vector.shape_cast %88 : vector<4x25xf32> to vector<4x25x1xf32>
    %90 = tpu.reciprocal %89 {approx = true} : vector<4x25x1xf32> -> vector<4x25x1xf32>
    %91 = vector.broadcast %90 : vector<4x25x1xf32> to vector<4x25x128xf32>
    %92 = arith.mulf %87, %91 : vector<4x25x128xf32>
    %93 = arith.truncf %92 : vector<4x25x128xf32> to vector<4x25x128xbf16>
    %94 = vector.extract_strided_slice %6 {offsets = [0, 0, 24], sizes = [4, 128, 8], strides = [1, 1, 1]} : vector<4x128x32xbf16> to vector<4x128x8xbf16>
    "tpu.trace_start"() <{level = 10 : i32, message = "gqk,gkd->gqd"}> : () -> ()
    %cst_35 = arith.constant dense<0.000000e+00> : vector<4x25x8xf32>
    %95 = tpu.matmul %93, %94, %cst_35 {dimension_numbers = #tpu.dot_dimension_numbers<[2], [1], [1], [2], [0, 0, 0, 1, 1, 2], [0], [0]>} : vector<4x25x128xbf16>, vector<4x128x8xbf16>, vector<4x25x8xf32> -> vector<4x25x8xf32>
    "tpu.trace_stop"() : () -> ()
    %96 = arith.truncf %95 : vector<4x25x8xf32> to vector<4x25x8xbf16>
    %c0_36 = arith.constant 0 : index
    %c0_37 = arith.constant 0 : index
    %c24 = arith.constant 24 : index
    %97 = vector.load %arg5[%c0_36, %c0_37, %c24] : memref<4x25x32xbf16, #tpu.memory_space<vmem>>, vector<4x25x8xbf16>
    tpu.vector_store %arg5[%c0_36, %c0_37, %c24], %96 {strides = array<i32>} : memref<4x25x32xbf16, #tpu.memory_space<vmem>>, vector<4x25x8xbf16>,
    return
  }
  func.func @transform_0(%arg0: i32) -> (i32, i32, i32) {
    %c0_i32 = arith.constant 0 : i32
    %c0_i32_0 = arith.constant 0 : i32
    %c0_i32_1 = arith.constant 0 : i32
    return %arg0, %c0_i32, %c0_i32_0 : i32, i32, i32
  }
  func.func @transform_1(%arg0: i32) -> (i32, i32, i32) {
    %c0_i32 = arith.constant 0 : i32
    %c0_i32_0 = arith.constant 0 : i32
    %c0_i32_1 = arith.constant 0 : i32
    return %arg0, %c0_i32, %c0_i32_0 : i32, i32, i32
  }
  func.func @transform_2(%arg0: i32) -> (i32, i32, i32) {
    %c0_i32 = arith.constant 0 : i32
    %c0_i32_0 = arith.constant 0 : i32
    %c0_i32_1 = arith.constant 0 : i32
    return %arg0, %c0_i32, %c0_i32_0 : i32, i32, i32
  }
  func.func @transform_3(%arg0: i32) -> (i32, i32) {
    %c0_i32 = arith.constant 0 : i32
    %c0_i32_0 = arith.constant 0 : i32
    %c0_i32_1 = arith.constant 0 : i32
    return %c0_i32, %c0_i32_0 : i32, i32
  }
  func.func @transform_4(%arg0: i32) -> (i32, i32, i32) {
    %c0_i32 = arith.constant 0 : i32
    %c0_i32_0 = arith.constant 0 : i32
    %c0_i32_1 = arith.constant 0 : i32
    return %arg0, %c0_i32, %c0_i32_0 : i32, i32, i32
  }
}

</mosaic_0001>

<llo_original>
// kernel: afgsa_forward.2
$region0: #{afgsa_forward.2}
  #allocation0 [shape = 'u32[]', space=smem, size = 0x4, offset = 0x4, fixed_abs, tag = 'smem constant byte address 0x4 - core index']
  #allocation1 [shape = 'u32[144,128]{1,0:T(1,128)}', space=vmem, size = 0x12000, scoped, tag = 'internal scratch']
  %s0 = inlined_call_operand.vmem [shape: bf16[256,32], index: 0, kind: input, shape index: {}]
  %s1 = inlined_call_operand.vmem [shape: bf16[256,32], index: 1, kind: input, shape index: {}]
  %s2 = inlined_call_operand.vmem [shape: bf16[32,32], index: 2, kind: input, shape index: {}]
  %s3 = inlined_call_operand.vmem [shape: bf16[32,32], index: 3, kind: input, shape index: {}]
  %s4 = inlined_call_operand.vmem [shape: f32[1,32], index: 4, kind: input, shape index: {}]
  %s5 = inlined_call_operand.vmem [shape: bf16[32,64], index: 5, kind: input, shape index: {}]
  %s6 = inlined_call_operand.vmem [shape: bf16[32,32], index: 6, kind: input, shape index: {}]
  %s7 = inlined_call_operand.vmem [shape: bf16[256,32], index: 7, kind: output, shape index: {0}]
  %s8 = inlined_call_operand.vmem [shape: bf16[256,32], index: 8, kind: output, shape index: {1}]
  %s9 = inlined_call_operand.vmem [shape: bf16[256,32], index: 9, kind: output, shape index: {2}]
  %10 = xla_tuple %s7, %s8, %s9
  %s11 = sld [smem:[#allocation0]]
  $region54: #{afgsa_forward.2} parent=0
    _
  %s13 = ssub.s32 1, %s11
  %s14 = scalar_select 0, %s13, %s11
  // Predicated region
  $region2: #{afgsa_forward.2} parent=0 // pred_check
    _
  $region3: #{afgsa_forward.2} parent=0 // pred_check_branch
    %16 = sbr.rel (0) target = $region5
  $region4: #{afgsa_forward.2} parent=0 // pred_region
    _
  $region5: #{afgsa_forward.2} parent=0 // pred_fallthru
    _
  // Predicated region
  $region6: #{afgsa_forward.2} parent=0 // pred_check
    _
  $region7: #{afgsa_forward.2} parent=0 // pred_check_branch
    %18 = sbr.rel (0) target = $region9
  $region8: #{afgsa_forward.2} parent=0 // pred_region
    _
  $region9: #{afgsa_forward.2} parent=0 // pred_fallthru
    _
  // Predicated region
  $region10: #{afgsa_forward.2} parent=0 // pred_check
    _
  $region11: #{afgsa_forward.2} parent=0 // pred_check_branch
    %20 = sbr.rel (0) target = $region13
  $region12: #{afgsa_forward.2} parent=0 // pred_region
    _
  $region13: #{afgsa_forward.2} parent=0 // pred_fallthru
    _
  // Predicated region
  $region14: #{afgsa_forward.2} parent=0 // pred_check
    _
  $region15: #{afgsa_forward.2} parent=0 // pred_check_branch
    %22 = sbr.rel (0) target = $region17
  $region16: #{afgsa_forward.2} parent=0 // pred_region
    _
  $region17: #{afgsa_forward.2} parent=0 // pred_fallthru
    _
  // Predicated region
  $region18: #{afgsa_forward.2} parent=0 // pred_check
    _
  $region19: #{afgsa_forward.2} parent=0 // pred_check_branch
    %24 = sbr.rel (0) target = $region21
  $region20: #{afgsa_forward.2} parent=0 // pred_region
    _
  $region21: #{afgsa_forward.2} parent=0 // pred_fallthru
    _
  // Predicated region
  $region22: #{afgsa_forward.2} parent=0 // pred_check
    _
  $region23: #{afgsa_forward.2} parent=0 // pred_check_branch
    %26 = sbr.rel (0) target = $region25
  $region24: #{afgsa_forward.2} parent=0 // pred_region
    _
  $region25: #{afgsa_forward.2} parent=0 // pred_fallthru
    _
  // Predicated region
  $region26: #{afgsa_forward.2} parent=0 // pred_check
    _
  $region27: #{afgsa_forward.2} parent=0 // pred_check_branch
    %28 = sbr.rel (0) target = $region29
  $region28: #{afgsa_forward.2} parent=0 // pred_region
    _
  $region29: #{afgsa_forward.2} parent=0 // pred_fallthru
    _
  %v30 = vld [vmem:[%s0] sm:$0xf]
  %v31 = vld [vmem:[%s0 + $0x4] sm:$0xf]
  %v32 = vld [vmem:[%s0 + $0x8] sm:$0xf]
  %v33 = vld [vmem:[%s0 + $0xc] sm:$0xf]
  %v34 = vld [vmem:[%s0 + $0x10] sm:$0xf]
  %v35 = vld [vmem:[%s0 + $0x14] sm:$0xf]
  %v36 = vld [vmem:[%s0 + $0x18] sm:$0xf]
  %v37 = vld [vmem:[%s0 + $0x1c] sm:$0xf]
  %v38 = vld [vmem:[%s0 + $0x20] sm:$0xf]
  %v39 = vld [vmem:[%s0 + $0x24] sm:$0xf]
  %v40 = vld [vmem:[%s0 + $0x28] sm:$0xf]
  %v41 = vld [vmem:[%s0 + $0x2c] sm:$0xf]
  %v42 = vld [vmem:[%s0 + $0x30] sm:$0xf]
  %v43 = vld [vmem:[%s0 + $0x34] sm:$0xf]
  %v44 = vld [vmem:[%s0 + $0x38] sm:$0xf]
  %v45 = vld [vmem:[%s0 + $0x3c] sm:$0xf]
  %v46 = vld [vmem:[%s0 + $0x40] sm:$0xf]
  %v47 = vld [vmem:[%s0 + $0x44] sm:$0xf]
  %v48 = vld [vmem:[%s0 + $0x48] sm:$0xf]
  %v49 = vld [vmem:[%s0 + $0x4c] sm:$0xf]
  %v50 = vld [vmem:[%s0 + $0x50] sm:$0xf]
  %v51 = vld [vmem:[%s0 + $0x54] sm:$0xf]
  %v52 = vld [vmem:[%s0 + $0x58] sm:$0xf]
  %v53 = vld [vmem:[%s0 + $0x5c] sm:$0xf]
  %v54 = vld [vmem:[%s0 + $0x60] sm:$0xf]
  %v55 = vld [vmem:[%s0 + $0x64] sm:$0xf]
  %v56 = vld [vmem:[%s0 + $0x68] sm:$0xf]
  %v57 = vld [vmem:[%s0 + $0x6c] sm:$0xf]
  %v58 = vld [vmem:[%s0 + $0x70] sm:$0xf]
  %v59 = vld [vmem:[%s0 + $0x74] sm:$0xf]
  %v60 = vld [vmem:[%s0 + $0x78] sm:$0xf]
  %v61 = vld [vmem:[%s0 + $0x7c] sm:$0xf]
  %v62 = vld [vmem:[%s1] sm:$0xf]
  %v63 = vld [vmem:[%s1 + $0x4] sm:$0xf]
  %v64 = vld [vmem:[%s1 + $0x8] sm:$0xf]
  %v65 = vld [vmem:[%s1 + $0xc] sm:$0xf]
  %v66 = vld [vmem:[%s1 + $0x10] sm:$0xf]
  %v67 = vld [vmem:[%s1 + $0x14] sm:$0xf]
  %v68 = vld [vmem:[%s1 + $0x18] sm:$0xf]
  %v69 = vld [vmem:[%s1 + $0x1c] sm:$0xf]
  %v70 = vld [vmem:[%s1 + $0x20] sm:$0xf]
  %v71 = vld [vmem:[%s1 + $0x24] sm:$0xf]
  %v72 = vld [vmem:[%s1 + $0x28] sm:$0xf]
  %v73 = vld [vmem:[%s1 + $0x2c] sm:$0xf]
  %v74 = vld [vmem:[%s1 + $0x30] sm:$0xf]
  %v75 = vld [vmem:[%s1 + $0x34] sm:$0xf]
  %v76 = vld [vmem:[%s1 + $0x38] sm:$0xf]
  %v77 = vld [vmem:[%s1 + $0x3c] sm:$0xf]
  %v78 = vld [vmem:[%s1 + $0x40] sm:$0xf]
  %v79 = vld [vmem:[%s1 + $0x44] sm:$0xf]
  %v80 = vld [vmem:[%s1 + $0x48] sm:$0xf]
  %v81 = vld [vmem:[%s1 + $0x4c] sm:$0xf]
  %v82 = vld [vmem:[%s1 + $0x50] sm:$0xf]
  %v83 = vld [vmem:[%s1 + $0x54] sm:$0xf]
  %v84 = vld [vmem:[%s1 + $0x58] sm:$0xf]
  %v85 = vld [vmem:[%s1 + $0x5c] sm:$0xf]
  %v86 = vld [vmem:[%s1 + $0x60] sm:$0xf]
  %v87 = vld [vmem:[%s1 + $0x64] sm:$0xf]
  %v88 = vld [vmem:[%s1 + $0x68] sm:$0xf]
  %v89 = vld [vmem:[%s1 + $0x6c] sm:$0xf]
  %v90 = vld [vmem:[%s1 + $0x70] sm:$0xf]
  %v91 = vld [vmem:[%s1 + $0x74] sm:$0xf]
  %v92 = vld [vmem:[%s1 + $0x78] sm:$0xf]
  %v93 = vld [vmem:[%s1 + $0x7c] sm:$0xf]
  %v94 = vld [vmem:[%s2] sm:$0xf]
  %v95 = vld [vmem:[%s2 + $0x4] sm:$0xf]
  %v96 = vld [vmem:[%s2 + $0x8] sm:$0xf]
  %v97 = vld [vmem:[%s2 + $0xc] sm:$0xf]
  %v98 = vld [vmem:[%s3] sm:$0xf]
  %v99 = vld [vmem:[%s3 + $0x4] sm:$0xf]
  %v100 = vld [vmem:[%s3 + $0x8] sm:$0xf]
  %v101 = vld [vmem:[%s3 + $0xc] sm:$0xf]
  %v134 = vunpack.c.l.b16 %v62
  %v135 = vunpack.c.l.b16 %v63
  %v136 = vunpack.c.l.b16 %v64
  %v137 = vunpack.c.l.b16 %v65
  %v138 = vunpack.c.l.b16 %v66
  %v139 = vunpack.c.l.b16 %v67
  %v140 = vunpack.c.l.b16 %v68
  %v141 = vunpack.c.l.b16 %v69
  %v142 = vunpack.c.l.b16 %v70
  %v143 = vunpack.c.l.b16 %v71
  %v144 = vunpack.c.l.b16 %v72
  %v145 = vunpack.c.l.b16 %v73
  %v146 = vunpack.c.l.b16 %v74
  %v147 = vunpack.c.l.b16 %v75
  %v148 = vunpack.c.l.b16 %v76
  %v149 = vunpack.c.l.b16 %v77
  %v150 = vunpack.c.l.b16 %v78
  %v151 = vunpack.c.l.b16 %v79
  %v152 = vunpack.c.l.b16 %v80
  %v153 = vunpack.c.l.b16 %v81
  %v154 = vunpack.c.l.b16 %v82
  %v155 = vunpack.c.l.b16 %v83
  %v156 = vunpack.c.l.b16 %v84
  %v157 = vunpack.c.l.b16 %v85
  %v158 = vunpack.c.l.b16 %v86
  %v159 = vunpack.c.l.b16 %v87
  %v160 = vunpack.c.l.b16 %v88
  %v161 = vunpack.c.l.b16 %v89
  %v162 = vunpack.c.l.b16 %v90
  %v163 = vunpack.c.l.b16 %v91
  %v164 = vunpack.c.l.b16 %v92
  %v165 = vunpack.c.l.b16 %v93
  %v166 = vpack.c.b16 %v135, %v134
  %v167 = vpack.c.b16 %v137, %v136
  %v168 = vpack.c.b16 %v139, %v138
  %v169 = vpack.c.b16 %v141, %v140
  %v170 = vpack.c.b16 %v143, %v142
  %v171 = vpack.c.b16 %v145, %v144
  %v172 = vpack.c.b16 %v147, %v146
  %v173 = vpack.c.b16 %v149, %v148
  %v174 = vpack.c.b16 %v151, %v150
  %v175 = vpack.c.b16 %v153, %v152
  %v176 = vpack.c.b16 %v155, %v154
  %v177 = vpack.c.b16 %v157, %v156
  %v178 = vpack.c.b16 %v159, %v158
  %v179 = vpack.c.b16 %v161, %v160
  %v180 = vpack.c.b16 %v163, %v162
  %v181 = vpack.c.b16 %v165, %v164
  %v186 = vunpack.c.l.b16 %v98
  %v187 = vunpack.c.l.b16 %v99
  %v188 = vunpack.c.l.b16 %v100
  %v189 = vunpack.c.l.b16 %v101
  %v190 = vpack.c.b16 %v187, %v186
  %v191 = vpack.c.b16 %v189, %v188
  %vm194 = vcmask 261120
  %v196 = vsel %vm194, %v166, 0
  %v199 = vsel %vm194, %v167, 0
  %v202 = vsel %vm194, %v168, 0
  %v205 = vsel %vm194, %v169, 0
  %v208 = vsel %vm194, %v170, 0
  %v211 = vsel %vm194, %v171, 0
  %v214 = vsel %vm194, %v172, 0
  %v217 = vsel %vm194, %v173, 0
  %v220 = vsel %vm194, %v174, 0
  %v223 = vsel %vm194, %v175, 0
  %v226 = vsel %vm194, %v176, 0
  %v229 = vsel %vm194, %v177, 0
  %v232 = vsel %vm194, %v178, 0
  %v235 = vsel %vm194, %v179, 0
  %v238 = vsel %vm194, %v180, 0
  %v241 = vsel %vm194, %v181, 0
  %243 = vmatprep.subr.bf16.mxu0 0
  %244 = vmatpush1.bf16.msra.mxu0 0
  %245 = vmatprep.subr.bf16.mxu0 0
  %246 = vmatpush1.bf16.msra.mxu0 0
  %247 = vmatprep.subr.bf16.mxu0 0
  %248 = vmatpush1.bf16.msra.mxu0 0
  %249 = vmatprep.subr.bf16.mxu0 0
  %250 = vmatpush1.bf16.msra.mxu0 0
  %251 = vmatprep.subr.bf16.mxu0 0
  %252 = vmatpush1.bf16.msra.mxu0 0
  %253 = vmatprep.subr.bf16.mxu0 0
  %254 = vmatpush1.bf16.msra.mxu0 0
  %255 = vmatprep.subr.bf16.mxu0 0
  %256 = vmatpush1.bf16.msra.mxu0 %v191
  %257 = vmatprep.subr.bf16.mxu0 0
  %258 = vmatpush1.bf16.msra.mxu0 %v190
  %259 = vmatprep.subr.bf16.mxu0 0
  %260 = vmatpush2.bf16.msra.mxu0 0
  %261 = vmatprep.subr.bf16.mxu0 0
  %262 = vmatpush2.bf16.msra.mxu0 0
  %263 = vmatprep.subr.bf16.mxu0 0
  %264 = vmatpush2.bf16.msra.mxu0 0
  %265 = vmatprep.subr.bf16.mxu0 0
  %266 = vmatpush2.bf16.msra.mxu0 0
  %267 = vmatprep.subr.bf16.mxu0 0
  %268 = vmatpush2.bf16.msra.mxu0 0
  %269 = vmatprep.subr.bf16.mxu0 0
  %270 = vmatpush2.bf16.msra.mxu0 0
  %271 = vmatprep.subr.bf16.mxu0 0
  %272 = vmatpush2.bf16.msra.mxu0 0
  %273 = vmatprep.subr.bf16.mxu0 0
  %274 = vmatpush2.bf16.msra.mxu0 0
  %275 = vmatprep.mubr.bf16.mxu0 0
  %276 = vmatmul.mubr.bf16.gmra.mxu0 %v196
  %v277 = vpop.f32.mrf.mxu0
  %v278 = vadd.f32 0.0, %v277
  %v279 = vpop.f32.mrf.mxu0
  %v280 = vpop.f32.mrf.mxu0
  %v281 = vadd.f32 0.0, %v280
  %v282 = vpop.f32.mrf.mxu0
  %283 = vmatprep.mubr.bf16.mxu0 0
  %284 = vmatmul.mubr.bf16.gmra.mxu0 %v199
  %v285 = vpop.f32.mrf.mxu0
  %v286 = vadd.f32 0.0, %v285
  %v287 = vpop.f32.mrf.mxu0
  %v288 = vpop.f32.mrf.mxu0
  %v289 = vadd.f32 0.0, %v288
  %v290 = vpop.f32.mrf.mxu0
  %291 = vmatprep.mubr.bf16.mxu0 0
  %292 = vmatmul.mubr.bf16.gmra.mxu0 %v202
  %v293 = vpop.f32.mrf.mxu0
  %v294 = vadd.f32 0.0, %v293
  %v295 = vpop.f32.mrf.mxu0
  %v296 = vpop.f32.mrf.mxu0
  %v297 = vadd.f32 0.0, %v296
  %v298 = vpop.f32.mrf.mxu0
  %299 = vmatprep.mubr.bf16.mxu0 0
  %300 = vmatmul.mubr.bf16.gmra.mxu0 %v205
  %v301 = vpop.f32.mrf.mxu0
  %v302 = vadd.f32 0.0, %v301
  %v303 = vpop.f32.mrf.mxu0
  %v304 = vpop.f32.mrf.mxu0
  %v305 = vadd.f32 0.0, %v304
  %v306 = vpop.f32.mrf.mxu0
  %307 = vmatprep.mubr.bf16.mxu0 0
  %308 = vmatmul.mubr.bf16.gmra.mxu0 %v208
  %v309 = vpop.f32.mrf.mxu0
  %v310 = vadd.f32 0.0, %v309
  %v311 = vpop.f32.mrf.mxu0
  %v312 = vpop.f32.mrf.mxu0
  %v313 = vadd.f32 0.0, %v312
  %v314 = vpop.f32.mrf.mxu0
  %315 = vmatprep.mubr.bf16.mxu0 0
  %316 = vmatmul.mubr.bf16.gmra.mxu0 %v211
  %v317 = vpop.f32.mrf.mxu0
  %v318 = vadd.f32 0.0, %v317
  %v319 = vpop.f32.mrf.mxu0
  %v320 = vpop.f32.mrf.mxu0
  %v321 = vadd.f32 0.0, %v320
  %v322 = vpop.f32.mrf.mxu0
  %323 = vmatprep.mubr.bf16.mxu0 0
  %324 = vmatmul.mubr.bf16.gmra.mxu0 %v214
  %v325 = vpop.f32.mrf.mxu0
  %v326 = vadd.f32 0.0, %v325
  %v327 = vpop.f32.mrf.mxu0
  %v328 = vpop.f32.mrf.mxu0
  %v329 = vadd.f32 0.0, %v328
  %v330 = vpop.f32.mrf.mxu0
  %331 = vmatprep.mubr.bf16.mxu0 0
  %332 = vmatmul.mubr.bf16.gmra.mxu0 %v217
  %v333 = vpop.f32.mrf.mxu0
  %v334 = vadd.f32 0.0, %v333
  %v335 = vpop.f32.mrf.mxu0
  %v336 = vpop.f32.mrf.mxu0
  %v337 = vadd.f32 0.0, %v336
  %v338 = vpop.f32.mrf.mxu0
  %339 = vmatprep.mubr.bf16.mxu0 0
  %340 = vmatmul.mubr.bf16.gmra.mxu0 %v220
  %v341 = vpop.f32.mrf.mxu0
  %v342 = vadd.f32 0.0, %v341
  %v343 = vpop.f32.mrf.mxu0
  %v344 = vpop.f32.mrf.mxu0
  %v345 = vadd.f32 0.0, %v344
  %v346 = vpop.f32.mrf.mxu0
  %347 = vmatprep.mubr.bf16.mxu0 0
  %348 = vmatmul.mubr.bf16.gmra.mxu0 %v223
  %v349 = vpop.f32.mrf.mxu0
  %v350 = vadd.f32 0.0, %v349
  %v351 = vpop.f32.mrf.mxu0
  %v352 = vpop.f32.mrf.mxu0
  %v353 = vadd.f32 0.0, %v352
  %v354 = vpop.f32.mrf.mxu0
  %355 = vmatprep.mubr.bf16.mxu0 0
  %356 = vmatmul.mubr.bf16.gmra.mxu0 %v226
  %v357 = vpop.f32.mrf.mxu0
  %v358 = vadd.f32 0.0, %v357
  %v359 = vpop.f32.mrf.mxu0
  %v360 = vpop.f32.mrf.mxu0
  %v361 = vadd.f32 0.0, %v360
  %v362 = vpop.f32.mrf.mxu0
  %363 = vmatprep.mubr.bf16.mxu0 0
  %364 = vmatmul.mubr.bf16.gmra.mxu0 %v229
  %v365 = vpop.f32.mrf.mxu0
  %v366 = vadd.f32 0.0, %v365
  %v367 = vpop.f32.mrf.mxu0
  %v368 = vpop.f32.mrf.mxu0
  %v369 = vadd.f32 0.0, %v368
  %v370 = vpop.f32.mrf.mxu0
  %371 = vmatprep.mubr.bf16.mxu0 0
  %372 = vmatmul.mubr.bf16.gmra.mxu0 %v232
  %v373 = vpop.f32.mrf.mxu0
  %v374 = vadd.f32 0.0, %v373
  %v375 = vpop.f32.mrf.mxu0
  %v376 = vpop.f32.mrf.mxu0
  %v377 = vadd.f32 0.0, %v376
  %v378 = vpop.f32.mrf.mxu0
  %379 = vmatprep.mubr.bf16.mxu0 0
  %380 = vmatmul.mubr.bf16.gmra.mxu0 %v235
  %v381 = vpop.f32.mrf.mxu0
  %v382 = vadd.f32 0.0, %v381
  %v383 = vpop.f32.mrf.mxu0
  %v384 = vpop.f32.mrf.mxu0
  %v385 = vadd.f32 0.0, %v384
  %v386 = vpop.f32.mrf.mxu0
  %387 = vmatprep.mubr.bf16.mxu0 0
  %388 = vmatmul.mubr.bf16.gmra.mxu0 %v238
  %v389 = vpop.f32.mrf.mxu0
  %v390 = vadd.f32 0.0, %v389
  %v391 = vpop.f32.mrf.mxu0
  %v392 = vpop.f32.mrf.mxu0
  %v393 = vadd.f32 0.0, %v392
  %v394 = vpop.f32.mrf.mxu0
  %395 = vmatprep.mubr.bf16.mxu0 0
  %396 = vmatmul.mubr.bf16.gmra.mxu0 %v241
  %v397 = vpop.f32.mrf.mxu0
  %v398 = vadd.f32 0.0, %v397
  %v399 = vpop.f32.mrf.mxu0
  %v400 = vpop.f32.mrf.mxu0
  %v401 = vadd.f32 0.0, %v400
  %v402 = vpop.f32.mrf.mxu0
  %403 = vdwg.mxu0
  %v436 = vunpack.c.l.b16 %v30
  %v437 = vunpack.c.l.b16 %v31
  %v438 = vunpack.c.l.b16 %v32
  %v439 = vunpack.c.l.b16 %v33
  %v440 = vunpack.c.l.b16 %v34
  %v441 = vunpack.c.l.b16 %v35
  %v442 = vunpack.c.l.b16 %v36
  %v443 = vunpack.c.l.b16 %v37
  %v444 = vunpack.c.l.b16 %v38
  %v445 = vunpack.c.l.b16 %v39
  %v446 = vunpack.c.l.b16 %v40
  %v447 = vunpack.c.l.b16 %v41
  %v448 = vunpack.c.l.b16 %v42
  %v449 = vunpack.c.l.b16 %v43
  %v450 = vunpack.c.l.b16 %v44
  %v451 = vunpack.c.l.b16 %v45
  %v452 = vunpack.c.l.b16 %v46
  %v453 = vunpack.c.l.b16 %v47
  %v454 = vunpack.c.l.b16 %v48
  %v455 = vunpack.c.l.b16 %v49
  %v456 = vunpack.c.l.b16 %v50
  %v457 = vunpack.c.l.b16 %v51
  %v458 = vunpack.c.l.b16 %v52
  %v459 = vunpack.c.l.b16 %v53
  %v460 = vunpack.c.l.b16 %v54
  %v461 = vunpack.c.l.b16 %v55
  %v462 = vunpack.c.l.b16 %v56
  %v463 = vunpack.c.l.b16 %v57
  %v464 = vunpack.c.l.b16 %v58
  %v465 = vunpack.c.l.b16 %v59
  %v466 = vunpack.c.l.b16 %v60
  %v467 = vunpack.c.l.b16 %v61
  %v468 = vpack.c.b16 %v437, %v436
  %v469 = vpack.c.b16 %v439, %v438
  %v470 = vpack.c.b16 %v441, %v440
  %v471 = vpack.c.b16 %v443, %v442
  %v472 = vpack.c.b16 %v445, %v444
  %v473 = vpack.c.b16 %v447, %v446
  %v474 = vpack.c.b16 %v449, %v448
  %v475 = vpack.c.b16 %v451, %v450
  %v476 = vpack.c.b16 %v453, %v452
  %v477 = vpack.c.b16 %v455, %v454
  %v478 = vpack.c.b16 %v457, %v456
  %v479 = vpack.c.b16 %v459, %v458
  %v480 = vpack.c.b16 %v461, %v460
  %v481 = vpack.c.b16 %v463, %v462
  %v482 = vpack.c.b16 %v465, %v464
  %v483 = vpack.c.b16 %v467, %v466
  %v488 = vunpack.c.l.b16 %v94
  %v489 = vunpack.c.l.b16 %v95
  %v490 = vunpack.c.l.b16 %v96
  %v491 = vunpack.c.l.b16 %v97
  %v492 = vpack.c.b16 %v489, %v488
  %v493 = vpack.c.b16 %v491, %v490
  %v497 = vsel %vm194, %v468, 0
  %v500 = vsel %vm194, %v469, 0
  %v503 = vsel %vm194, %v470, 0
  %v506 = vsel %vm194, %v471, 0
  %v509 = vsel %vm194, %v472, 0
  %v512 = vsel %vm194, %v473, 0
  %v515 = vsel %vm194, %v474, 0
  %v518 = vsel %vm194, %v475, 0
  %v521 = vsel %vm194, %v476, 0
  %v524 = vsel %vm194, %v477, 0
  %v527 = vsel %vm194, %v478, 0
  %v530 = vsel %vm194, %v479, 0
  %v533 = vsel %vm194, %v480, 0
  %v536 = vsel %vm194, %v481, 0
  %v539 = vsel %vm194, %v482, 0
  %v542 = vsel %vm194, %v483, 0
  %544 = vmatprep.subr.bf16.mxu0 0
  %545 = vmatpush1.bf16.msra.mxu0 0
  %546 = vmatprep.subr.bf16.mxu0 0
  %547 = vmatpush1.bf16.msra.mxu0 0
  %548 = vmatprep.subr.bf16.mxu0 0
  %549 = vmatpush1.bf16.msra.mxu0 0
  %550 = vmatprep.subr.bf16.mxu0 0
  %551 = vmatpush1.bf16.msra.mxu0 0
  %552 = vmatprep.subr.bf16.mxu0 0
  %553 = vmatpush1.bf16.msra.mxu0 0
  %554 = vmatprep.subr.bf16.mxu0 0
  %555 = vmatpush1.bf16.msra.mxu0 0
  %556 = vmatprep.subr.bf16.mxu0 0
  %557 = vmatpush1.bf16.msra.mxu0 %v493
  %558 = vmatprep.subr.bf16.mxu0 0
  %559 = vmatpush1.bf16.msra.mxu0 %v492
  %560 = vmatprep.subr.bf16.mxu0 0
  %561 = vmatpush2.bf16.msra.mxu0 0
  %562 = vmatprep.subr.bf16.mxu0 0
  %563 = vmatpush2.bf16.msra.mxu0 0
  %564 = vmatprep.subr.bf16.mxu0 0
  %565 = vmatpush2.bf16.msra.mxu0 0
  %566 = vmatprep.subr.bf16.mxu0 0
  %567 = vmatpush2.bf16.msra.mxu0 0
  %568 = vmatprep.subr.bf16.mxu0 0
  %569 = vmatpush2.bf16.msra.mxu0 0
  %570 = vmatprep.subr.bf16.mxu0 0
  %571 = vmatpush2.bf16.msra.mxu0 0
  %572 = vmatprep.subr.bf16.mxu0 0
  %573 = vmatpush2.bf16.msra.mxu0 0
  %574 = vmatprep.subr.bf16.mxu0 0
  %575 = vmatpush2.bf16.msra.mxu0 0
  %576 = vmatprep.mubr.bf16.mxu0 0
  %577 = vmatmul.mubr.bf16.gmra.mxu0 %v497
  %v578 = vpop.f32.mrf.mxu0
  %v579 = vadd.f32 %v278, %v578
  %v580 = vpop.f32.mrf.mxu0
  %v581 = vpop.f32.mrf.mxu0
  %v582 = vadd.f32 %v281, %v581
  %v583 = vpop.f32.mrf.mxu0
  %584 = vmatprep.mubr.bf16.mxu0 0
  %585 = vmatmul.mubr.bf16.gmra.mxu0 %v500
  %v586 = vpop.f32.mrf.mxu0
  %v587 = vadd.f32 %v286, %v586
  %v588 = vpop.f32.mrf.mxu0
  %v589 = vpop.f32.mrf.mxu0
  %v590 = vadd.f32 %v289, %v589
  %v591 = vpop.f32.mrf.mxu0
  %592 = vmatprep.mubr.bf16.mxu0 0
  %593 = vmatmul.mubr.bf16.gmra.mxu0 %v503
  %v594 = vpop.f32.mrf.mxu0
  %v595 = vadd.f32 %v294, %v594
  %v596 = vpop.f32.mrf.mxu0
  %v597 = vpop.f32.mrf.mxu0
  %v598 = vadd.f32 %v297, %v597
  %v599 = vpop.f32.mrf.mxu0
  %600 = vmatprep.mubr.bf16.mxu0 0
  %601 = vmatmul.mubr.bf16.gmra.mxu0 %v506
  %v602 = vpop.f32.mrf.mxu0
  %v603 = vadd.f32 %v302, %v602
  %v604 = vpop.f32.mrf.mxu0
  %v605 = vpop.f32.mrf.mxu0
  %v606 = vadd.f32 %v305, %v605
  %v607 = vpop.f32.mrf.mxu0
  %608 = vmatprep.mubr.bf16.mxu0 0
  %609 = vmatmul.mubr.bf16.gmra.mxu0 %v509
  %v610 = vpop.f32.mrf.mxu0
  %v611 = vadd.f32 %v310, %v610
  %v612 = vpop.f32.mrf.mxu0
  %v613 = vpop.f32.mrf.mxu0
  %v614 = vadd.f32 %v313, %v613
  %v615 = vpop.f32.mrf.mxu0
  %616 = vmatprep.mubr.bf16.mxu0 0
  %617 = vmatmul.mubr.bf16.gmra.mxu0 %v512
  %v618 = vpop.f32.mrf.mxu0
  %v619 = vadd.f32 %v318, %v618
  %v620 = vpop.f32.mrf.mxu0
  %v621 = vpop.f32.mrf.mxu0
  %v622 = vadd.f32 %v321, %v621
  %v623 = vpop.f32.mrf.mxu0
  %624 = vmatprep.mubr.bf16.mxu0 0
  %625 = vmatmul.mubr.bf16.gmra.mxu0 %v515
  %v626 = vpop.f32.mrf.mxu0
  %v627 = vadd.f32 %v326, %v626
  %v628 = vpop.f32.mrf.mxu0
  %v629 = vpop.f32.mrf.mxu0
  %v630 = vadd.f32 %v329, %v629
  %v631 = vpop.f32.mrf.mxu0
  %632 = vmatprep.mubr.bf16.mxu0 0
  %633 = vmatmul.mubr.bf16.gmra.mxu0 %v518
  %v634 = vpop.f32.mrf.mxu0
  %v635 = vadd.f32 %v334, %v634
  %v636 = vpop.f32.mrf.mxu0
  %v637 = vpop.f32.mrf.mxu0
  %v638 = vadd.f32 %v337, %v637
  %v639 = vpop.f32.mrf.mxu0
  %640 = vmatprep.mubr.bf16.mxu0 0
  %641 = vmatmul.mubr.bf16.gmra.mxu0 %v521
  %v642 = vpop.f32.mrf.mxu0
  %v643 = vadd.f32 %v342, %v642
  %v644 = vpop.f32.mrf.mxu0
  %v645 = vpop.f32.mrf.mxu0
  %v646 = vadd.f32 %v345, %v645
  %v647 = vpop.f32.mrf.mxu0
  %648 = vmatprep.mubr.bf16.mxu0 0
  %649 = vmatmul.mubr.bf16.gmra.mxu0 %v524
  %v650 = vpop.f32.mrf.mxu0
  %v651 = vadd.f32 %v350, %v650
  %v652 = vpop.f32.mrf.mxu0
  %v653 = vpop.f32.mrf.mxu0
  %v654 = vadd.f32 %v353, %v653
  %v655 = vpop.f32.mrf.mxu0
  %656 = vmatprep.mubr.bf16.mxu0 0
  %657 = vmatmul.mubr.bf16.gmra.mxu0 %v527
  %v658 = vpop.f32.mrf.mxu0
  %v659 = vadd.f32 %v358, %v658
  %v660 = vpop.f32.mrf.mxu0
  %v661 = vpop.f32.mrf.mxu0
  %v662 = vadd.f32 %v361, %v661
  %v663 = vpop.f32.mrf.mxu0
  %664 = vmatprep.mubr.bf16.mxu0 0
  %665 = vmatmul.mubr.bf16.gmra.mxu0 %v530
  %v666 = vpop.f32.mrf.mxu0
  %v667 = vadd.f32 %v366, %v666
  %v668 = vpop.f32.mrf.mxu0
  %v669 = vpop.f32.mrf.mxu0
  %v670 = vadd.f32 %v369, %v669
  %v671 = vpop.f32.mrf.mxu0
  %672 = vmatprep.mubr.bf16.mxu0 0
  %673 = vmatmul.mubr.bf16.gmra.mxu0 %v533
  %v674 = vpop.f32.mrf.mxu0
  %v675 = vadd.f32 %v374, %v674
  %v676 = vpop.f32.mrf.mxu0
  %v677 = vpop.f32.mrf.mxu0
  %v678 = vadd.f32 %v377, %v677
  %v679 = vpop.f32.mrf.mxu0
  %680 = vmatprep.mubr.bf16.mxu0 0
  %681 = vmatmul.mubr.bf16.gmra.mxu0 %v536
  %v682 = vpop.f32.mrf.mxu0
  %v683 = vadd.f32 %v382, %v682
  %v684 = vpop.f32.mrf.mxu0
  %v685 = vpop.f32.mrf.mxu0
  %v686 = vadd.f32 %v385, %v685
  %v687 = vpop.f32.mrf.mxu0
  %688 = vmatprep.mubr.bf16.mxu0 0
  %689 = vmatmul.mubr.bf16.gmra.mxu0 %v539
  %v690 = vpop.f32.mrf.mxu0
  %v691 = vadd.f32 %v390, %v690
  %v692 = vpop.f32.mrf.mxu0
  %v693 = vpop.f32.mrf.mxu0
  %v694 = vadd.f32 %v393, %v693
  %v695 = vpop.f32.mrf.mxu0
  %696 = vmatprep.mubr.bf16.mxu0 0
  %697 = vmatmul.mubr.bf16.gmra.mxu0 %v542
  %v698 = vpop.f32.mrf.mxu0
  %v699 = vadd.f32 %v398, %v698
  %v700 = vpop.f32.mrf.mxu0
  %v701 = vpop.f32.mrf.mxu0
  %v702 = vadd.f32 %v401, %v701
  %v703 = vpop.f32.mrf.mxu0
  %704 = vdwg.mxu0
  %v705 = vld [vmem:[%s4] sm:$0x1]
  %v707 = vlaneseq
  %v708 = vshrl.u32 %v707, 7
  %v709 = vsub.s32 0, %v708
  %v710 = vrot.slane %v705, %v709
  %v712 = vadd.f32 %v579, %v710
  %v713 = vadd.f32 %v582, %v710
  %v714 = vadd.f32 %v587, %v710
  %v715 = vadd.f32 %v590, %v710
  %v716 = vadd.f32 %v595, %v710
  %v717 = vadd.f32 %v598, %v710
  %v718 = vadd.f32 %v603, %v710
  %v719 = vadd.f32 %v606, %v710
  %v720 = vadd.f32 %v611, %v710
  %v721 = vadd.f32 %v614, %v710
  %v722 = vadd.f32 %v619, %v710
  %v723 = vadd.f32 %v622, %v710
  %v724 = vadd.f32 %v627, %v710
  %v725 = vadd.f32 %v630, %v710
  %v726 = vadd.f32 %v635, %v710
  %v727 = vadd.f32 %v638, %v710
  %v728 = vadd.f32 %v643, %v710
  %v729 = vadd.f32 %v646, %v710
  %v730 = vadd.f32 %v651, %v710
  %v731 = vadd.f32 %v654, %v710
  %v732 = vadd.f32 %v659, %v710
  %v733 = vadd.f32 %v662, %v710
  %v734 = vadd.f32 %v667, %v710
  %v735 = vadd.f32 %v670, %v710
  %v736 = vadd.f32 %v675, %v710
  %v737 = vadd.f32 %v678, %v710
  %v738 = vadd.f32 %v683, %v710
  %v739 = vadd.f32 %v686, %v710
  %v740 = vadd.f32 %v691, %v710
  %v741 = vadd.f32 %v694, %v710
  %v742 = vadd.f32 %v699, %v710
  %v743 = vadd.f32 %v702, %v710
  %v744 = vmax.f32 %v712, 0.0
  %v745 = vmax.f32 %v713, 0.0
  %v746 = vmax.f32 %v714, 0.0
  %v747 = vmax.f32 %v715, 0.0
  %v748 = vmax.f32 %v716, 0.0
  %v749 = vmax.f32 %v717, 0.0
  %v750 = vmax.f32 %v718, 0.0
  %v751 = vmax.f32 %v719, 0.0
  %v752 = vmax.f32 %v720, 0.0
  %v753 = vmax.f32 %v721, 0.0
  %v754 = vmax.f32 %v722, 0.0
  %v755 = vmax.f32 %v723, 0.0
  %v756 = vmax.f32 %v724, 0.0
  %v757 = vmax.f32 %v725, 0.0
  %v758 = vmax.f32 %v726, 0.0
  %v759 = vmax.f32 %v727, 0.0
  %v760 = vmax.f32 %v728, 0.0
  %v761 = vmax.f32 %v729, 0.0
  %v762 = vmax.f32 %v730, 0.0
  %v763 = vmax.f32 %v731, 0.0
  %v764 = vmax.f32 %v732, 0.0
  %v765 = vmax.f32 %v733, 0.0
  %v766 = vmax.f32 %v734, 0.0
  %v767 = vmax.f32 %v735, 0.0
  %v768 = vmax.f32 %v736, 0.0
  %v769 = vmax.f32 %v737, 0.0
  %v770 = vmax.f32 %v738, 0.0
  %v771 = vmax.f32 %v739, 0.0
  %v772 = vmax.f32 %v740, 0.0
  %v773 = vmax.f32 %v741, 0.0
  %v774 = vmax.f32 %v742, 0.0
  %v775 = vmax.f32 %v743, 0.0
  %v776 = vpack.c.bf16 %v745, %v744
  %v777 = vpack.c.bf16 %v747, %v746
  %v778 = vpack.c.bf16 %v749, %v748
  %v779 = vpack.c.bf16 %v751, %v750
  %v780 = vpack.c.bf16 %v753, %v752
  %v781 = vpack.c.bf16 %v755, %v754
  %v782 = vpack.c.bf16 %v757, %v756
  %v783 = vpack.c.bf16 %v759, %v758
  %v784 = vpack.c.bf16 %v761, %v760
  %v785 = vpack.c.bf16 %v763, %v762
  %v786 = vpack.c.bf16 %v765, %v764
  %v787 = vpack.c.bf16 %v767, %v766
  %v788 = vpack.c.bf16 %v769, %v768
  %v789 = vpack.c.bf16 %v771, %v770
  %v790 = vpack.c.bf16 %v773, %v772
  %v791 = vpack.c.bf16 %v775, %v774
  %v792 = vld [vmem:[%s5] sm:$0xf]
  %v793 = vld [vmem:[%s5 + $0x4] sm:$0xf]
  %v794 = vld [vmem:[%s5 + $0x8] sm:$0xf]
  %v795 = vld [vmem:[%s5 + $0xc] sm:$0xf]
  %v800 = vunpack.c.l.b16 %v792
  %v801 = vunpack.c.l.b16 %v793
  %v802 = vunpack.c.l.b16 %v794
  %v803 = vunpack.c.l.b16 %v795
  %v804 = vpack.c.b16 %v801, %v800
  %v805 = vpack.c.b16 %v803, %v802
  %v809 = vsel %vm194, %v776, 0
  %v812 = vsel %vm194, %v777, 0
  %v815 = vsel %vm194, %v778, 0
  %v818 = vsel %vm194, %v779, 0
  %v821 = vsel %vm194, %v780, 0
  %v824 = vsel %vm194, %v781, 0
  %v827 = vsel %vm194, %v782, 0
  %v830 = vsel %vm194, %v783, 0
  %v833 = vsel %vm194, %v784, 0
  %v836 = vsel %vm194, %v785, 0
  %v839 = vsel %vm194, %v786, 0
  %v842 = vsel %vm194, %v787, 0
  %v845 = vsel %vm194, %v788, 0
  %v848 = vsel %vm194, %v789, 0
  %v851 = vsel %vm194, %v790, 0
  %v854 = vsel %vm194, %v791, 0
  %856 = vmatprep.subr.bf16.mxu0 0
  %857 = vmatpush1.bf16.msra.mxu0 0
  %858 = vmatprep.subr.bf16.mxu0 0
  %859 = vmatpush1.bf16.msra.mxu0 0
  %860 = vmatprep.subr.bf16.mxu0 0
  %861 = vmatpush1.bf16.msra.mxu0 0
  %862 = vmatprep.subr.bf16.mxu0 0
  %863 = vmatpush1.bf16.msra.mxu0 0
  %864 = vmatprep.subr.bf16.mxu0 0
  %865 = vmatpush1.bf16.msra.mxu0 0
  %866 = vmatprep.subr.bf16.mxu0 0
  %867 = vmatpush1.bf16.msra.mxu0 0
  %868 = vmatprep.subr.bf16.mxu0 0
  %869 = vmatpush1.bf16.msra.mxu0 %v805
  %870 = vmatprep.subr.bf16.mxu0 0
  %871 = vmatpush1.bf16.msra.mxu0 %v804
  %872 = vmatprep.subr.bf16.mxu0 0
  %873 = vmatpush2.bf16.msra.mxu0 0
  %874 = vmatprep.subr.bf16.mxu0 0
  %875 = vmatpush2.bf16.msra.mxu0 0
  %876 = vmatprep.subr.bf16.mxu0 0
  %877 = vmatpush2.bf16.msra.mxu0 0
  %878 = vmatprep.subr.bf16.mxu0 0
  %879 = vmatpush2.bf16.msra.mxu0 0
  %880 = vmatprep.subr.bf16.mxu0 0
  %881 = vmatpush2.bf16.msra.mxu0 0
  %882 = vmatprep.subr.bf16.mxu0 0
  %883 = vmatpush2.bf16.msra.mxu0 0
  %884 = vmatprep.subr.bf16.mxu0 0
  %885 = vmatpush2.bf16.msra.mxu0 0
  %886 = vmatprep.subr.bf16.mxu0 0
  %887 = vmatpush2.bf16.msra.mxu0 0
  %888 = vmatprep.mubr.bf16.mxu0 0
  %889 = vmatmul.mubr.bf16.gmra.mxu0 %v809
  %v890 = vpop.f32.mrf.mxu0
  %v891 = vadd.f32 0.0, %v890
  %v892 = vpop.f32.mrf.mxu0
  %v893 = vpop.f32.mrf.mxu0
  %v894 = vadd.f32 0.0, %v893
  %v895 = vpop.f32.mrf.mxu0
  %896 = vmatprep.mubr.bf16.mxu0 0
  %897 = vmatmul.mubr.bf16.gmra.mxu0 %v812
  %v898 = vpop.f32.mrf.mxu0
  %v899 = vadd.f32 0.0, %v898
  %v900 = vpop.f32.mrf.mxu0
  %v901 = vpop.f32.mrf.mxu0
  %v902 = vadd.f32 0.0, %v901
  %v903 = vpop.f32.mrf.mxu0
  %904 = vmatprep.mubr.bf16.mxu0 0
  %905 = vmatmul.mubr.bf16.gmra.mxu0 %v815
  %v906 = vpop.f32.mrf.mxu0
  %v907 = vadd.f32 0.0, %v906
  %v908 = vpop.f32.mrf.mxu0
  %v909 = vpop.f32.mrf.mxu0
  %v910 = vadd.f32 0.0, %v909
  %v911 = vpop.f32.mrf.mxu0
  %912 = vmatprep.mubr.bf16.mxu0 0
  %913 = vmatmul.mubr.bf16.gmra.mxu0 %v818
  %v914 = vpop.f32.mrf.mxu0
  %v915 = vadd.f32 0.0, %v914
  %v916 = vpop.f32.mrf.mxu0
  %v917 = vpop.f32.mrf.mxu0
  %v918 = vadd.f32 0.0, %v917
  %v919 = vpop.f32.mrf.mxu0
  %920 = vmatprep.mubr.bf16.mxu0 0
  %921 = vmatmul.mubr.bf16.gmra.mxu0 %v821
  %v922 = vpop.f32.mrf.mxu0
  %v923 = vadd.f32 0.0, %v922
  %v924 = vpop.f32.mrf.mxu0
  %v925 = vpop.f32.mrf.mxu0
  %v926 = vadd.f32 0.0, %v925
  %v927 = vpop.f32.mrf.mxu0
  %928 = vmatprep.mubr.bf16.mxu0 0
  %929 = vmatmul.mubr.bf16.gmra.mxu0 %v824
  %v930 = vpop.f32.mrf.mxu0
  %v931 = vadd.f32 0.0, %v930
  %v932 = vpop.f32.mrf.mxu0
  %v933 = vpop.f32.mrf.mxu0
  %v934 = vadd.f32 0.0, %v933
  %v935 = vpop.f32.mrf.mxu0
  %936 = vmatprep.mubr.bf16.mxu0 0
  %937 = vmatmul.mubr.bf16.gmra.mxu0 %v827
  %v938 = vpop.f32.mrf.mxu0
  %v939 = vadd.f32 0.0, %v938
  %v940 = vpop.f32.mrf.mxu0
  %v941 = vpop.f32.mrf.mxu0
  %v942 = vadd.f32 0.0, %v941
  %v943 = vpop.f32.mrf.mxu0
  %944 = vmatprep.mubr.bf16.mxu0 0
  %945 = vmatmul.mubr.bf16.gmra.mxu0 %v830
  %v946 = vpop.f32.mrf.mxu0
  %v947 = vadd.f32 0.0, %v946
  %v948 = vpop.f32.mrf.mxu0
  %v949 = vpop.f32.mrf.mxu0
  %v950 = vadd.f32 0.0, %v949
  %v951 = vpop.f32.mrf.mxu0
  %952 = vmatprep.mubr.bf16.mxu0 0
  %953 = vmatmul.mubr.bf16.gmra.mxu0 %v833
  %v954 = vpop.f32.mrf.mxu0
  %v955 = vadd.f32 0.0, %v954
  %v956 = vpop.f32.mrf.mxu0
  %v957 = vpop.f32.mrf.mxu0
  %v958 = vadd.f32 0.0, %v957
  %v959 = vpop.f32.mrf.mxu0
  %960 = vmatprep.mubr.bf16.mxu0 0
  %961 = vmatmul.mubr.bf16.gmra.mxu0 %v836
  %v962 = vpop.f32.mrf.mxu0
  %v963 = vadd.f32 0.0, %v962
  %v964 = vpop.f32.mrf.mxu0
  %v965 = vpop.f32.mrf.mxu0
  %v966 = vadd.f32 0.0, %v965
  %v967 = vpop.f32.mrf.mxu0
  %968 = vmatprep.mubr.bf16.mxu0 0
  %969 = vmatmul.mubr.bf16.gmra.mxu0 %v839
  %v970 = vpop.f32.mrf.mxu0
  %v971 = vadd.f32 0.0, %v970
  %v972 = vpop.f32.mrf.mxu0
  %v973 = vpop.f32.mrf.mxu0
  %v974 = vadd.f32 0.0, %v973
  %v975 = vpop.f32.mrf.mxu0
  %976 = vmatprep.mubr.bf16.mxu0 0
  %977 = vmatmul.mubr.bf16.gmra.mxu0 %v842
  %v978 = vpop.f32.mrf.mxu0
  %v979 = vadd.f32 0.0, %v978
  %v980 = vpop.f32.mrf.mxu0
  %v981 = vpop.f32.mrf.mxu0
  %v982 = vadd.f32 0.0, %v981
  %v983 = vpop.f32.mrf.mxu0
  %984 = vmatprep.mubr.bf16.mxu0 0
  %985 = vmatmul.mubr.bf16.gmra.mxu0 %v845
  %v986 = vpop.f32.mrf.mxu0
  %v987 = vadd.f32 0.0, %v986
  %v988 = vpop.f32.mrf.mxu0
  %v989 = vpop.f32.mrf.mxu0
  %v990 = vadd.f32 0.0, %v989
  %v991 = vpop.f32.mrf.mxu0
  %992 = vmatprep.mubr.bf16.mxu0 0
  %993 = vmatmul.mubr.bf16.gmra.mxu0 %v848
  %v994 = vpop.f32.mrf.mxu0
  %v995 = vadd.f32 0.0, %v994
  %v996 = vpop.f32.mrf.mxu0
  %v997 = vpop.f32.mrf.mxu0
  %v998 = vadd.f32 0.0, %v997
  %v999 = vpop.f32.mrf.mxu0
  %1000 = vmatprep.mubr.bf16.mxu0 0
  %1001 = vmatmul.mubr.bf16.gmra.mxu0 %v851
  %v1002 = vpop.f32.mrf.mxu0
  %v1003 = vadd.f32 0.0, %v1002
  %v1004 = vpop.f32.mrf.mxu0
  %v1005 = vpop.f32.mrf.mxu0
  %v1006 = vadd.f32 0.0, %v1005
  %v1007 = vpop.f32.mrf.mxu0
  %1008 = vmatprep.mubr.bf16.mxu0 0
  %1009 = vmatmul.mubr.bf16.gmra.mxu0 %v854
  %v1010 = vpop.f32.mrf.mxu0
  %v1011 = vadd.f32 0.0, %v1010
  %v1012 = vpop.f32.mrf.mxu0
  %v1013 = vpop.f32.mrf.mxu0
  %v1014 = vadd.f32 0.0, %v1013
  %v1015 = vpop.f32.mrf.mxu0
  %1016 = vdwg.mxu0
  %v1017 = vpack.c.bf16 %v894, %v891
  %v1018 = vpack.c.bf16 %v902, %v899
  %v1019 = vpack.c.bf16 %v910, %v907
  %v1020 = vpack.c.bf16 %v918, %v915
  %v1021 = vpack.c.bf16 %v926, %v923
  %v1022 = vpack.c.bf16 %v934, %v931
  %v1023 = vpack.c.bf16 %v942, %v939
  %v1024 = vpack.c.bf16 %v950, %v947
  %v1025 = vpack.c.bf16 %v958, %v955
  %v1026 = vpack.c.bf16 %v966, %v963
  %v1027 = vpack.c.bf16 %v974, %v971
  %v1028 = vpack.c.bf16 %v982, %v979
  %v1029 = vpack.c.bf16 %v990, %v987
  %v1030 = vpack.c.bf16 %v998, %v995
  %v1031 = vpack.c.bf16 %v1006, %v1003
  %v1032 = vpack.c.bf16 %v1014, %v1011
  %v1049 = vunpack.c.l.b16 %v1017
  %v1050 = vunpack.c.h.b16 %v1017
  %v1051 = vunpack.c.l.b16 %v1018
  %v1052 = vunpack.c.h.b16 %v1018
  %v1053 = vunpack.c.l.b16 %v1019
  %v1054 = vunpack.c.h.b16 %v1019
  %v1055 = vunpack.c.l.b16 %v1020
  %v1056 = vunpack.c.h.b16 %v1020
  %v1057 = vunpack.c.l.b16 %v1021
  %v1058 = vunpack.c.h.b16 %v1021
  %v1059 = vunpack.c.l.b16 %v1022
  %v1060 = vunpack.c.h.b16 %v1022
  %v1061 = vunpack.c.l.b16 %v1023
  %v1062 = vunpack.c.h.b16 %v1023
  %v1063 = vunpack.c.l.b16 %v1024
  %v1064 = vunpack.c.h.b16 %v1024
  %v1065 = vunpack.c.l.b16 %v1025
  %v1066 = vunpack.c.h.b16 %v1025
  %v1067 = vunpack.c.l.b16 %v1026
  %v1068 = vunpack.c.h.b16 %v1026
  %v1069 = vunpack.c.l.b16 %v1027
  %v1070 = vunpack.c.h.b16 %v1027
  %v1071 = vunpack.c.l.b16 %v1028
  %v1072 = vunpack.c.h.b16 %v1028
  %v1073 = vunpack.c.l.b16 %v1029
  %v1074 = vunpack.c.h.b16 %v1029
  %v1075 = vunpack.c.l.b16 %v1030
  %v1076 = vunpack.c.h.b16 %v1030
  %v1077 = vunpack.c.l.b16 %v1031
  %v1078 = vunpack.c.h.b16 %v1031
  %v1079 = vunpack.c.l.b16 %v1032
  %v1080 = vunpack.c.h.b16 %v1032
  %v1081 = vpack.c.b16 %v1049, %v1049
  %v1082 = vpack.c.b16 %v1050, %v1050
  %v1083 = vpack.c.b16 %v1051, %v1051
  %v1084 = vpack.c.b16 %v1052, %v1052
  %v1085 = vpack.c.b16 %v1053, %v1053
  %v1086 = vpack.c.b16 %v1054, %v1054
  %v1087 = vpack.c.b16 %v1055, %v1055
  %v1088 = vpack.c.b16 %v1056, %v1056
  %v1089 = vpack.c.b16 %v1057, %v1057
  %v1090 = vpack.c.b16 %v1058, %v1058
  %v1091 = vpack.c.b16 %v1059, %v1059
  %v1092 = vpack.c.b16 %v1060, %v1060
  %v1093 = vpack.c.b16 %v1061, %v1061
  %v1094 = vpack.c.b16 %v1062, %v1062
  %v1095 = vpack.c.b16 %v1063, %v1063
  %v1096 = vpack.c.b16 %v1064, %v1064
  %v1097 = vpack.c.b16 %v1065, %v1065
  %v1098 = vpack.c.b16 %v1066, %v1066
  %v1099 = vpack.c.b16 %v1067, %v1067
  %v1100 = vpack.c.b16 %v1068, %v1068
  %v1101 = vpack.c.b16 %v1069, %v1069
  %v1102 = vpack.c.b16 %v1070, %v1070
  %v1103 = vpack.c.b16 %v1071, %v1071
  %v1104 = vpack.c.b16 %v1072, %v1072
  %v1105 = vpack.c.b16 %v1073, %v1073
  %v1106 = vpack.c.b16 %v1074, %v1074
  %v1107 = vpack.c.b16 %v1075, %v1075
  %v1108 = vpack.c.b16 %v1076, %v1076
  %v1109 = vpack.c.b16 %v1077, %v1077
  %v1110 = vpack.c.b16 %v1078, %v1078
  %v1111 = vpack.c.b16 %v1079, %v1079
  %v1112 = vpack.c.b16 %v1080, %v1080
  %vm1145 = vcmask 257024
  %1146 = vst.msk [vmem:[%s7] sm:$0xf] %vm1145, %v1081
  %1147 = vst.msk [vmem:[%s7 + $0x4] sm:$0xf] %vm1145, %v1082
  %1148 = vst.msk [vmem:[%s7 + $0x8] sm:$0xf] %vm1145, %v1083
  %1149 = vst.msk [vmem:[%s7 + $0xc] sm:$0xf] %vm1145, %v1084
  %1150 = vst.msk [vmem:[%s7 + $0x10] sm:$0xf] %vm1145, %v1085
  %1151 = vst.msk [vmem:[%s7 + $0x14] sm:$0xf] %vm1145, %v1086
  %1152 = vst.msk [vmem:[%s7 + $0x18] sm:$0xf] %vm1145, %v1087
  %1153 = vst.msk [vmem:[%s7 + $0x1c] sm:$0xf] %vm1145, %v1088
  %1154 = vst.msk [vmem:[%s7 + $0x20] sm:$0xf] %vm1145, %v1089
  %1155 = vst.msk [vmem:[%s7 + $0x24] sm:$0xf] %vm1145, %v1090
  %1156 = vst.msk [vmem:[%s7 + $0x28] sm:$0xf] %vm1145, %v1091
  %1157 = vst.msk [vmem:[%s7 + $0x2c] sm:$0xf] %vm1145, %v1092
  %1158 = vst.msk [vmem:[%s7 + $0x30] sm:$0xf] %vm1145, %v1093
  %1159 = vst.msk [vmem:[%s7 + $0x34] sm:$0xf] %vm1145, %v1094
  %1160 = vst.msk [vmem:[%s7 + $0x38] sm:$0xf] %vm1145, %v1095
  %1161 = vst.msk [vmem:[%s7 + $0x3c] sm:$0xf] %vm1145, %v1096
  %1162 = vst.msk [vmem:[%s7 + $0x40] sm:$0xf] %vm1145, %v1097
  %1163 = vst.msk [vmem:[%s7 + $0x44] sm:$0xf] %vm1145, %v1098
  %1164 = vst.msk [vmem:[%s7 + $0x48] sm:$0xf] %vm1145, %v1099
  %1165 = vst.msk [vmem:[%s7 + $0x4c] sm:$0xf] %vm1145, %v1100
  %1166 = vst.msk [vmem:[%s7 + $0x50] sm:$0xf] %vm1145, %v1101
  %1167 = vst.msk [vmem:[%s7 + $0x54] sm:$0xf] %vm1145, %v1102
  %1168 = vst.msk [vmem:[%s7 + $0x58] sm:$0xf] %vm1145, %v1103
  %1169 = vst.msk [vmem:[%s7 + $0x5c] sm:$0xf] %vm1145, %v1104
  %1170 = vst.msk [vmem:[%s7 + $0x60] sm:$0xf] %vm1145, %v1105
  %1171 = vst.msk [vmem:[%s7 + $0x64] sm:$0xf] %vm1145, %v1106
  %1172 = vst.msk [vmem:[%s7 + $0x68] sm:$0xf] %vm1145, %v1107
  %1173 = vst.msk [vmem:[%s7 + $0x6c] sm:$0xf] %vm1145, %v1108
  %1174 = vst.msk [vmem:[%s7 + $0x70] sm:$0xf] %vm1145, %v1109
  %1175 = vst.msk [vmem:[%s7 + $0x74] sm:$0xf] %vm1145, %v1110
  %1176 = vst.msk [vmem:[%s7 + $0x78] sm:$0xf] %vm1145, %v1111
  %1177 = vst.msk [vmem:[%s7 + $0x7c] sm:$0xf] %vm1145, %v1112
  %1178 = vrot.lane.b32.xlu0 %v1081, 96
  %v1179 = vpop.permute.xlu0 %1178
  %1180 = vrot.lane.b32.xlu0 %v1082, 96
  %v1181 = vpop.permute.xlu0 %1180
  %1182 = vrot.lane.b32.xlu0 %v1083, 96
  %v1183 = vpop.permute.xlu0 %1182
  %1184 = vrot.lane.b32.xlu0 %v1084, 96
  %v1185 = vpop.permute.xlu0 %1184
  %1186 = vrot.lane.b32.xlu0 %v1085, 96
  %v1187 = vpop.permute.xlu0 %1186
  %1188 = vrot.lane.b32.xlu0 %v1086, 96
  %v1189 = vpop.permute.xlu0 %1188
  %1190 = vrot.lane.b32.xlu0 %v1087, 96
  %v1191 = vpop.permute.xlu0 %1190
  %1192 = vrot.lane.b32.xlu0 %v1088, 96
  %v1193 = vpop.permute.xlu0 %1192
  %1194 = vrot.lane.b32.xlu0 %v1089, 96
  %v1195 = vpop.permute.xlu0 %1194
  %1196 = vrot.lane.b32.xlu0 %v1090, 96
  %v1197 = vpop.permute.xlu0 %1196
  %1198 = vrot.lane.b32.xlu0 %v1091, 96
  %v1199 = vpop.permute.xlu0 %1198
  %1200 = vrot.lane.b32.xlu0 %v1092, 96
  %v1201 = vpop.permute.xlu0 %1200
  %1202 = vrot.lane.b32.xlu0 %v1093, 96
  %v1203 = vpop.permute.xlu0 %1202
  %1204 = vrot.lane.b32.xlu0 %v1094, 96
  %v1205 = vpop.permute.xlu0 %1204
  %1206 = vrot.lane.b32.xlu0 %v1095, 96
  %v1207 = vpop.permute.xlu0 %1206
  %1208 = vrot.lane.b32.xlu0 %v1096, 96
  %v1209 = vpop.permute.xlu0 %1208
  %1210 = vrot.lane.b32.xlu0 %v1097, 96
  %v1211 = vpop.permute.xlu0 %1210
  %1212 = vrot.lane.b32.xlu0 %v1098, 96
  %v1213 = vpop.permute.xlu0 %1212
  %1214 = vrot.lane.b32.xlu0 %v1099, 96
  %v1215 = vpop.permute.xlu0 %1214
  %1216 = vrot.lane.b32.xlu0 %v1100, 96
  %v1217 = vpop.permute.xlu0 %1216
  %1218 = vrot.lane.b32.xlu0 %v1101, 96
  %v1219 = vpop.permute.xlu0 %1218
  %1220 = vrot.lane.b32.xlu0 %v1102, 96
  %v1221 = vpop.permute.xlu0 %1220
  %1222 = vrot.lane.b32.xlu0 %v1103, 96
  %v1223 = vpop.permute.xlu0 %1222
  %1224 = vrot.lane.b32.xlu0 %v1104, 96
  %v1225 = vpop.permute.xlu0 %1224
  %1226 = vrot.lane.b32.xlu0 %v1105, 96
  %v1227 = vpop.permute.xlu0 %1226
  %1228 = vrot.lane.b32.xlu0 %v1106, 96
  %v1229 = vpop.permute.xlu0 %1228
  %1230 = vrot.lane.b32.xlu0 %v1107, 96
  %v1231 = vpop.permute.xlu0 %1230
  %1232 = vrot.lane.b32.xlu0 %v1108, 96
  %v1233 = vpop.permute.xlu0 %1232
  %1234 = vrot.lane.b32.xlu0 %v1109, 96
  %v1235 = vpop.permute.xlu0 %1234
  %1236 = vrot.lane.b32.xlu0 %v1110, 96
  %v1237 = vpop.permute.xlu0 %1236
  %1238 = vrot.lane.b32.xlu0 %v1111, 96
  %v1239 = vpop.permute.xlu0 %1238
  %1240 = vrot.lane.b32.xlu0 %v1112, 96
  %v1241 = vpop.permute.xlu0 %1240
  %1274 = vst.msk [vmem:[%s8] sm:$0xf] %vm1145, %v1179
  %1275 = vst.msk [vmem:[%s8 + $0x4] sm:$0xf] %vm1145, %v1181
  %1276 = vst.msk [vmem:[%s8 + $0x8] sm:$0xf] %vm1145, %v1183
  %1277 = vst.msk [vmem:[%s8 + $0xc] sm:$0xf] %vm1145, %v1185
  %1278 = vst.msk [vmem:[%s8 + $0x10] sm:$0xf] %vm1145, %v1187
  %1279 = vst.msk [vmem:[%s8 + $0x14] sm:$0xf] %vm1145, %v1189
  %1280 = vst.msk [vmem:[%s8 + $0x18] sm:$0xf] %vm1145, %v1191
  %1281 = vst.msk [vmem:[%s8 + $0x1c] sm:$0xf] %vm1145, %v1193
  %1282 = vst.msk [vmem:[%s8 + $0x20] sm:$0xf] %vm1145, %v1195
  %1283 = vst.msk [vmem:[%s8 + $0x24] sm:$0xf] %vm1145, %v1197
  %1284 = vst.msk [vmem:[%s8 + $0x28] sm:$0xf] %vm1145, %v1199
  %1285 = vst.msk [vmem:[%s8 + $0x2c] sm:$0xf] %vm1145, %v1201
  %1286 = vst.msk [vmem:[%s8 + $0x30] sm:$0xf] %vm1145, %v1203
  %1287 = vst.msk [vmem:[%s8 + $0x34] sm:$0xf] %vm1145, %v1205
  %1288 = vst.msk [vmem:[%s8 + $0x38] sm:$0xf] %vm1145, %v1207
  %1289 = vst.msk [vmem:[%s8 + $0x3c] sm:$0xf] %vm1145, %v1209
  %1290 = vst.msk [vmem:[%s8 + $0x40] sm:$0xf] %vm1145, %v1211
  %1291 = vst.msk [vmem:[%s8 + $0x44] sm:$0xf] %vm1145, %v1213
  %1292 = vst.msk [vmem:[%s8 + $0x48] sm:$0xf] %vm1145, %v1215
  %1293 = vst.msk [vmem:[%s8 + $0x4c] sm:$0xf] %vm1145, %v1217
  %1294 = vst.msk [vmem:[%s8 + $0x50] sm:$0xf] %vm1145, %v1219
  %1295 = vst.msk [vmem:[%s8 + $0x54] sm:$0xf] %vm1145, %v1221
  %1296 = vst.msk [vmem:[%s8 + $0x58] sm:$0xf] %vm1145, %v1223
  %1297 = vst.msk [vmem:[%s8 + $0x5c] sm:$0xf] %vm1145, %v1225
  %1298 = vst.msk [vmem:[%s8 + $0x60] sm:$0xf] %vm1145, %v1227
  %1299 = vst.msk [vmem:[%s8 + $0x64] sm:$0xf] %vm1145, %v1229
  %1300 = vst.msk [vmem:[%s8 + $0x68] sm:$0xf] %vm1145, %v1231
  %1301 = vst.msk [vmem:[%s8 + $0x6c] sm:$0xf] %vm1145, %v1233
  %1302 = vst.msk [vmem:[%s8 + $0x70] sm:$0xf] %vm1145, %v1235
  %1303 = vst.msk [vmem:[%s8 + $0x74] sm:$0xf] %vm1145, %v1237
  %1304 = vst.msk [vmem:[%s8 + $0x78] sm:$0xf] %vm1145, %v1239
  %1305 = vst.msk [vmem:[%s8 + $0x7c] sm:$0xf] %vm1145, %v1241
  %v1306 = vld [vmem:[%s6] sm:$0xf]
  %v1307 = vld [vmem:[%s6 + $0x4] sm:$0xf]
  %v1308 = vld [vmem:[%s6 + $0x8] sm:$0xf]
  %v1309 = vld [vmem:[%s6 + $0xc] sm:$0xf]
  %v1314 = vunpack.c.l.b16 %v1306
  %v1315 = vunpack.c.l.b16 %v1307
  %v1316 = vunpack.c.l.b16 %v1308
  %v1317 = vunpack.c.l.b16 %v1309
  %v1318 = vpack.c.b16 %v1315, %v1314
  %v1319 = vpack.c.b16 %v1317, %v1316
  %1322 = vmatprep.subr.bf16.mxu0 0
  %1323 = vmatpush1.bf16.msra.mxu0 0
  %1324 = vmatprep.subr.bf16.mxu0 0
  %1325 = vmatpush1.bf16.msra.mxu0 0
  %1326 = vmatprep.subr.bf16.mxu0 0
  %1327 = vmatpush1.bf16.msra.mxu0 0
  %1328 = vmatprep.subr.bf16.mxu0 0
  %1329 = vmatpush1.bf16.msra.mxu0 0
  %1330 = vmatprep.subr.bf16.mxu0 0
  %1331 = vmatpush1.bf16.msra.mxu0 0
  %1332 = vmatprep.subr.bf16.mxu0 0
  %1333 = vmatpush1.bf16.msra.mxu0 0
  %1334 = vmatprep.subr.bf16.mxu0 0
  %1335 = vmatpush1.bf16.msra.mxu0 %v1319
  %1336 = vmatprep.subr.bf16.mxu0 0
  %1337 = vmatpush1.bf16.msra.mxu0 %v1318
  %1338 = vmatprep.subr.bf16.mxu0 0
  %1339 = vmatpush2.bf16.msra.mxu0 0
  %1340 = vmatprep.subr.bf16.mxu0 0
  %1341 = vmatpush2.bf16.msra.mxu0 0
  %1342 = vmatprep.subr.bf16.mxu0 0
  %1343 = vmatpush2.bf16.msra.mxu0 0
  %1344 = vmatprep.subr.bf16.mxu0 0
  %1345 = vmatpush2.bf16.msra.mxu0 0
  %1346 = vmatprep.subr.bf16.mxu0 0
  %1347 = vmatpush2.bf16.msra.mxu0 0
  %1348 = vmatprep.subr.bf16.mxu0 0
  %1349 = vmatpush2.bf16.msra.mxu0 0
  %1350 = vmatprep.subr.bf16.mxu0 0
  %1351 = vmatpush2.bf16.msra.mxu0 0
  %1352 = vmatprep.subr.bf16.mxu0 0
  %1353 = vmatpush2.bf16.msra.mxu0 0
  %1354 = vmatprep.mubr.bf16.mxu0 0
  %1355 = vmatmul.mubr.bf16.gmra.mxu0 %v497
  %v1356 = vpop.f32.mrf.mxu0
  %v1357 = vadd.f32 0.0, %v1356
  %v1358 = vpop.f32.mrf.mxu0
  %v1359 = vpop.f32.mrf.mxu0
  %v1360 = vadd.f32 0.0, %v1359
  %v1361 = vpop.f32.mrf.mxu0
  %1362 = vmatprep.mubr.bf16.mxu0 0
  %1363 = vmatmul.mubr.bf16.gmra.mxu0 %v500
  %v1364 = vpop.f32.mrf.mxu0
  %v1365 = vadd.f32 0.0, %v1364
  %v1366 = vpop.f32.mrf.mxu0
  %v1367 = vpop.f32.mrf.mxu0
  %v1368 = vadd.f32 0.0, %v1367
  %v1369 = vpop.f32.mrf.mxu0
  %1370 = vmatprep.mubr.bf16.mxu0 0
  %1371 = vmatmul.mubr.bf16.gmra.mxu0 %v503
  %v1372 = vpop.f32.mrf.mxu0
  %v1373 = vadd.f32 0.0, %v1372
  %v1374 = vpop.f32.mrf.mxu0
  %v1375 = vpop.f32.mrf.mxu0
  %v1376 = vadd.f32 0.0, %v1375
  %v1377 = vpop.f32.mrf.mxu0
  %1378 = vmatprep.mubr.bf16.mxu0 0
  %1379 = vmatmul.mubr.bf16.gmra.mxu0 %v506
  %v1380 = vpop.f32.mrf.mxu0
  %v1381 = vadd.f32 0.0, %v1380
  %v1382 = vpop.f32.mrf.mxu0
  %v1383 = vpop.f32.mrf.mxu0
  %v1384 = vadd.f32 0.0, %v1383
  %v1385 = vpop.f32.mrf.mxu0
  %1386 = vmatprep.mubr.bf16.mxu0 0
  %1387 = vmatmul.mubr.bf16.gmra.mxu0 %v509
  %v1388 = vpop.f32.mrf.mxu0
  %v1389 = vadd.f32 0.0, %v1388
  %v1390 = vpop.f32.mrf.mxu0
  %v1391 = vpop.f32.mrf.mxu0
  %v1392 = vadd.f32 0.0, %v1391
  %v1393 = vpop.f32.mrf.mxu0
  %1394 = vmatprep.mubr.bf16.mxu0 0
  %1395 = vmatmul.mubr.bf16.gmra.mxu0 %v512
  %v1396 = vpop.f32.mrf.mxu0
  %v1397 = vadd.f32 0.0, %v1396
  %v1398 = vpop.f32.mrf.mxu0
  %v1399 = vpop.f32.mrf.mxu0
  %v1400 = vadd.f32 0.0, %v1399
  %v1401 = vpop.f32.mrf.mxu0
  %1402 = vmatprep.mubr.bf16.mxu0 0
  %1403 = vmatmul.mubr.bf16.gmra.mxu0 %v515
  %v1404 = vpop.f32.mrf.mxu0
  %v1405 = vadd.f32 0.0, %v1404
  %v1406 = vpop.f32.mrf.mxu0
  %v1407 = vpop.f32.mrf.mxu0
  %v1408 = vadd.f32 0.0, %v1407
  %v1409 = vpop.f32.mrf.mxu0
  %1410 = vmatprep.mubr.bf16.mxu0 0
  %1411 = vmatmul.mubr.bf16.gmra.mxu0 %v518
  %v1412 = vpop.f32.mrf.mxu0
  %v1413 = vadd.f32 0.0, %v1412
  %v1414 = vpop.f32.mrf.mxu0
  %v1415 = vpop.f32.mrf.mxu0
  %v1416 = vadd.f32 0.0, %v1415
  %v1417 = vpop.f32.mrf.mxu0
  %1418 = vmatprep.mubr.bf16.mxu0 0
  %1419 = vmatmul.mubr.bf16.gmra.mxu0 %v521
  %v1420 = vpop.f32.mrf.mxu0
  %v1421 = vadd.f32 0.0, %v1420
  %v1422 = vpop.f32.mrf.mxu0
  %v1423 = vpop.f32.mrf.mxu0
  %v1424 = vadd.f32 0.0, %v1423
  %v1425 = vpop.f32.mrf.mxu0
  %1426 = vmatprep.mubr.bf16.mxu0 0
  %1427 = vmatmul.mubr.bf16.gmra.mxu0 %v524
  %v1428 = vpop.f32.mrf.mxu0
  %v1429 = vadd.f32 0.0, %v1428
  %v1430 = vpop.f32.mrf.mxu0
  %v1431 = vpop.f32.mrf.mxu0
  %v1432 = vadd.f32 0.0, %v1431
  %v1433 = vpop.f32.mrf.mxu0
  %1434 = vmatprep.mubr.bf16.mxu0 0
  %1435 = vmatmul.mubr.bf16.gmra.mxu0 %v527
  %v1436 = vpop.f32.mrf.mxu0
  %v1437 = vadd.f32 0.0, %v1436
  %v1438 = vpop.f32.mrf.mxu0
  %v1439 = vpop.f32.mrf.mxu0
  %v1440 = vadd.f32 0.0, %v1439
  %v1441 = vpop.f32.mrf.mxu0
  %1442 = vmatprep.mubr.bf16.mxu0 0
  %1443 = vmatmul.mubr.bf16.gmra.mxu0 %v530
  %v1444 = vpop.f32.mrf.mxu0
  %v1445 = vadd.f32 0.0, %v1444
  %v1446 = vpop.f32.mrf.mxu0
  %v1447 = vpop.f32.mrf.mxu0
  %v1448 = vadd.f32 0.0, %v1447
  %v1449 = vpop.f32.mrf.mxu0
  %1450 = vmatprep.mubr.bf16.mxu0 0
  %1451 = vmatmul.mubr.bf16.gmra.mxu0 %v533
  %v1452 = vpop.f32.mrf.mxu0
  %v1453 = vadd.f32 0.0, %v1452
  %v1454 = vpop.f32.mrf.mxu0
  %v1455 = vpop.f32.mrf.mxu0
  %v1456 = vadd.f32 0.0, %v1455
  %v1457 = vpop.f32.mrf.mxu0
  %1458 = vmatprep.mubr.bf16.mxu0 0
  %1459 = vmatmul.mubr.bf16.gmra.mxu0 %v536
  %v1460 = vpop.f32.mrf.mxu0
  %v1461 = vadd.f32 0.0, %v1460
  %v1462 = vpop.f32.mrf.mxu0
  %v1463 = vpop.f32.mrf.mxu0
  %v1464 = vadd.f32 0.0, %v1463
  %v1465 = vpop.f32.mrf.mxu0
  %1466 = vmatprep.mubr.bf16.mxu0 0
  %1467 = vmatmul.mubr.bf16.gmra.mxu0 %v539
  %v1468 = vpop.f32.mrf.mxu0
  %v1469 = vadd.f32 0.0, %v1468
  %v1470 = vpop.f32.mrf.mxu0
  %v1471 = vpop.f32.mrf.mxu0
  %v1472 = vadd.f32 0.0, %v1471
  %v1473 = vpop.f32.mrf.mxu0
  %1474 = vmatprep.mubr.bf16.mxu0 0
  %1475 = vmatmul.mubr.bf16.gmra.mxu0 %v542
  %v1476 = vpop.f32.mrf.mxu0
  %v1477 = vadd.f32 0.0, %v1476
  %v1478 = vpop.f32.mrf.mxu0
  %v1479 = vpop.f32.mrf.mxu0
  %v1480 = vadd.f32 0.0, %v1479
  %v1481 = vpop.f32.mrf.mxu0
  %1482 = vdwg.mxu0
  %v1483 = vpack.c.bf16 %v1360, %v1357
  %v1484 = vpack.c.bf16 %v1368, %v1365
  %v1485 = vpack.c.bf16 %v1376, %v1373
  %v1486 = vpack.c.bf16 %v1384, %v1381
  %v1487 = vpack.c.bf16 %v1392, %v1389
  %v1488 = vpack.c.bf16 %v1400, %v1397
  %v1489 = vpack.c.bf16 %v1408, %v1405
  %v1490 = vpack.c.bf16 %v1416, %v1413
  %v1491 = vpack.c.bf16 %v1424, %v1421
  %v1492 = vpack.c.bf16 %v1432, %v1429
  %v1493 = vpack.c.bf16 %v1440, %v1437
  %v1494 = vpack.c.bf16 %v1448, %v1445
  %v1495 = vpack.c.bf16 %v1456, %v1453
  %v1496 = vpack.c.bf16 %v1464, %v1461
  %v1497 = vpack.c.bf16 %v1472, %v1469
  %v1498 = vpack.c.bf16 %v1480, %v1477
  %v1515 = vunpack.c.l.b16 %v1483
  %v1516 = vunpack.c.h.b16 %v1483
  %v1517 = vunpack.c.l.b16 %v1484
  %v1518 = vunpack.c.h.b16 %v1484
  %v1519 = vunpack.c.l.b16 %v1485
  %v1520 = vunpack.c.h.b16 %v1485
  %v1521 = vunpack.c.l.b16 %v1486
  %v1522 = vunpack.c.h.b16 %v1486
  %v1523 = vunpack.c.l.b16 %v1487
  %v1524 = vunpack.c.h.b16 %v1487
  %v1525 = vunpack.c.l.b16 %v1488
  %v1526 = vunpack.c.h.b16 %v1488
  %v1527 = vunpack.c.l.b16 %v1489
  %v1528 = vunpack.c.h.b16 %v1489
  %v1529 = vunpack.c.l.b16 %v1490
  %v1530 = vunpack.c.h.b16 %v1490
  %v1531 = vunpack.c.l.b16 %v1491
  %v1532 = vunpack.c.h.b16 %v1491
  %v1533 = vunpack.c.l.b16 %v1492
  %v1534 = vunpack.c.h.b16 %v1492
  %v1535 = vunpack.c.l.b16 %v1493
  %v1536 = vunpack.c.h.b16 %v1493
  %v1537 = vunpack.c.l.b16 %v1494
  %v1538 = vunpack.c.h.b16 %v1494
  %v1539 = vunpack.c.l.b16 %v1495
  %v1540 = vunpack.c.h.b16 %v1495
  %v1541 = vunpack.c.l.b16 %v1496
  %v1542 = vunpack.c.h.b16 %v1496
  %v1543 = vunpack.c.l.b16 %v1497
  %v1544 = vunpack.c.h.b16 %v1497
  %v1545 = vunpack.c.l.b16 %v1498
  %v1546 = vunpack.c.h.b16 %v1498
  %v1547 = vpack.c.b16 %v1515, %v1515
  %v1548 = vpack.c.b16 %v1516, %v1516
  %v1549 = vpack.c.b16 %v1517, %v1517
  %v1550 = vpack.c.b16 %v1518, %v1518
  %v1551 = vpack.c.b16 %v1519, %v1519
  %v1552 = vpack.c.b16 %v1520, %v1520
  %v1553 = vpack.c.b16 %v1521, %v1521
  %v1554 = vpack.c.b16 %v1522, %v1522
  %v1555 = vpack.c.b16 %v1523, %v1523
  %v1556 = vpack.c.b16 %v1524, %v1524
  %v1557 = vpack.c.b16 %v1525, %v1525
  %v1558 = vpack.c.b16 %v1526, %v1526
  %v1559 = vpack.c.b16 %v1527, %v1527
  %v1560 = vpack.c.b16 %v1528, %v1528
  %v1561 = vpack.c.b16 %v1529, %v1529
  %v1562 = vpack.c.b16 %v1530, %v1530
  %v1563 = vpack.c.b16 %v1531, %v1531
  %v1564 = vpack.c.b16 %v1532, %v1532
  %v1565 = vpack.c.b16 %v1533, %v1533
  %v1566 = vpack.c.b16 %v1534, %v1534
  %v1567 = vpack.c.b16 %v1535, %v1535
  %v1568 = vpack.c.b16 %v1536, %v1536
  %v1569 = vpack.c.b16 %v1537, %v1537
  %v1570 = vpack.c.b16 %v1538, %v1538
  %v1571 = vpack.c.b16 %v1539, %v1539
  %v1572 = vpack.c.b16 %v1540, %v1540
  %v1573 = vpack.c.b16 %v1541, %v1541
  %v1574 = vpack.c.b16 %v1542, %v1542
  %v1575 = vpack.c.b16 %v1543, %v1543
  %v1576 = vpack.c.b16 %v1544, %v1544
  %v1577 = vpack.c.b16 %v1545, %v1545
  %v1578 = vpack.c.b16 %v1546, %v1546
  %1611 = vst.msk [vmem:[%s9] sm:$0xf] %vm1145, %v1547
  %1612 = vst.msk [vmem:[%s9 + $0x4] sm:$0xf] %vm1145, %v1548
  %1613 = vst.msk [vmem:[%s9 + $0x8] sm:$0xf] %vm1145, %v1549
  %1614 = vst.msk [vmem:[%s9 + $0xc] sm:$0xf] %vm1145, %v1550
  %1615 = vst.msk [vmem:[%s9 + $0x10] sm:$0xf] %vm1145, %v1551
  %1616 = vst.msk [vmem:[%s9 + $0x14] sm:$0xf] %vm1145, %v1552
  %1617 = vst.msk [vmem:[%s9 + $0x18] sm:$0xf] %vm1145, %v1553
  %1618 = vst.msk [vmem:[%s9 + $0x1c] sm:$0xf] %vm1145, %v1554
  %1619 = vst.msk [vmem:[%s9 + $0x20] sm:$0xf] %vm1145, %v1555
  %1620 = vst.msk [vmem:[%s9 + $0x24] sm:$0xf] %vm1145, %v1556
  %1621 = vst.msk [vmem:[%s9 + $0x28] sm:$0xf] %vm1145, %v1557
  %1622 = vst.msk [vmem:[%s9 + $0x2c] sm:$0xf] %vm1145, %v1558
  %1623 = vst.msk [vmem:[%s9 + $0x30] sm:$0xf] %vm1145, %v1559
  %1624 = vst.msk [vmem:[%s9 + $0x34] sm:$0xf] %vm1145, %v1560
  %1625 = vst.msk [vmem:[%s9 + $0x38] sm:$0xf] %vm1145, %v1561
  %1626 = vst.msk [vmem:[%s9 + $0x3c] sm:$0xf] %vm1145, %v1562
  %1627 = vst.msk [vmem:[%s9 + $0x40] sm:$0xf] %vm1145, %v1563
  %1628 = vst.msk [vmem:[%s9 + $0x44] sm:$0xf] %vm1145, %v1564
  %1629 = vst.msk [vmem:[%s9 + $0x48] sm:$0xf] %vm1145, %v1565
  %1630 = vst.msk [vmem:[%s9 + $0x4c] sm:$0xf] %vm1145, %v1566
  %1631 = vst.msk [vmem:[%s9 + $0x50] sm:$0xf] %vm1145, %v1567
  %1632 = vst.msk [vmem:[%s9 + $0x54] sm:$0xf] %vm1145, %v1568
  %1633 = vst.msk [vmem:[%s9 + $0x58] sm:$0xf] %vm1145, %v1569
  %1634 = vst.msk [vmem:[%s9 + $0x5c] sm:$0xf] %vm1145, %v1570
  %1635 = vst.msk [vmem:[%s9 + $0x60] sm:$0xf] %vm1145, %v1571
  %1636 = vst.msk [vmem:[%s9 + $0x64] sm:$0xf] %vm1145, %v1572
  %1637 = vst.msk [vmem:[%s9 + $0x68] sm:$0xf] %vm1145, %v1573
  %1638 = vst.msk [vmem:[%s9 + $0x6c] sm:$0xf] %vm1145, %v1574
  %1639 = vst.msk [vmem:[%s9 + $0x70] sm:$0xf] %vm1145, %v1575
  %1640 = vst.msk [vmem:[%s9 + $0x74] sm:$0xf] %vm1145, %v1576
  %1641 = vst.msk [vmem:[%s9 + $0x78] sm:$0xf] %vm1145, %v1577
  %1642 = vst.msk [vmem:[%s9 + $0x7c] sm:$0xf] %vm1145, %v1578
  // Predicated region
  $region30: #{afgsa_forward.2} parent=0 // pred_check
    _
  $region31: #{afgsa_forward.2} parent=0 // pred_check_branch
    %1644 = sbr.rel (0) target = $region33
  $region32: #{afgsa_forward.2} parent=0 // pred_region
    _
  $region33: #{afgsa_forward.2} parent=0 // pred_fallthru
    _
  // Predicated region
  $region34: #{afgsa_forward.2} parent=0 // pred_check
    _
  $region35: #{afgsa_forward.2} parent=0 // pred_check_branch
    %1646 = sbr.rel (0) target = $region37
  $region36: #{afgsa_forward.2} parent=0 // pred_region
    _
  $region37: #{afgsa_forward.2} parent=0 // pred_fallthru
    _
  // Predicated region
  $region38: #{afgsa_forward.2} parent=0 // pred_check
    _
  $region39: #{afgsa_forward.2} parent=0 // pred_check_branch
    %1648 = sbr.rel (0) target = $region41
  $region40: #{afgsa_forward.2} parent=0 // pred_region
    _
  $region41: #{afgsa_forward.2} parent=0 // pred_fallthru
    _
  // Predicated region
  $region42: #{afgsa_forward.2} parent=0 // pred_check
    _
  $region43: #{afgsa_forward.2} parent=0 // pred_check_branch
    %1650 = sbr.rel (0) target = $region45
  $region44: #{afgsa_forward.2} parent=0 // pred_region
    _
  $region45: #{afgsa_forward.2} parent=0 // pred_fallthru
    _
  // Predicated region
  $region46: #{afgsa_forward.2} parent=0 // pred_check
    _
  $region47: #{afgsa_forward.2} parent=0 // pred_check_branch
    %1652 = sbr.rel (0) target = $region49
  $region48: #{afgsa_forward.2} parent=0 // pred_region
    _
  $region49: #{afgsa_forward.2} parent=0 // pred_fallthru
    _
  // Predicated region
  $region50: #{afgsa_forward.2} parent=0 // pred_check
    _
  $region51: #{afgsa_forward.2} parent=0 // pred_check_branch
    %1654 = sbr.rel (0) target = $region53
  $region52: #{afgsa_forward.2} parent=0 // pred_region
    _
  $region53: #{afgsa_forward.2} parent=0 // pred_fallthru
    _

// kernel: afgsa_forward.3
$region0: #{afgsa_forward.3}
  #allocation0 [shape = 'u32[]', space=smem, size = 0x4, offset = 0x4, fixed_abs, tag = 'smem constant byte address 0x4 - core index']
  #allocation1 [shape = 'u32[144,128]{1,0:T(1,128)}', space=vmem, size = 0x12000, scoped, tag = 'internal scratch']
  %s0 = inlined_call_operand.vmem [shape: bf16[8,25,32], index: 0, kind: input, shape index: {}]
  %s1 = inlined_call_operand.vmem [shape: bf16[8,128,32], index: 1, kind: input, shape index: {}]
  %s2 = inlined_call_operand.vmem [shape: bf16[8,128,32], index: 2, kind: input, shape index: {}]
  %s3 = inlined_call_operand.vmem [shape: bf16[128,32], index: 3, kind: input, shape index: {}]
  %s4 = inlined_call_operand.vmem [shape: bf16[8,25,32], index: 4, kind: output, shape index: {}]
  %s5 = sld [smem:[#allocation0]]
  $region49: #{afgsa_forward.3} parent=0
    _
  %s7 = ssub.s32 1, %s5
  %s8 = scalar_select 0, %s7, %s5
  loop: start=0, step=1, limit=4
  $region2: #{afgsa_forward.3} parent=0 // loop_pre_header
    _
  $region3: #{afgsa_forward.3} parent=0 // loop_header
    %s10 = sphi 0, %s14
    %p11 = scmp.ge.s32.totalorder %s10, 4
    %s20 = sphi 0, %s22
    %s23 = sphi 0, %s20
    %s24 = sphi 0, %s23
    %s40 = sphi 0, %s24
    %s46 = sphi 0, %s48
    %s49 = sphi 0, %s46
    %s50 = sphi 0, %s49
    %s66 = sphi 0, %s50
    %s72 = sphi 0, %s74
    %s75 = sphi 0, %s72
    %s76 = sphi 0, %s75
    %s92 = sphi 0, %s76
    %s96 = sphi 0, %s96
    %s98 = sphi 0, %s96
    %s99 = sphi 0, %s98
    %s113 = sphi 0, %s99
    %s119 = sphi 0, %s121
    %s122 = sphi 0, %s119
    %s123 = sphi 0, %s122
    %s139 = sphi 0, %s123
  $region4: #{afgsa_forward.3} parent=0 // loop_header_branch
    %13 = sbr.rel (%p11) target = $region8
  $region5: #{afgsa_forward.3} parent=0 // loop_body
    %s15 = ssub.s32 %s10, 1
    %s16 = ssub.s32 %s10, 2
    %s17 = sadd.s32 %s10, 1
    %s18 = ssub.s32 %s10, %s17
    %p19 = scmp.eq.s32.totalorder %s18, 0
    %s21 = sadd.s32 %s20, 1
    %s22 = scalar_select %p19, %s20, %s21
    %p25 = pneg %p19
    %p26 = scmp.eq.s32.totalorder %s10, 1
    %p27 = por %p25, %p26
    %p28 = scmp.ne.s32.totalorder %s20, %s23
    %p29 = scmp.eq.s32.totalorder %s10, 0
    %p30 = por %p28, %p29
    %p31 = scmp.ne.s32.totalorder %s20, %s23
    %p32 = scmp.eq.s32.totalorder %s15, 1
    %p33 = por %p31, %p32
    %p34 = scmp.ne.s32.totalorder %s23, %s24
    %p35 = scmp.eq.s32.totalorder %s15, 0
    %p36 = por %p34, %p35
    %p37 = scmp.ne.s32.totalorder %s23, %s24
    %p38 = scmp.eq.s32.totalorder %s16, 1
    %p39 = por %p37, %p38
    %p41 = scmp.ne.s32.totalorder %s24, %s40
    %p42 = scmp.eq.s32.totalorder %s16, 0
    %p43 = por %p41, %p42
    %s44 = ssub.s32 %s10, %s17
    %p45 = scmp.eq.s32.totalorder %s44, 0
    %s47 = sadd.s32 %s46, 1
    %s48 = scalar_select %p45, %s46, %s47
    %p51 = pneg %p45
    %p52 = scmp.eq.s32.totalorder %s10, 1
    %p53 = por %p51, %p52
    %p54 = scmp.ne.s32.totalorder %s46, %s49
    %p55 = scmp.eq.s32.totalorder %s10, 0
    %p56 = por %p54, %p55
    %p57 = scmp.ne.s32.totalorder %s46, %s49
    %p58 = scmp.eq.s32.totalorder %s15, 1
    %p59 = por %p57, %p58
    %p60 = scmp.ne.s32.totalorder %s49, %s50
    %p61 = scmp.eq.s32.totalorder %s15, 0
    %p62 = por %p60, %p61
    %p63 = scmp.ne.s32.totalorder %s49, %s50
    %p64 = scmp.eq.s32.totalorder %s16, 1
    %p65 = por %p63, %p64
    %p67 = scmp.ne.s32.totalorder %s50, %s66
    %p68 = scmp.eq.s32.totalorder %s16, 0
    %p69 = por %p67, %p68
    %s70 = ssub.s32 %s10, %s17
    %p71 = scmp.eq.s32.totalorder %s70, 0
    %s73 = sadd.s32 %s72, 1
    %s74 = scalar_select %p71, %s72, %s73
    %p77 = pneg %p71
    %p78 = scmp.eq.s32.totalorder %s10, 1
    %p79 = por %p77, %p78
    %p80 = scmp.ne.s32.totalorder %s72, %s75
    %p81 = scmp.eq.s32.totalorder %s10, 0
    %p82 = por %p80, %p81
    %p83 = scmp.ne.s32.totalorder %s72, %s75
    %p84 = scmp.eq.s32.totalorder %s15, 1
    %p85 = por %p83, %p84
    %p86 = scmp.ne.s32.totalorder %s75, %s76
    %p87 = scmp.eq.s32.totalorder %s15, 0
    %p88 = por %p86, %p87
    %p89 = scmp.ne.s32.totalorder %s75, %s76
    %p90 = scmp.eq.s32.totalorder %s16, 1
    %p91 = por %p89, %p90
    %p93 = scmp.ne.s32.totalorder %s76, %s92
    %p94 = scmp.eq.s32.totalorder %s16, 0
    %p95 = por %p93, %p94
    %s97 = sadd.s32 %s96, 1
    %p100 = scmp.eq.s32.totalorder %s10, 1
    %p101 = scmp.ne.s32.totalorder %s96, %s98
    %p102 = scmp.eq.s32.totalorder %s10, 0
    %p103 = por %p101, %p102
    %p104 = scmp.ne.s32.totalorder %s96, %s98
    %p105 = scmp.eq.s32.totalorder %s15, 1
    %p106 = por %p104, %p105
    %p107 = scmp.ne.s32.totalorder %s98, %s99
    %p108 = scmp.eq.s32.totalorder %s15, 0
    %p109 = por %p107, %p108
    %p110 = scmp.ne.s32.totalorder %s98, %s99
    %p111 = scmp.eq.s32.totalorder %s16, 1
    %p112 = por %p110, %p111
    %p114 = scmp.ne.s32.totalorder %s99, %s113
    %p115 = scmp.eq.s32.totalorder %s16, 0
    %p116 = por %p114, %p115
    %s117 = ssub.s32 %s10, %s17
    %p118 = scmp.eq.s32.totalorder %s117, 0
    %s120 = sadd.s32 %s119, 1
    %s121 = scalar_select %p118, %s119, %s120
    %p124 = pneg %p118
    %p125 = scmp.eq.s32.totalorder %s10, 1
    %p126 = por %p124, %p125
    %p127 = scmp.ne.s32.totalorder %s119, %s122
    %p128 = scmp.eq.s32.totalorder %s10, 0
    %p129 = por %p127, %p128
    %p130 = scmp.ne.s32.totalorder %s119, %s122
    %p131 = scmp.eq.s32.totalorder %s15, 1
    %p132 = por %p130, %p131
    %p133 = scmp.ne.s32.totalorder %s122, %s123
    %p134 = scmp.eq.s32.totalorder %s15, 0
    %p135 = por %p133, %p134
    %p136 = scmp.ne.s32.totalorder %s122, %s123
    %p137 = scmp.eq.s32.totalorder %s16, 1
    %p138 = por %p136, %p137
    %p140 = scmp.ne.s32.totalorder %s123, %s139
    %p141 = scmp.eq.s32.totalorder %s16, 0
    %p142 = por %p140, %p141
    %p143 = scmp.le.s32.totalorder 1, %s10
    %p144 = scmp.lt.s32.totalorder %s10, 3
    %p145 = pnand %p143, %p144
    %p146 = pneg %p145
    // Predicated region
    $region9: #{afgsa_forward.3} parent=5 // pred_check
      _
    $region10: #{afgsa_forward.3} parent=5 // pred_check_branch
      %148 = sbr.rel (%p145) target = $region12
    $region11: #{afgsa_forward.3} parent=5 // pred_region
      %s149 = ssub.s32 %s10, 1
      // Predicated region
      $region13: #{afgsa_forward.3} parent=11 // pred_check
        %p150 = pneg %p109
      $region14: #{afgsa_forward.3} parent=11 // pred_check_branch
        %152 = sbr.rel (%p150) target = $region16
      $region15: #{afgsa_forward.3} parent=11 // pred_region
        _
      $region16: #{afgsa_forward.3} parent=11 // pred_fallthru
        _
    $region12: #{afgsa_forward.3} parent=5 // pred_fallthru
      _
    %p153 = scmp.lt.s32.totalorder %s10, 2
    // Predicated region
    $region17: #{afgsa_forward.3} parent=5 // pred_check
      %p154 = pneg %p153
    $region18: #{afgsa_forward.3} parent=5 // pred_check_branch
      %156 = sbr.rel (%p154) target = $region20
    $region19: #{afgsa_forward.3} parent=5 // pred_region
      // Predicated region
      $region21: #{afgsa_forward.3} parent=19 // pred_check
        %p157 = pneg %p30
      $region22: #{afgsa_forward.3} parent=19 // pred_check_branch
        %159 = sbr.rel (%p157) target = $region24
      $region23: #{afgsa_forward.3} parent=19 // pred_region
        %s160 = smul.u32 4, %s10
        %p161 = scmp.lt.s32.totalorder %s160, 7
        %s162 = scalar_select %p161, %s160, 7
        %s163 = smul.addr %s162, 4
        %s164 = smul.addr %s163, 4
        %s165 = scalar_lea.vmem %s0, %s164
        %s166 = smul.u32 4, %s10
      $region24: #{afgsa_forward.3} parent=19 // pred_fallthru
        _
      // Predicated region
      $region25: #{afgsa_forward.3} parent=19 // pred_check
        %p167 = pneg %p56
      $region26: #{afgsa_forward.3} parent=19 // pred_check_branch
        %169 = sbr.rel (%p167) target = $region28
      $region27: #{afgsa_forward.3} parent=19 // pred_region
        %s170 = smul.u32 4, %s10
        %p171 = scmp.lt.s32.totalorder %s170, 7
        %s172 = scalar_select %p171, %s170, 7
        %s173 = smul.addr %s172, 16
        %s174 = smul.addr %s173, 4
        %s175 = scalar_lea.vmem %s1, %s174
        %s176 = smul.u32 4, %s10
      $region28: #{afgsa_forward.3} parent=19 // pred_fallthru
        _
      // Predicated region
      $region29: #{afgsa_forward.3} parent=19 // pred_check
        %p177 = pneg %p82
      $region30: #{afgsa_forward.3} parent=19 // pred_check_branch
        %179 = sbr.rel (%p177) target = $region32
      $region31: #{afgsa_forward.3} parent=19 // pred_region
        %s180 = smul.u32 4, %s10
        %p181 = scmp.lt.s32.totalorder %s180, 7
        %s182 = scalar_select %p181, %s180, 7
        %s183 = smul.addr %s182, 16
        %s184 = smul.addr %s183, 4
        %s185 = scalar_lea.vmem %s2, %s184
        %s186 = smul.u32 4, %s10
      $region32: #{afgsa_forward.3} parent=19 // pred_fallthru
        _
    $region20: #{afgsa_forward.3} parent=5 // pred_fallthru
      _
    %p187 = scmp.le.s32.totalorder 1, %s10
    %p188 = scmp.lt.s32.totalorder %s10, 3
    %p189 = pnand %p187, %p188
    %p190 = pneg %p189
    // Predicated region
    $region33: #{afgsa_forward.3} parent=5 // pred_check
      _
    $region34: #{afgsa_forward.3} parent=5 // pred_check_branch
      %192 = sbr.rel (%p189) target = $region36
    $region35: #{afgsa_forward.3} parent=5 // pred_region
      %s193 = ssub.s32 %s10, 1
      %s194 = smul.u32 4, %s15
      %p195 = scmp.lt.s32.totalorder %s194, 7
      %s196 = scalar_select %p195, %s194, 7
      %s197 = smul.addr %s196, 4
      %s198 = smul.addr %s197, 4
      %s199 = scalar_lea.vmem %s0, %s198
      %p200 = pneg %p36
      %p201 = pneg %p33
      %s202 = smul.u32 4, %s15
      %p203 = scmp.lt.s32.totalorder %s202, 7
      %s204 = scalar_select %p203, %s202, 7
      %s205 = smul.addr %s204, 16
      %s206 = smul.addr %s205, 4
      %s207 = scalar_lea.vmem %s1, %s206
      %p208 = pneg %p62
      %p209 = pneg %p59
      %s210 = smul.u32 4, %s15
      %p211 = scmp.lt.s32.totalorder %s210, 7
      %s212 = scalar_select %p211, %s210, 7
      %s213 = smul.addr %s212, 16
      %s214 = smul.addr %s213, 4
      %s215 = scalar_lea.vmem %s2, %s214
      %p216 = pneg %p88
      %p217 = pneg %p85
      %p218 = pneg %p109
      %p219 = pneg %p106
      %p220 = pneg %p135
      %p221 = pneg %p132
      %s222 = smul.u32 4, %s15
      %p223 = scmp.lt.s32.totalorder %s222, 7
      %s224 = scalar_select %p223, %s222, 7
      %s225 = smul.addr %s224, 4
      %s226 = smul.addr %s225, 4
      %s227 = scalar_lea.vmem %s4, %s226
      %s228 = smul.u32 4, %s15
      %p229 = scmp.lt.s32.totalorder %s228, 7
      %s230 = scalar_select %p229, %s228, 7
      %s231 = smul.addr %s230, 4
      %s232 = smul.addr %s231, 4
      %s233 = scalar_lea.vmem %s0, %s232
      %s234 = smul.u32 4, %s15
      %s235 = smul.u32 4, %s15
      %p236 = scmp.lt.s32.totalorder %s235, 7
      %s237 = scalar_select %p236, %s235, 7
      %s238 = smul.addr %s237, 16
      %s239 = smul.addr %s238, 4
      %s240 = scalar_lea.vmem %s1, %s239
      %s241 = smul.u32 4, %s15
      %s242 = smul.u32 4, %s15
      %p243 = scmp.lt.s32.totalorder %s242, 7
      %s244 = scalar_select %p243, %s242, 7
      %s245 = smul.addr %s244, 16
      %s246 = smul.addr %s245, 4
      %s247 = scalar_lea.vmem %s2, %s246
      %s248 = smul.u32 4, %s15
      %s249 = smul.u32 4, %s15
      %p250 = scmp.lt.s32.totalorder %s249, 7
      %s251 = scalar_select %p250, %s249, 7
      %s252 = smul.addr %s251, 4
      %s253 = smul.addr %s252, 4
      %s254 = scalar_lea.vmem %s4, %s253
      %s255 = smul.u32 4, %s15
      %v257 = vld [vmem:[%s233] sm:$0xf]
      %v258 = vld [vmem:[%s233 + $0x4] sm:$0xf]
      %v259 = vld [vmem:[%s233 + $0x8] sm:$0xf]
      %v260 = vld [vmem:[%s233 + $0xc] sm:$0x1]
      %v261 = vld [vmem:[%s233 + $0x10] sm:$0xf]
      %v262 = vld [vmem:[%s233 + $0x14] sm:$0xf]
      %v263 = vld [vmem:[%s233 + $0x18] sm:$0xf]
      %v264 = vld [vmem:[%s233 + $0x1c] sm:$0x1]
      %v265 = vld [vmem:[%s233 + $0x20] sm:$0xf]
      %v266 = vld [vmem:[%s233 + $0x24] sm:$0xf]
      %v267 = vld [vmem:[%s233 + $0x28] sm:$0xf]
      %v268 = vld [vmem:[%s233 + $0x2c] sm:$0x1]
      %v269 = vld [vmem:[%s233 + $0x30] sm:$0xf]
      %v270 = vld [vmem:[%s233 + $0x34] sm:$0xf]
      %v271 = vld [vmem:[%s233 + $0x38] sm:$0xf]
      %v272 = vld [vmem:[%s233 + $0x3c] sm:$0x1]
      %v273 = vld [vmem:[%s240] sm:$0xf]
      %v274 = vld [vmem:[%s240 + $0x4] sm:$0xf]
      %v275 = vld [vmem:[%s240 + $0x8] sm:$0xf]
      %v276 = vld [vmem:[%s240 + $0xc] sm:$0xf]
      %v277 = vld [vmem:[%s240 + $0x10] sm:$0xf]
      %v278 = vld [vmem:[%s240 + $0x14] sm:$0xf]
      %v279 = vld [vmem:[%s240 + $0x18] sm:$0xf]
      %v280 = vld [vmem:[%s240 + $0x1c] sm:$0xf]
      %v281 = vld [vmem:[%s240 + $0x20] sm:$0xf]
      %v282 = vld [vmem:[%s240 + $0x24] sm:$0xf]
      %v283 = vld [vmem:[%s240 + $0x28] sm:$0xf]
      %v284 = vld [vmem:[%s240 + $0x2c] sm:$0xf]
      %v285 = vld [vmem:[%s240 + $0x30] sm:$0xf]
      %v286 = vld [vmem:[%s240 + $0x34] sm:$0xf]
      %v287 = vld [vmem:[%s240 + $0x38] sm:$0xf]
      %v288 = vld [vmem:[%s240 + $0x3c] sm:$0xf]
      %v289 = vld [vmem:[%s240 + $0x40] sm:$0xf]
      %v290 = vld [vmem:[%s240 + $0x44] sm:$0xf]
      %v291 = vld [vmem:[%s240 + $0x48] sm:$0xf]
      %v292 = vld [vmem:[%s240 + $0x4c] sm:$0xf]
      %v293 = vld [vmem:[%s240 + $0x50] sm:$0xf]
      %v294 = vld [vmem:[%s240 + $0x54] sm:$0xf]
      %v295 = vld [vmem:[%s240 + $0x58] sm:$0xf]
      %v296 = vld [vmem:[%s240 + $0x5c] sm:$0xf]
      %v297 = vld [vmem:[%s240 + $0x60] sm:$0xf]
      %v298 = vld [vmem:[%s240 + $0x64] sm:$0xf]
      %v299 = vld [vmem:[%s240 + $0x68] sm:$0xf]
      %v300 = vld [vmem:[%s240 + $0x6c] sm:$0xf]
      %v301 = vld [vmem:[%s240 + $0x70] sm:$0xf]
      %v302 = vld [vmem:[%s240 + $0x74] sm:$0xf]
      %v303 = vld [vmem:[%s240 + $0x78] sm:$0xf]
      %v304 = vld [vmem:[%s240 + $0x7c] sm:$0xf]
      %v305 = vld [vmem:[%s240 + $0x80] sm:$0xf]
      %v306 = vld [vmem:[%s240 + $0x84] sm:$0xf]
      %v307 = vld [vmem:[%s240 + $0x88] sm:$0xf]
      %v308 = vld [vmem:[%s240 + $0x8c] sm:$0xf]
      %v309 = vld [vmem:[%s240 + $0x90] sm:$0xf]
      %v310 = vld [vmem:[%s240 + $0x94] sm:$0xf]
      %v311 = vld [vmem:[%s240 + $0x98] sm:$0xf]
      %v312 = vld [vmem:[%s240 + $0x9c] sm:$0xf]
      %v313 = vld [vmem:[%s240 + $0xa0] sm:$0xf]
      %v314 = vld [vmem:[%s240 + $0xa4] sm:$0xf]
      %v315 = vld [vmem:[%s240 + $0xa8] sm:$0xf]
      %v316 = vld [vmem:[%s240 + $0xac] sm:$0xf]
      %v317 = vld [vmem:[%s240 + $0xb0] sm:$0xf]
      %v318 = vld [vmem:[%s240 + $0xb4] sm:$0xf]
      %v319 = vld [vmem:[%s240 + $0xb8] sm:$0xf]
      %v320 = vld [vmem:[%s240 + $0xbc] sm:$0xf]
      %v321 = vld [vmem:[%s240 + $0xc0] sm:$0xf]
      %v322 = vld [vmem:[%s240 + $0xc4] sm:$0xf]
      %v323 = vld [vmem:[%s240 + $0xc8] sm:$0xf]
      %v324 = vld [vmem:[%s240 + $0xcc] sm:$0xf]
      %v325 = vld [vmem:[%s240 + $0xd0] sm:$0xf]
      %v326 = vld [vmem:[%s240 + $0xd4] sm:$0xf]
      %v327 = vld [vmem:[%s240 + $0xd8] sm:$0xf]
      %v328 = vld [vmem:[%s240 + $0xdc] sm:$0xf]
      %v329 = vld [vmem:[%s240 + $0xe0] sm:$0xf]
      %v330 = vld [vmem:[%s240 + $0xe4] sm:$0xf]
      %v331 = vld [vmem:[%s240 + $0xe8] sm:$0xf]
      %v332 = vld [vmem:[%s240 + $0xec] sm:$0xf]
      %v333 = vld [vmem:[%s240 + $0xf0] sm:$0xf]
      %v334 = vld [vmem:[%s240 + $0xf4] sm:$0xf]
      %v335 = vld [vmem:[%s240 + $0xf8] sm:$0xf]
      %v336 = vld [vmem:[%s240 + $0xfc] sm:$0xf]
      %v337 = vld [vmem:[%s3] sm:$0xf]
      %v338 = vld [vmem:[%s3 + $0x4] sm:$0xf]
      %v339 = vld [vmem:[%s3 + $0x8] sm:$0xf]
      %v340 = vld [vmem:[%s3 + $0xc] sm:$0xf]
      %v341 = vld [vmem:[%s3 + $0x10] sm:$0xf]
      %v342 = vld [vmem:[%s3 + $0x14] sm:$0xf]
      %v343 = vld [vmem:[%s3 + $0x18] sm:$0xf]
      %v344 = vld [vmem:[%s3 + $0x1c] sm:$0xf]
      %v345 = vld [vmem:[%s3 + $0x20] sm:$0xf]
      %v346 = vld [vmem:[%s3 + $0x24] sm:$0xf]
      %v347 = vld [vmem:[%s3 + $0x28] sm:$0xf]
      %v348 = vld [vmem:[%s3 + $0x2c] sm:$0xf]
      %v349 = vld [vmem:[%s3 + $0x30] sm:$0xf]
      %v350 = vld [vmem:[%s3 + $0x34] sm:$0xf]
      %v351 = vld [vmem:[%s3 + $0x38] sm:$0xf]
      %v352 = vld [vmem:[%s3 + $0x3c] sm:$0xf]
      %v353 = vadd.bf16 %v273, %v337
      %v354 = vadd.bf16 %v274, %v338
      %v355 = vadd.bf16 %v275, %v339
      %v356 = vadd.bf16 %v276, %v340
      %v357 = vadd.bf16 %v277, %v341
      %v358 = vadd.bf16 %v278, %v342
      %v359 = vadd.bf16 %v279, %v343
      %v360 = vadd.bf16 %v280, %v344
      %v361 = vadd.bf16 %v281, %v345
      %v362 = vadd.bf16 %v282, %v346
      %v363 = vadd.bf16 %v283, %v347
      %v364 = vadd.bf16 %v284, %v348
      %v365 = vadd.bf16 %v285, %v349
      %v366 = vadd.bf16 %v286, %v350
      %v367 = vadd.bf16 %v287, %v351
      %v368 = vadd.bf16 %v288, %v352
      %v369 = vadd.bf16 %v289, %v337
      %v370 = vadd.bf16 %v290, %v338
      %v371 = vadd.bf16 %v291, %v339
      %v372 = vadd.bf16 %v292, %v340
      %v373 = vadd.bf16 %v293, %v341
      %v374 = vadd.bf16 %v294, %v342
      %v375 = vadd.bf16 %v295, %v343
      %v376 = vadd.bf16 %v296, %v344
      %v377 = vadd.bf16 %v297, %v345
      %v378 = vadd.bf16 %v298, %v346
      %v379 = vadd.bf16 %v299, %v347
      %v380 = vadd.bf16 %v300, %v348
      %v381 = vadd.bf16 %v301, %v349
      %v382 = vadd.bf16 %v302, %v350
      %v383 = vadd.bf16 %v303, %v351
      %v384 = vadd.bf16 %v304, %v352
      %v385 = vadd.bf16 %v305, %v337
      %v386 = vadd.bf16 %v306, %v338
      %v387 = vadd.bf16 %v307, %v339
      %v388 = vadd.bf16 %v308, %v340
      %v389 = vadd.bf16 %v309, %v341
      %v390 = vadd.bf16 %v310, %v342
      %v391 = vadd.bf16 %v311, %v343
      %v392 = vadd.bf16 %v312, %v344
      %v393 = vadd.bf16 %v313, %v345
      %v394 = vadd.bf16 %v314, %v346
      %v395 = vadd.bf16 %v315, %v347
      %v396 = vadd.bf16 %v316, %v348
      %v397 = vadd.bf16 %v317, %v349
      %v398 = vadd.bf16 %v318, %v350
      %v399 = vadd.bf16 %v319, %v351
      %v400 = vadd.bf16 %v320, %v352
      %v401 = vadd.bf16 %v321, %v337
      %v402 = vadd.bf16 %v322, %v338
      %v403 = vadd.bf16 %v323, %v339
      %v404 = vadd.bf16 %v324, %v340
      %v405 = vadd.bf16 %v325, %v341
      %v406 = vadd.bf16 %v326, %v342
      %v407 = vadd.bf16 %v327, %v343
      %v408 = vadd.bf16 %v328, %v344
      %v409 = vadd.bf16 %v329, %v345
      %v410 = vadd.bf16 %v330, %v346
      %v411 = vadd.bf16 %v331, %v347
      %v412 = vadd.bf16 %v332, %v348
      %v413 = vadd.bf16 %v333, %v349
      %v414 = vadd.bf16 %v334, %v350
      %v415 = vadd.bf16 %v335, %v351
      %v416 = vadd.bf16 %v336, %v352
      %v417 = vld [vmem:[%s247] sm:$0xf]
      %v418 = vld [vmem:[%s247 + $0x4] sm:$0xf]
      %v419 = vld [vmem:[%s247 + $0x8] sm:$0xf]
      %v420 = vld [vmem:[%s247 + $0xc] sm:$0xf]
      %v421 = vld [vmem:[%s247 + $0x10] sm:$0xf]
      %v422 = vld [vmem:[%s247 + $0x14] sm:$0xf]
      %v423 = vld [vmem:[%s247 + $0x18] sm:$0xf]
      %v424 = vld [vmem:[%s247 + $0x1c] sm:$0xf]
      %v425 = vld [vmem:[%s247 + $0x20] sm:$0xf]
      %v426 = vld [vmem:[%s247 + $0x24] sm:$0xf]
      %v427 = vld [vmem:[%s247 + $0x28] sm:$0xf]
      %v428 = vld [vmem:[%s247 + $0x2c] sm:$0xf]
      %v429 = vld [vmem:[%s247 + $0x30] sm:$0xf]
      %v430 = vld [vmem:[%s247 + $0x34] sm:$0xf]
      %v431 = vld [vmem:[%s247 + $0x38] sm:$0xf]
      %v432 = vld [vmem:[%s247 + $0x3c] sm:$0xf]
      %v433 = vld [vmem:[%s247 + $0x40] sm:$0xf]
      %v434 = vld [vmem:[%s247 + $0x44] sm:$0xf]
      %v435 = vld [vmem:[%s247 + $0x48] sm:$0xf]
      %v436 = vld [vmem:[%s247 + $0x4c] sm:$0xf]
      %v437 = vld [vmem:[%s247 + $0x50] sm:$0xf]
      %v438 = vld [vmem:[%s247 + $0x54] sm:$0xf]
      %v439 = vld [vmem:[%s247 + $0x58] sm:$0xf]
      %v440 = vld [vmem:[%s247 + $0x5c] sm:$0xf]
      %v441 = vld [vmem:[%s247 + $0x60] sm:$0xf]
      %v442 = vld [vmem:[%s247 + $0x64] sm:$0xf]
      %v443 = vld [vmem:[%s247 + $0x68] sm:$0xf]
      %v444 = vld [vmem:[%s247 + $0x6c] sm:$0xf]
      %v445 = vld [vmem:[%s247 + $0x70] sm:$0xf]
      %v446 = vld [vmem:[%s247 + $0x74] sm:$0xf]
      %v447 = vld [vmem:[%s247 + $0x78] sm:$0xf]
      %v448 = vld [vmem:[%s247 + $0x7c] sm:$0xf]
      %v449 = vld [vmem:[%s247 + $0x80] sm:$0xf]
      %v450 = vld [vmem:[%s247 + $0x84] sm:$0xf]
      %v451 = vld [vmem:[%s247 + $0x88] sm:$0xf]
      %v452 = vld [vmem:[%s247 + $0x8c] sm:$0xf]
      %v453 = vld [vmem:[%s247 + $0x90] sm:$0xf]
      %v454 = vld [vmem:[%s247 + $0x94] sm:$0xf]
      %v455 = vld [vmem:[%s247 + $0x98] sm:$0xf]
      %v456 = vld [vmem:[%s247 + $0x9c] sm:$0xf]
      %v457 = vld [vmem:[%s247 + $0xa0] sm:$0xf]
      %v458 = vld [vmem:[%s247 + $0xa4] sm:$0xf]
      %v459 = vld [vmem:[%s247 + $0xa8] sm:$0xf]
      %v460 = vld [vmem:[%s247 + $0xac] sm:$0xf]
      %v461 = vld [vmem:[%s247 + $0xb0] sm:$0xf]
      %v462 = vld [vmem:[%s247 + $0xb4] sm:$0xf]
      %v463 = vld [vmem:[%s247 + $0xb8] sm:$0xf]
      %v464 = vld [vmem:[%s247 + $0xbc] sm:$0xf]
      %v465 = vld [vmem:[%s247 + $0xc0] sm:$0xf]
      %v466 = vld [vmem:[%s247 + $0xc4] sm:$0xf]
      %v467 = vld [vmem:[%s247 + $0xc8] sm:$0xf]
      %v468 = vld [vmem:[%s247 + $0xcc] sm:$0xf]
      %v469 = vld [vmem:[%s247 + $0xd0] sm:$0xf]
      %v470 = vld [vmem:[%s247 + $0xd4] sm:$0xf]
      %v471 = vld [vmem:[%s247 + $0xd8] sm:$0xf]
      %v472 = vld [vmem:[%s247 + $0xdc] sm:$0xf]
      %v473 = vld [vmem:[%s247 + $0xe0] sm:$0xf]
      %v474 = vld [vmem:[%s247 + $0xe4] sm:$0xf]
      %v475 = vld [vmem:[%s247 + $0xe8] sm:$0xf]
      %v476 = vld [vmem:[%s247 + $0xec] sm:$0xf]
      %v477 = vld [vmem:[%s247 + $0xf0] sm:$0xf]
      %v478 = vld [vmem:[%s247 + $0xf4] sm:$0xf]
      %v479 = vld [vmem:[%s247 + $0xf8] sm:$0xf]
      %v480 = vld [vmem:[%s247 + $0xfc] sm:$0xf]
      %v481 = vlaneseq
      %v482 = vand.u32 %v481, 127
      %vm483 = vcmp.lt.s32.totalorder %v482, 121
      %v488 = vunpack.c.l.b16 %v257
      %v489 = vunpack.c.l.b16 %v258
      %v490 = vunpack.c.l.b16 %v259
      %v491 = vunpack.c.l.b16 %v260
      %v492 = vpack.c.b16 %v489, %v488
      %v493 = vpack.c.b16 %v491, %v490
      %v510 = vunpack.c.l.b16 %v353
      %v511 = vunpack.c.l.b16 %v354
      %v512 = vunpack.c.l.b16 %v355
      %v513 = vunpack.c.l.b16 %v356
      %v514 = vunpack.c.l.b16 %v357
      %v515 = vunpack.c.l.b16 %v358
      %v516 = vunpack.c.l.b16 %v359
      %v517 = vunpack.c.l.b16 %v360
      %v518 = vunpack.c.l.b16 %v361
      %v519 = vunpack.c.l.b16 %v362
      %v520 = vunpack.c.l.b16 %v363
      %v521 = vunpack.c.l.b16 %v364
      %v522 = vunpack.c.l.b16 %v365
      %v523 = vunpack.c.l.b16 %v366
      %v524 = vunpack.c.l.b16 %v367
      %v525 = vunpack.c.l.b16 %v368
      %v526 = vpack.c.b16 %v511, %v510
      %v527 = vpack.c.b16 %v513, %v512
      %v528 = vpack.c.b16 %v515, %v514
      %v529 = vpack.c.b16 %v517, %v516
      %v530 = vpack.c.b16 %v519, %v518
      %v531 = vpack.c.b16 %v521, %v520
      %v532 = vpack.c.b16 %v523, %v522
      %v533 = vpack.c.b16 %v525, %v524
      %vm534 = vcmask 64512
      %v536 = vsel %vm534, %v492, 0
      %v539 = vsel %vm534, %v493, 0
      %v542 = vsel %vm534, %v526, 0
      %v545 = vsel %vm534, %v527, 0
      %v548 = vsel %vm534, %v528, 0
      %v551 = vsel %vm534, %v529, 0
      %v554 = vsel %vm534, %v530, 0
      %v557 = vsel %vm534, %v531, 0
      %v560 = vsel %vm534, %v532, 0
      %v563 = vsel %vm534, %v533, 0
      %565 = vmatprep.subr.bf16.mxu0 0
      %566 = vmatpush1.bf16.xpose.msra.mxu0 %v563
      %567 = vmatprep.subr.bf16.mxu0 0
      %568 = vmatpush1.bf16.xpose.msra.mxu0 %v560
      %569 = vmatprep.subr.bf16.mxu0 0
      %570 = vmatpush1.bf16.xpose.msra.mxu0 %v557
      %571 = vmatprep.subr.bf16.mxu0 0
      %572 = vmatpush1.bf16.xpose.msra.mxu0 %v554
      %573 = vmatprep.subr.bf16.mxu0 0
      %574 = vmatpush1.bf16.xpose.msra.mxu0 %v551
      %575 = vmatprep.subr.bf16.mxu0 0
      %576 = vmatpush1.bf16.xpose.msra.mxu0 %v548
      %577 = vmatprep.subr.bf16.mxu0 0
      %578 = vmatpush1.bf16.xpose.msra.mxu0 %v545
      %579 = vmatprep.subr.bf16.mxu0 0
      %580 = vmatpush1.bf16.xpose.msra.mxu0 %v542
      %581 = vmatprep.subr.bf16.mxu0 0
      %582 = vmatpush2.bf16.xpose.msra.mxu0 0
      %583 = vmatprep.subr.bf16.mxu0 0
      %584 = vmatpush2.bf16.xpose.msra.mxu0 0
      %585 = vmatprep.subr.bf16.mxu0 0
      %586 = vmatpush2.bf16.xpose.msra.mxu0 0
      %587 = vmatprep.subr.bf16.mxu0 0
      %588 = vmatpush2.bf16.xpose.msra.mxu0 0
      %589 = vmatprep.subr.bf16.mxu0 0
      %590 = vmatpush2.bf16.xpose.msra.mxu0 0
      %591 = vmatprep.subr.bf16.mxu0 0
      %592 = vmatpush2.bf16.xpose.msra.mxu0 0
      %593 = vmatprep.subr.bf16.mxu0 0
      %594 = vmatpush2.bf16.xpose.msra.mxu0 0
      %595 = vmatprep.subr.bf16.mxu0 0
      %596 = vmatpush2.bf16.xpose.msra.mxu0 0
      %597 = vmatprep.mubr.bf16.mxu0 0
      %598 = vmatmul.mubr.bf16.gmra.mxu0 %v536
      %v599 = vpop.f32.mrf.mxu0
      %v600 = vadd.f32 0.0, %v599
      %v601 = vpop.f32.mrf.mxu0
      %v602 = vpop.f32.mrf.mxu0
      %v603 = vadd.f32 0.0, %v602
      %v604 = vpop.f32.mrf.mxu0
      %605 = vmatprep.mubr.bf16.mxu0 0
      %606 = vmatmul.mubr.bf16.gmra.mxu0 %v539
      %v607 = vpop.f32.mrf.mxu0
      %v608 = vadd.f32 0.0, %v607
      %v609 = vpop.f32.mrf.mxu0
      %v610 = vpop.f32.mrf.mxu0
      %v611 = vadd.f32 0.0, %v610
      %v612 = vpop.f32.mrf.mxu0
      %613 = vdwg.mxu0
      %v618 = vunpack.c.l.b16 %v261
      %v619 = vunpack.c.l.b16 %v262
      %v620 = vunpack.c.l.b16 %v263
      %v621 = vunpack.c.l.b16 %v264
      %v622 = vpack.c.b16 %v619, %v618
      %v623 = vpack.c.b16 %v621, %v620
      %v640 = vunpack.c.l.b16 %v369
      %v641 = vunpack.c.l.b16 %v370
      %v642 = vunpack.c.l.b16 %v371
      %v643 = vunpack.c.l.b16 %v372
      %v644 = vunpack.c.l.b16 %v373
      %v645 = vunpack.c.l.b16 %v374
      %v646 = vunpack.c.l.b16 %v375
      %v647 = vunpack.c.l.b16 %v376
      %v648 = vunpack.c.l.b16 %v377
      %v649 = vunpack.c.l.b16 %v378
      %v650 = vunpack.c.l.b16 %v379
      %v651 = vunpack.c.l.b16 %v380
      %v652 = vunpack.c.l.b16 %v381
      %v653 = vunpack.c.l.b16 %v382
      %v654 = vunpack.c.l.b16 %v383
      %v655 = vunpack.c.l.b16 %v384
      %v656 = vpack.c.b16 %v641, %v640
      %v657 = vpack.c.b16 %v643, %v642
      %v658 = vpack.c.b16 %v645, %v644
      %v659 = vpack.c.b16 %v647, %v646
      %v660 = vpack.c.b16 %v649, %v648
      %v661 = vpack.c.b16 %v651, %v650
      %v662 = vpack.c.b16 %v653, %v652
      %v663 = vpack.c.b16 %v655, %v654
      %v665 = vsel %vm534, %v622, 0
      %v668 = vsel %vm534, %v623, 0
      %v671 = vsel %vm534, %v656, 0
      %v674 = vsel %vm534, %v657, 0
      %v677 = vsel %vm534, %v658, 0
      %v680 = vsel %vm534, %v659, 0
      %v683 = vsel %vm534, %v660, 0
      %v686 = vsel %vm534, %v661, 0
      %v689 = vsel %vm534, %v662, 0
      %v692 = vsel %vm534, %v663, 0
      %694 = vmatprep.subr.bf16.mxu0 0
      %695 = vmatpush1.bf16.xpose.msra.mxu0 %v692
      %696 = vmatprep.subr.bf16.mxu0 0
      %697 = vmatpush1.bf16.xpose.msra.mxu0 %v689
      %698 = vmatprep.subr.bf16.mxu0 0
      %699 = vmatpush1.bf16.xpose.msra.mxu0 %v686
      %700 = vmatprep.subr.bf16.mxu0 0
      %701 = vmatpush1.bf16.xpose.msra.mxu0 %v683
      %702 = vmatprep.subr.bf16.mxu0 0
      %703 = vmatpush1.bf16.xpose.msra.mxu0 %v680
      %704 = vmatprep.subr.bf16.mxu0 0
      %705 = vmatpush1.bf16.xpose.msra.mxu0 %v677
      %706 = vmatprep.subr.bf16.mxu0 0
      %707 = vmatpush1.bf16.xpose.msra.mxu0 %v674
      %708 = vmatprep.subr.bf16.mxu0 0
      %709 = vmatpush1.bf16.xpose.msra.mxu0 %v671
      %710 = vmatprep.subr.bf16.mxu0 0
      %711 = vmatpush2.bf16.xpose.msra.mxu0 0
      %712 = vmatprep.subr.bf16.mxu0 0
      %713 = vmatpush2.bf16.xpose.msra.mxu0 0
      %714 = vmatprep.subr.bf16.mxu0 0
      %715 = vmatpush2.bf16.xpose.msra.mxu0 0
      %716 = vmatprep.subr.bf16.mxu0 0
      %717 = vmatpush2.bf16.xpose.msra.mxu0 0
      %718 = vmatprep.subr.bf16.mxu0 0
      %719 = vmatpush2.bf16.xpose.msra.mxu0 0
      %720 = vmatprep.subr.bf16.mxu0 0
      %721 = vmatpush2.bf16.xpose.msra.mxu0 0
      %722 = vmatprep.subr.bf16.mxu0 0
      %723 = vmatpush2.bf16.xpose.msra.mxu0 0
      %724 = vmatprep.subr.bf16.mxu0 0
      %725 = vmatpush2.bf16.xpose.msra.mxu0 0
      %726 = vmatprep.mubr.bf16.mxu0 0
      %727 = vmatmul.mubr.bf16.gmra.mxu0 %v665
      %v728 = vpop.f32.mrf.mxu0
      %v729 = vadd.f32 0.0, %v728
      %v730 = vpop.f32.mrf.mxu0
      %v731 = vpop.f32.mrf.mxu0
      %v732 = vadd.f32 0.0, %v731
      %v733 = vpop.f32.mrf.mxu0
      %734 = vmatprep.mubr.bf16.mxu0 0
      %735 = vmatmul.mubr.bf16.gmra.mxu0 %v668
      %v736 = vpop.f32.mrf.mxu0
      %v737 = vadd.f32 0.0, %v736
      %v738 = vpop.f32.mrf.mxu0
      %v739 = vpop.f32.mrf.mxu0
      %v740 = vadd.f32 0.0, %v739
      %v741 = vpop.f32.mrf.mxu0
      %742 = vdwg.mxu0
      %v747 = vunpack.c.l.b16 %v265
      %v748 = vunpack.c.l.b16 %v266
      %v749 = vunpack.c.l.b16 %v267
      %v750 = vunpack.c.l.b16 %v268
      %v751 = vpack.c.b16 %v748, %v747
      %v752 = vpack.c.b16 %v750, %v749
      %v769 = vunpack.c.l.b16 %v385
      %v770 = vunpack.c.l.b16 %v386
      %v771 = vunpack.c.l.b16 %v387
      %v772 = vunpack.c.l.b16 %v388
      %v773 = vunpack.c.l.b16 %v389
      %v774 = vunpack.c.l.b16 %v390
      %v775 = vunpack.c.l.b16 %v391
      %v776 = vunpack.c.l.b16 %v392
      %v777 = vunpack.c.l.b16 %v393
      %v778 = vunpack.c.l.b16 %v394
      %v779 = vunpack.c.l.b16 %v395
      %v780 = vunpack.c.l.b16 %v396
      %v781 = vunpack.c.l.b16 %v397
      %v782 = vunpack.c.l.b16 %v398
      %v783 = vunpack.c.l.b16 %v399
      %v784 = vunpack.c.l.b16 %v400
      %v785 = vpack.c.b16 %v770, %v769
      %v786 = vpack.c.b16 %v772, %v771
      %v787 = vpack.c.b16 %v774, %v773
      %v788 = vpack.c.b16 %v776, %v775
      %v789 = vpack.c.b16 %v778, %v777
      %v790 = vpack.c.b16 %v780, %v779
      %v791 = vpack.c.b16 %v782, %v781
      %v792 = vpack.c.b16 %v784, %v783
      %v794 = vsel %vm534, %v751, 0
      %v797 = vsel %vm534, %v752, 0
      %v800 = vsel %vm534, %v785, 0
      %v803 = vsel %vm534, %v786, 0
      %v806 = vsel %vm534, %v787, 0
      %v809 = vsel %vm534, %v788, 0
      %v812 = vsel %vm534, %v789, 0
      %v815 = vsel %vm534, %v790, 0
      %v818 = vsel %vm534, %v791, 0
      %v821 = vsel %vm534, %v792, 0
      %823 = vmatprep.subr.bf16.mxu0 0
      %824 = vmatpush1.bf16.xpose.msra.mxu0 %v821
      %825 = vmatprep.subr.bf16.mxu0 0
      %826 = vmatpush1.bf16.xpose.msra.mxu0 %v818
      %827 = vmatprep.subr.bf16.mxu0 0
      %828 = vmatpush1.bf16.xpose.msra.mxu0 %v815
      %829 = vmatprep.subr.bf16.mxu0 0
      %830 = vmatpush1.bf16.xpose.msra.mxu0 %v812
      %831 = vmatprep.subr.bf16.mxu0 0
      %832 = vmatpush1.bf16.xpose.msra.mxu0 %v809
      %833 = vmatprep.subr.bf16.mxu0 0
      %834 = vmatpush1.bf16.xpose.msra.mxu0 %v806
      %835 = vmatprep.subr.bf16.mxu0 0
      %836 = vmatpush1.bf16.xpose.msra.mxu0 %v803
      %837 = vmatprep.subr.bf16.mxu0 0
      %838 = vmatpush1.bf16.xpose.msra.mxu0 %v800
      %839 = vmatprep.subr.bf16.mxu0 0
      %840 = vmatpush2.bf16.xpose.msra.mxu0 0
      %841 = vmatprep.subr.bf16.mxu0 0
      %842 = vmatpush2.bf16.xpose.msra.mxu0 0
      %843 = vmatprep.subr.bf16.mxu0 0
      %844 = vmatpush2.bf16.xpose.msra.mxu0 0
      %845 = vmatprep.subr.bf16.mxu0 0
      %846 = vmatpush2.bf16.xpose.msra.mxu0 0
      %847 = vmatprep.subr.bf16.mxu0 0
      %848 = vmatpush2.bf16.xpose.msra.mxu0 0
      %849 = vmatprep.subr.bf16.mxu0 0
      %850 = vmatpush2.bf16.xpose.msra.mxu0 0
      %851 = vmatprep.subr.bf16.mxu0 0
      %852 = vmatpush2.bf16.xpose.msra.mxu0 0
      %853 = vmatprep.subr.bf16.mxu0 0
      %854 = vmatpush2.bf16.xpose.msra.mxu0 0
      %855 = vmatprep.mubr.bf16.mxu0 0
      %856 = vmatmul.mubr.bf16.gmra.mxu0 %v794
      %v857 = vpop.f32.mrf.mxu0
      %v858 = vadd.f32 0.0, %v857
      %v859 = vpop.f32.mrf.mxu0
      %v860 = vpop.f32.mrf.mxu0
      %v861 = vadd.f32 0.0, %v860
      %v862 = vpop.f32.mrf.mxu0
      %863 = vmatprep.mubr.bf16.mxu0 0
      %864 = vmatmul.mubr.bf16.gmra.mxu0 %v797
      %v865 = vpop.f32.mrf.mxu0
      %v866 = vadd.f32 0.0, %v865
      %v867 = vpop.f32.mrf.mxu0
      %v868 = vpop.f32.mrf.mxu0
      %v869 = vadd.f32 0.0, %v868
      %v870 = vpop.f32.mrf.mxu0
      %871 = vdwg.mxu0
      %v876 = vunpack.c.l.b16 %v269
      %v877 = vunpack.c.l.b16 %v270
      %v878 = vunpack.c.l.b16 %v271
      %v879 = vunpack.c.l.b16 %v272
      %v880 = vpack.c.b16 %v877, %v876
      %v881 = vpack.c.b16 %v879, %v878
      %v898 = vunpack.c.l.b16 %v401
      %v899 = vunpack.c.l.b16 %v402
      %v900 = vunpack.c.l.b16 %v403
      %v901 = vunpack.c.l.b16 %v404
      %v902 = vunpack.c.l.b16 %v405
      %v903 = vunpack.c.l.b16 %v406
      %v904 = vunpack.c.l.b16 %v407
      %v905 = vunpack.c.l.b16 %v408
      %v906 = vunpack.c.l.b16 %v409
      %v907 = vunpack.c.l.b16 %v410
      %v908 = vunpack.c.l.b16 %v411
      %v909 = vunpack.c.l.b16 %v412
      %v910 = vunpack.c.l.b16 %v413
      %v911 = vunpack.c.l.b16 %v414
      %v912 = vunpack.c.l.b16 %v415
      %v913 = vunpack.c.l.b16 %v416
      %v914 = vpack.c.b16 %v899, %v898
      %v915 = vpack.c.b16 %v901, %v900
      %v916 = vpack.c.b16 %v903, %v902
      %v917 = vpack.c.b16 %v905, %v904
      %v918 = vpack.c.b16 %v907, %v906
      %v919 = vpack.c.b16 %v909, %v908
      %v920 = vpack.c.b16 %v911, %v910
      %v921 = vpack.c.b16 %v913, %v912
      %v923 = vsel %vm534, %v880, 0
      %v926 = vsel %vm534, %v881, 0
      %v929 = vsel %vm534, %v914, 0
      %v932 = vsel %vm534, %v915, 0
      %v935 = vsel %vm534, %v916, 0
      %v938 = vsel %vm534, %v917, 0
      %v941 = vsel %vm534, %v918, 0
      %v944 = vsel %vm534, %v919, 0
      %v947 = vsel %vm534, %v920, 0
      %v950 = vsel %vm534, %v921, 0
      %952 = vmatprep.subr.bf16.mxu0 0
      %953 = vmatpush1.bf16.xpose.msra.mxu0 %v950
      %954 = vmatprep.subr.bf16.mxu0 0
      %955 = vmatpush1.bf16.xpose.msra.mxu0 %v947
      %956 = vmatprep.subr.bf16.mxu0 0
      %957 = vmatpush1.bf16.xpose.msra.mxu0 %v944
      %958 = vmatprep.subr.bf16.mxu0 0
      %959 = vmatpush1.bf16.xpose.msra.mxu0 %v941
      %960 = vmatprep.subr.bf16.mxu0 0
      %961 = vmatpush1.bf16.xpose.msra.mxu0 %v938
      %962 = vmatprep.subr.bf16.mxu0 0
      %963 = vmatpush1.bf16.xpose.msra.mxu0 %v935
      %964 = vmatprep.subr.bf16.mxu0 0
      %965 = vmatpush1.bf16.xpose.msra.mxu0 %v932
      %966 = vmatprep.subr.bf16.mxu0 0
      %967 = vmatpush1.bf16.xpose.msra.mxu0 %v929
      %968 = vmatprep.subr.bf16.mxu0 0
      %969 = vmatpush2.bf16.xpose.msra.mxu0 0
      %970 = vmatprep.subr.bf16.mxu0 0
      %971 = vmatpush2.bf16.xpose.msra.mxu0 0
      %972 = vmatprep.subr.bf16.mxu0 0
      %973 = vmatpush2.bf16.xpose.msra.mxu0 0
      %974 = vmatprep.subr.bf16.mxu0 0
      %975 = vmatpush2.bf16.xpose.msra.mxu0 0
      %976 = vmatprep.subr.bf16.mxu0 0
      %977 = vmatpush2.bf16.xpose.msra.mxu0 0
      %978 = vmatprep.subr.bf16.mxu0 0
      %979 = vmatpush2.bf16.xpose.msra.mxu0 0
      %980 = vmatprep.subr.bf16.mxu0 0
      %981 = vmatpush2.bf16.xpose.msra.mxu0 0
      %982 = vmatprep.subr.bf16.mxu0 0
      %983 = vmatpush2.bf16.xpose.msra.mxu0 0
      %984 = vmatprep.mubr.bf16.mxu0 0
      %985 = vmatmul.mubr.bf16.gmra.mxu0 %v923
      %v986 = vpop.f32.mrf.mxu0
      %v987 = vadd.f32 0.0, %v986
      %v988 = vpop.f32.mrf.mxu0
      %v989 = vpop.f32.mrf.mxu0
      %v990 = vadd.f32 0.0, %v989
      %v991 = vpop.f32.mrf.mxu0
      %992 = vmatprep.mubr.bf16.mxu0 0
      %993 = vmatmul.mubr.bf16.gmra.mxu0 %v926
      %v994 = vpop.f32.mrf.mxu0
      %v995 = vadd.f32 0.0, %v994
      %v996 = vpop.f32.mrf.mxu0
      %v997 = vpop.f32.mrf.mxu0
      %v998 = vadd.f32 0.0, %v997
      %v999 = vpop.f32.mrf.mxu0
      %1000 = vdwg.mxu0
      %v1001 = vsel %vm483, 1, 0
      %vm1002 = vcmp.eq.s32.totalorder %v1001, 1
      %v1003 = vsel %vm1002, %v600, -1e+30
      %v1004 = vsel %vm1002, %v603, -1e+30
      %v1005 = vsel %vm1002, %v608, -1e+30
      %v1006 = vsel %vm1002, %v611, -1e+30
      %v1007 = vsel %vm1002, %v729, -1e+30
      %v1008 = vsel %vm1002, %v732, -1e+30
      %v1009 = vsel %vm1002, %v737, -1e+30
      %v1010 = vsel %vm1002, %v740, -1e+30
      %v1011 = vsel %vm1002, %v858, -1e+30
      %v1012 = vsel %vm1002, %v861, -1e+30
      %v1013 = vsel %vm1002, %v866, -1e+30
      %v1014 = vsel %vm1002, %v869, -1e+30
      %v1015 = vsel %vm1002, %v987, -1e+30
      %v1016 = vsel %vm1002, %v990, -1e+30
      %v1017 = vsel %vm1002, %v995, -1e+30
      %v1018 = vsel %vm1002, %v998, -1e+30
      %1019 = vmax.xlane.f32.xlu0 %v1003
      %v1020 = vpop.xlane.xlu0 %1019
      %1021 = vmax.xlane.f32.xlu0 %v1004
      %v1022 = vpop.xlane.xlu0 %1021
      %1023 = vmax.xlane.f32.xlu0 %v1005
      %v1024 = vpop.xlane.xlu0 %1023
      %vm1025 = vcmask 1040384
      %v1026 = vsel %vm1025, %v1006, -inf
      %1027 = vmax.xlane.f32.xlu0 %v1026
      %v1028 = vpop.xlane.xlu0 %1027
      %1029 = vmax.xlane.f32.xlu0 %v1007
      %v1030 = vpop.xlane.xlu0 %1029
      %1031 = vmax.xlane.f32.xlu0 %v1008
      %v1032 = vpop.xlane.xlu0 %1031
      %1033 = vmax.xlane.f32.xlu0 %v1009
      %v1034 = vpop.xlane.xlu0 %1033
      %v1035 = vsel %vm1025, %v1010, -inf
      %1036 = vmax.xlane.f32.xlu0 %v1035
      %v1037 = vpop.xlane.xlu0 %1036
      %1038 = vmax.xlane.f32.xlu0 %v1011
      %v1039 = vpop.xlane.xlu0 %1038
      %1040 = vmax.xlane.f32.xlu0 %v1012
      %v1041 = vpop.xlane.xlu0 %1040
      %1042 = vmax.xlane.f32.xlu0 %v1013
      %v1043 = vpop.xlane.xlu0 %1042
      %v1044 = vsel %vm1025, %v1014, -inf
      %1045 = vmax.xlane.f32.xlu0 %v1044
      %v1046 = vpop.xlane.xlu0 %1045
      %1047 = vmax.xlane.f32.xlu0 %v1015
      %v1048 = vpop.xlane.xlu0 %1047
      %1049 = vmax.xlane.f32.xlu0 %v1016
      %v1050 = vpop.xlane.xlu0 %1049
      %1051 = vmax.xlane.f32.xlu0 %v1017
      %v1052 = vpop.xlane.xlu0 %1051
      %v1053 = vsel %vm1025, %v1018, -inf
      %1054 = vmax.xlane.f32.xlu0 %v1053
      %v1055 = vpop.xlane.xlu0 %1054
      %v1056 = vsub.f32 %v1003, %v1020
      %v1057 = vsub.f32 %v1004, %v1022
      %v1058 = vsub.f32 %v1005, %v1024
      %v1059 = vsub.f32 %v1006, %v1028
      %v1060 = vsub.f32 %v1007, %v1030
      %v1061 = vsub.f32 %v1008, %v1032
      %v1062 = vsub.f32 %v1009, %v1034
      %v1063 = vsub.f32 %v1010, %v1037
      %v1064 = vsub.f32 %v1011, %v1039
      %v1065 = vsub.f32 %v1012, %v1041
      %v1066 = vsub.f32 %v1013, %v1043
      %v1067 = vsub.f32 %v1014, %v1046
      %v1068 = vsub.f32 %v1015, %v1048
      %v1069 = vsub.f32 %v1016, %v1050
      %v1070 = vsub.f32 %v1017, %v1052
      %v1071 = vsub.f32 %v1018, %v1055
      %v1072 = vmul.f32 %v1056, 1.442695
      %v1073 = vpow.pop %v1072
      %v1074 = vmul.f32 %v1057, 1.442695
      %v1075 = vpow.pop %v1074
      %v1076 = vmul.f32 %v1058, 1.442695
      %v1077 = vpow.pop %v1076
      %v1078 = vmul.f32 %v1059, 1.442695
      %v1079 = vpow.pop %v1078
      %v1080 = vmul.f32 %v1060, 1.442695
      %v1081 = vpow.pop %v1080
      %v1082 = vmul.f32 %v1061, 1.442695
      %v1083 = vpow.pop %v1082
      %v1084 = vmul.f32 %v1062, 1.442695
      %v1085 = vpow.pop %v1084
      %v1086 = vmul.f32 %v1063, 1.442695
      %v1087 = vpow.pop %v1086
      %v1088 = vmul.f32 %v1064, 1.442695
      %v1089 = vpow.pop %v1088
      %v1090 = vmul.f32 %v1065, 1.442695
      %v1091 = vpow.pop %v1090
      %v1092 = vmul.f32 %v1066, 1.442695
      %v1093 = vpow.pop %v1092
      %v1094 = vmul.f32 %v1067, 1.442695
      %v1095 = vpow.pop %v1094
      %v1096 = vmul.f32 %v1068, 1.442695
      %v1097 = vpow.pop %v1096
      %v1098 = vmul.f32 %v1069, 1.442695
      %v1099 = vpow.pop %v1098
      %v1100 = vmul.f32 %v1070, 1.442695
      %v1101 = vpow.pop %v1100
      %v1102 = vmul.f32 %v1071, 1.442695
      %v1103 = vpow.pop %v1102
      %1104 = vadd.xlane.f32.xlu0 %v1073
      %v1105 = vpop.xlane.xlu0 %1104
      %1106 = vadd.xlane.f32.xlu0 %v1075
      %v1107 = vpop.xlane.xlu0 %1106
      %1108 = vadd.xlane.f32.xlu0 %v1077
      %v1109 = vpop.xlane.xlu0 %1108
      %v1110 = vsel %vm1025, %v1079, 0.0
      %1111 = vadd.xlane.f32.xlu0 %v1110
      %v1112 = vpop.xlane.xlu0 %1111
      %1113 = vadd.xlane.f32.xlu0 %v1081
      %v1114 = vpop.xlane.xlu0 %1113
      %1115 = vadd.xlane.f32.xlu0 %v1083
      %v1116 = vpop.xlane.xlu0 %1115
      %1117 = vadd.xlane.f32.xlu0 %v1085
      %v1118 = vpop.xlane.xlu0 %1117
      %v1119 = vsel %vm1025, %v1087, 0.0
      %1120 = vadd.xlane.f32.xlu0 %v1119
      %v1121 = vpop.xlane.xlu0 %1120
      %1122 = vadd.xlane.f32.xlu0 %v1089
      %v1123 = vpop.xlane.xlu0 %1122
      %1124 = vadd.xlane.f32.xlu0 %v1091
      %v1125 = vpop.xlane.xlu0 %1124
      %1126 = vadd.xlane.f32.xlu0 %v1093
      %v1127 = vpop.xlane.xlu0 %1126
      %v1128 = vsel %vm1025, %v1095, 0.0
      %1129 = vadd.xlane.f32.xlu0 %v1128
      %v1130 = vpop.xlane.xlu0 %1129
      %1131 = vadd.xlane.f32.xlu0 %v1097
      %v1132 = vpop.xlane.xlu0 %1131
      %1133 = vadd.xlane.f32.xlu0 %v1099
      %v1134 = vpop.xlane.xlu0 %1133
      %1135 = vadd.xlane.f32.xlu0 %v1101
      %v1136 = vpop.xlane.xlu0 %1135
      %v1137 = vsel %vm1025, %v1103, 0.0
      %1138 = vadd.xlane.f32.xlu0 %v1137
      %v1139 = vpop.xlane.xlu0 %1138
      %v1140 = vrcp.pop %v1105
      %v1141 = vrcp.pop %v1107
      %v1142 = vrcp.pop %v1109
      %v1143 = vrcp.pop %v1112
      %v1144 = vrcp.pop %v1114
      %v1145 = vrcp.pop %v1116
      %v1146 = vrcp.pop %v1118
      %v1147 = vrcp.pop %v1121
      %v1148 = vrcp.pop %v1123
      %v1149 = vrcp.pop %v1125
      %v1150 = vrcp.pop %v1127
      %v1151 = vrcp.pop %v1130
      %v1152 = vrcp.pop %v1132
      %v1153 = vrcp.pop %v1134
      %v1154 = vrcp.pop %v1136
      %v1155 = vrcp.pop %v1139
      %v1156 = vmul.f32 %v1073, %v1140
      %v1157 = vmul.f32 %v1075, %v1141
      %v1158 = vmul.f32 %v1077, %v1142
      %v1159 = vmul.f32 %v1079, %v1143
      %v1160 = vmul.f32 %v1081, %v1144
      %v1161 = vmul.f32 %v1083, %v1145
      %v1162 = vmul.f32 %v1085, %v1146
      %v1163 = vmul.f32 %v1087, %v1147
      %v1164 = vmul.f32 %v1089, %v1148
      %v1165 = vmul.f32 %v1091, %v1149
      %v1166 = vmul.f32 %v1093, %v1150
      %v1167 = vmul.f32 %v1095, %v1151
      %v1168 = vmul.f32 %v1097, %v1152
      %v1169 = vmul.f32 %v1099, %v1153
      %v1170 = vmul.f32 %v1101, %v1154
      %v1171 = vmul.f32 %v1103, %v1155
      %v1172 = vpack.c.bf16 %v1157, %v1156
      %v1173 = vpack.c.bf16 %v1159, %v1158
      %v1174 = vpack.c.bf16 %v1161, %v1160
      %v1175 = vpack.c.bf16 %v1163, %v1162
      %v1176 = vpack.c.bf16 %v1165, %v1164
      %v1177 = vpack.c.bf16 %v1167, %v1166
      %v1178 = vpack.c.bf16 %v1169, %v1168
      %v1179 = vpack.c.bf16 %v1171, %v1170
      %v1196 = vunpack.c.l.b16 %v417
      %v1197 = vunpack.c.l.b16 %v418
      %v1198 = vunpack.c.l.b16 %v419
      %v1199 = vunpack.c.l.b16 %v420
      %v1200 = vunpack.c.l.b16 %v421
      %v1201 = vunpack.c.l.b16 %v422
      %v1202 = vunpack.c.l.b16 %v423
      %v1203 = vunpack.c.l.b16 %v424
      %v1204 = vunpack.c.l.b16 %v425
      %v1205 = vunpack.c.l.b16 %v426
      %v1206 = vunpack.c.l.b16 %v427
      %v1207 = vunpack.c.l.b16 %v428
      %v1208 = vunpack.c.l.b16 %v429
      %v1209 = vunpack.c.l.b16 %v430
      %v1210 = vunpack.c.l.b16 %v431
      %v1211 = vunpack.c.l.b16 %v432
      %v1212 = vpack.c.b16 %v1197, %v1196
      %v1213 = vpack.c.b16 %v1199, %v1198
      %v1214 = vpack.c.b16 %v1201, %v1200
      %v1215 = vpack.c.b16 %v1203, %v1202
      %v1216 = vpack.c.b16 %v1205, %v1204
      %v1217 = vpack.c.b16 %v1207, %v1206
      %v1218 = vpack.c.b16 %v1209, %v1208
      %v1219 = vpack.c.b16 %v1211, %v1210
      %1228 = vmatprep.subr.bf16.mxu0 0
      %1229 = vmatpush1.bf16.msra.mxu0 %v1219
      %1230 = vmatprep.subr.bf16.mxu0 0
      %1231 = vmatpush1.bf16.msra.mxu0 %v1218
      %1232 = vmatprep.subr.bf16.mxu0 0
      %1233 = vmatpush1.bf16.msra.mxu0 %v1217
      %1234 = vmatprep.subr.bf16.mxu0 0
      %1235 = vmatpush1.bf16.msra.mxu0 %v1216
      %1236 = vmatprep.subr.bf16.mxu0 0
      %1237 = vmatpush1.bf16.msra.mxu0 %v1215
      %1238 = vmatprep.subr.bf16.mxu0 0
      %1239 = vmatpush1.bf16.msra.mxu0 %v1214
      %1240 = vmatprep.subr.bf16.mxu0 0
      %1241 = vmatpush1.bf16.msra.mxu0 %v1213
      %1242 = vmatprep.subr.bf16.mxu0 0
      %1243 = vmatpush1.bf16.msra.mxu0 %v1212
      %1244 = vmatprep.subr.bf16.mxu0 0
      %1245 = vmatpush2.bf16.msra.mxu0 0
      %1246 = vmatprep.subr.bf16.mxu0 0
      %1247 = vmatpush2.bf16.msra.mxu0 0
      %1248 = vmatprep.subr.bf16.mxu0 0
      %1249 = vmatpush2.bf16.msra.mxu0 0
      %1250 = vmatprep.subr.bf16.mxu0 0
      %1251 = vmatpush2.bf16.msra.mxu0 0
      %1252 = vmatprep.subr.bf16.mxu0 0
      %1253 = vmatpush2.bf16.msra.mxu0 0
      %1254 = vmatprep.subr.bf16.mxu0 0
      %1255 = vmatpush2.bf16.msra.mxu0 0
      %1256 = vmatprep.subr.bf16.mxu0 0
      %1257 = vmatpush2.bf16.msra.mxu0 0
      %1258 = vmatprep.subr.bf16.mxu0 0
      %1259 = vmatpush2.bf16.msra.mxu0 0
      %1260 = vmatprep.mubr.bf16.mxu0 0
      %1261 = vmatmul.mubr.bf16.gmra.mxu0 %v1172
      %v1262 = vpop.f32.mrf.mxu0
      %v1263 = vadd.f32 0.0, %v1262
      %v1264 = vpop.f32.mrf.mxu0
      %v1265 = vpop.f32.mrf.mxu0
      %v1266 = vadd.f32 0.0, %v1265
      %v1267 = vpop.f32.mrf.mxu0
      %1268 = vmatprep.mubr.bf16.mxu0 0
      %1269 = vmatmul.mubr.bf16.gmra.mxu0 %v1173
      %v1270 = vpop.f32.mrf.mxu0
      %v1271 = vadd.f32 0.0, %v1270
      %v1272 = vpop.f32.mrf.mxu0
      %v1273 = vpop.f32.mrf.mxu0
      %v1274 = vadd.f32 0.0, %v1273
      %v1275 = vpop.f32.mrf.mxu0
      %1276 = vdwg.mxu0
      %v1293 = vunpack.c.l.b16 %v433
      %v1294 = vunpack.c.l.b16 %v434
      %v1295 = vunpack.c.l.b16 %v435
      %v1296 = vunpack.c.l.b16 %v436
      %v1297 = vunpack.c.l.b16 %v437
      %v1298 = vunpack.c.l.b16 %v438
      %v1299 = vunpack.c.l.b16 %v439
      %v1300 = vunpack.c.l.b16 %v440
      %v1301 = vunpack.c.l.b16 %v441
      %v1302 = vunpack.c.l.b16 %v442
      %v1303 = vunpack.c.l.b16 %v443
      %v1304 = vunpack.c.l.b16 %v444
      %v1305 = vunpack.c.l.b16 %v445
      %v1306 = vunpack.c.l.b16 %v446
      %v1307 = vunpack.c.l.b16 %v447
      %v1308 = vunpack.c.l.b16 %v448
      %v1309 = vpack.c.b16 %v1294, %v1293
      %v1310 = vpack.c.b16 %v1296, %v1295
      %v1311 = vpack.c.b16 %v1298, %v1297
      %v1312 = vpack.c.b16 %v1300, %v1299
      %v1313 = vpack.c.b16 %v1302, %v1301
      %v1314 = vpack.c.b16 %v1304, %v1303
      %v1315 = vpack.c.b16 %v1306, %v1305
      %v1316 = vpack.c.b16 %v1308, %v1307
      %1325 = vmatprep.subr.bf16.mxu0 0
      %1326 = vmatpush1.bf16.msra.mxu0 %v1316
      %1327 = vmatprep.subr.bf16.mxu0 0
      %1328 = vmatpush1.bf16.msra.mxu0 %v1315
      %1329 = vmatprep.subr.bf16.mxu0 0
      %1330 = vmatpush1.bf16.msra.mxu0 %v1314
      %1331 = vmatprep.subr.bf16.mxu0 0
      %1332 = vmatpush1.bf16.msra.mxu0 %v1313
      %1333 = vmatprep.subr.bf16.mxu0 0
      %1334 = vmatpush1.bf16.msra.mxu0 %v1312
      %1335 = vmatprep.subr.bf16.mxu0 0
      %1336 = vmatpush1.bf16.msra.mxu0 %v1311
      %1337 = vmatprep.subr.bf16.mxu0 0
      %1338 = vmatpush1.bf16.msra.mxu0 %v1310
      %1339 = vmatprep.subr.bf16.mxu0 0
      %1340 = vmatpush1.bf16.msra.mxu0 %v1309
      %1341 = vmatprep.subr.bf16.mxu0 0
      %1342 = vmatpush2.bf16.msra.mxu0 0
      %1343 = vmatprep.subr.bf16.mxu0 0
      %1344 = vmatpush2.bf16.msra.mxu0 0
      %1345 = vmatprep.subr.bf16.mxu0 0
      %1346 = vmatpush2.bf16.msra.mxu0 0
      %1347 = vmatprep.subr.bf16.mxu0 0
      %1348 = vmatpush2.bf16.msra.mxu0 0
      %1349 = vmatprep.subr.bf16.mxu0 0
      %1350 = vmatpush2.bf16.msra.mxu0 0
      %1351 = vmatprep.subr.bf16.mxu0 0
      %1352 = vmatpush2.bf16.msra.mxu0 0
      %1353 = vmatprep.subr.bf16.mxu0 0
      %1354 = vmatpush2.bf16.msra.mxu0 0
      %1355 = vmatprep.subr.bf16.mxu0 0
      %1356 = vmatpush2.bf16.msra.mxu0 0
      %1357 = vmatprep.mubr.bf16.mxu0 0
      %1358 = vmatmul.mubr.bf16.gmra.mxu0 %v1174
      %v1359 = vpop.f32.mrf.mxu0
      %v1360 = vadd.f32 0.0, %v1359
      %v1361 = vpop.f32.mrf.mxu0
      %v1362 = vpop.f32.mrf.mxu0
      %v1363 = vadd.f32 0.0, %v1362
      %v1364 = vpop.f32.mrf.mxu0
      %1365 = vmatprep.mubr.bf16.mxu0 0
      %1366 = vmatmul.mubr.bf16.gmra.mxu0 %v1175
      %v1367 = vpop.f32.mrf.mxu0
      %v1368 = vadd.f32 0.0, %v1367
      %v1369 = vpop.f32.mrf.mxu0
      %v1370 = vpop.f32.mrf.mxu0
      %v1371 = vadd.f32 0.0, %v1370
      %v1372 = vpop.f32.mrf.mxu0
      %1373 = vdwg.mxu0
      %v1390 = vunpack.c.l.b16 %v449
      %v1391 = vunpack.c.l.b16 %v450
      %v1392 = vunpack.c.l.b16 %v451
      %v1393 = vunpack.c.l.b16 %v452
      %v1394 = vunpack.c.l.b16 %v453
      %v1395 = vunpack.c.l.b16 %v454
      %v1396 = vunpack.c.l.b16 %v455
      %v1397 = vunpack.c.l.b16 %v456
      %v1398 = vunpack.c.l.b16 %v457
      %v1399 = vunpack.c.l.b16 %v458
      %v1400 = vunpack.c.l.b16 %v459
      %v1401 = vunpack.c.l.b16 %v460
      %v1402 = vunpack.c.l.b16 %v461
      %v1403 = vunpack.c.l.b16 %v462
      %v1404 = vunpack.c.l.b16 %v463
      %v1405 = vunpack.c.l.b16 %v464
      %v1406 = vpack.c.b16 %v1391, %v1390
      %v1407 = vpack.c.b16 %v1393, %v1392
      %v1408 = vpack.c.b16 %v1395, %v1394
      %v1409 = vpack.c.b16 %v1397, %v1396
      %v1410 = vpack.c.b16 %v1399, %v1398
      %v1411 = vpack.c.b16 %v1401, %v1400
      %v1412 = vpack.c.b16 %v1403, %v1402
      %v1413 = vpack.c.b16 %v1405, %v1404
      %1422 = vmatprep.subr.bf16.mxu0 0
      %1423 = vmatpush1.bf16.msra.mxu0 %v1413
      %1424 = vmatprep.subr.bf16.mxu0 0
      %1425 = vmatpush1.bf16.msra.mxu0 %v1412
      %1426 = vmatprep.subr.bf16.mxu0 0
      %1427 = vmatpush1.bf16.msra.mxu0 %v1411
      %1428 = vmatprep.subr.bf16.mxu0 0
      %1429 = vmatpush1.bf16.msra.mxu0 %v1410
      %1430 = vmatprep.subr.bf16.mxu0 0
      %1431 = vmatpush1.bf16.msra.mxu0 %v1409
      %1432 = vmatprep.subr.bf16.mxu0 0
      %1433 = vmatpush1.bf16.msra.mxu0 %v1408
      %1434 = vmatprep.subr.bf16.mxu0 0
      %1435 = vmatpush1.bf16.msra.mxu0 %v1407
      %1436 = vmatprep.subr.bf16.mxu0 0
      %1437 = vmatpush1.bf16.msra.mxu0 %v1406
      %1438 = vmatprep.subr.bf16.mxu0 0
      %1439 = vmatpush2.bf16.msra.mxu0 0
      %1440 = vmatprep.subr.bf16.mxu0 0
      %1441 = vmatpush2.bf16.msra.mxu0 0
      %1442 = vmatprep.subr.bf16.mxu0 0
      %1443 = vmatpush2.bf16.msra.mxu0 0
      %1444 = vmatprep.subr.bf16.mxu0 0
      %1445 = vmatpush2.bf16.msra.mxu0 0
      %1446 = vmatprep.subr.bf16.mxu0 0
      %1447 = vmatpush2.bf16.msra.mxu0 0
      %1448 = vmatprep.subr.bf16.mxu0 0
      %1449 = vmatpush2.bf16.msra.mxu0 0
      %1450 = vmatprep.subr.bf16.mxu0 0
      %1451 = vmatpush2.bf16.msra.mxu0 0
      %1452 = vmatprep.subr.bf16.mxu0 0
      %1453 = vmatpush2.bf16.msra.mxu0 0
      %1454 = vmatprep.mubr.bf16.mxu0 0
      %1455 = vmatmul.mubr.bf16.gmra.mxu0 %v1176
      %v1456 = vpop.f32.mrf.mxu0
      %v1457 = vadd.f32 0.0, %v1456
      %v1458 = vpop.f32.mrf.mxu0
      %v1459 = vpop.f32.mrf.mxu0
      %v1460 = vadd.f32 0.0, %v1459
      %v1461 = vpop.f32.mrf.mxu0
      %1462 = vmatprep.mubr.bf16.mxu0 0
      %1463 = vmatmul.mubr.bf16.gmra.mxu0 %v1177
      %v1464 = vpop.f32.mrf.mxu0
      %v1465 = vadd.f32 0.0, %v1464
      %v1466 = vpop.f32.mrf.mxu0
      %v1467 = vpop.f32.mrf.mxu0
      %v1468 = vadd.f32 0.0, %v1467
      %v1469 = vpop.f32.mrf.mxu0
      %1470 = vdwg.mxu0
      %v1487 = vunpack.c.l.b16 %v465
      %v1488 = vunpack.c.l.b16 %v466
      %v1489 = vunpack.c.l.b16 %v467
      %v1490 = vunpack.c.l.b16 %v468
      %v1491 = vunpack.c.l.b16 %v469
      %v1492 = vunpack.c.l.b16 %v470
      %v1493 = vunpack.c.l.b16 %v471
      %v1494 = vunpack.c.l.b16 %v472
      %v1495 = vunpack.c.l.b16 %v473
      %v1496 = vunpack.c.l.b16 %v474
      %v1497 = vunpack.c.l.b16 %v475
      %v1498 = vunpack.c.l.b16 %v476
      %v1499 = vunpack.c.l.b16 %v477
      %v1500 = vunpack.c.l.b16 %v478
      %v1501 = vunpack.c.l.b16 %v479
      %v1502 = vunpack.c.l.b16 %v480
      %v1503 = vpack.c.b16 %v1488, %v1487
      %v1504 = vpack.c.b16 %v1490, %v1489
      %v1505 = vpack.c.b16 %v1492, %v1491
      %v1506 = vpack.c.b16 %v1494, %v1493
      %v1507 = vpack.c.b16 %v1496, %v1495
      %v1508 = vpack.c.b16 %v1498, %v1497
      %v1509 = vpack.c.b16 %v1500, %v1499
      %v1510 = vpack.c.b16 %v1502, %v1501
      %1519 = vmatprep.subr.bf16.mxu0 0
      %1520 = vmatpush1.bf16.msra.mxu0 %v1510
      %1521 = vmatprep.subr.bf16.mxu0 0
      %1522 = vmatpush1.bf16.msra.mxu0 %v1509
      %1523 = vmatprep.subr.bf16.mxu0 0
      %1524 = vmatpush1.bf16.msra.mxu0 %v1508
      %1525 = vmatprep.subr.bf16.mxu0 0
      %1526 = vmatpush1.bf16.msra.mxu0 %v1507
      %1527 = vmatprep.subr.bf16.mxu0 0
      %1528 = vmatpush1.bf16.msra.mxu0 %v1506
      %1529 = vmatprep.subr.bf16.mxu0 0
      %1530 = vmatpush1.bf16.msra.mxu0 %v1505
      %1531 = vmatprep.subr.bf16.mxu0 0
      %1532 = vmatpush1.bf16.msra.mxu0 %v1504
      %1533 = vmatprep.subr.bf16.mxu0 0
      %1534 = vmatpush1.bf16.msra.mxu0 %v1503
      %1535 = vmatprep.subr.bf16.mxu0 0
      %1536 = vmatpush2.bf16.msra.mxu0 0
      %1537 = vmatprep.subr.bf16.mxu0 0
      %1538 = vmatpush2.bf16.msra.mxu0 0
      %1539 = vmatprep.subr.bf16.mxu0 0
      %1540 = vmatpush2.bf16.msra.mxu0 0
      %1541 = vmatprep.subr.bf16.mxu0 0
      %1542 = vmatpush2.bf16.msra.mxu0 0
      %1543 = vmatprep.subr.bf16.mxu0 0
      %1544 = vmatpush2.bf16.msra.mxu0 0
      %1545 = vmatprep.subr.bf16.mxu0 0
      %1546 = vmatpush2.bf16.msra.mxu0 0
      %1547 = vmatprep.subr.bf16.mxu0 0
      %1548 = vmatpush2.bf16.msra.mxu0 0
      %1549 = vmatprep.subr.bf16.mxu0 0
      %1550 = vmatpush2.bf16.msra.mxu0 0
      %1551 = vmatprep.mubr.bf16.mxu0 0
      %1552 = vmatmul.mubr.bf16.gmra.mxu0 %v1178
      %v1553 = vpop.f32.mrf.mxu0
      %v1554 = vadd.f32 0.0, %v1553
      %v1555 = vpop.f32.mrf.mxu0
      %v1556 = vpop.f32.mrf.mxu0
      %v1557 = vadd.f32 0.0, %v1556
      %v1558 = vpop.f32.mrf.mxu0
      %1559 = vmatprep.mubr.bf16.mxu0 0
      %1560 = vmatmul.mubr.bf16.gmra.mxu0 %v1179
      %v1561 = vpop.f32.mrf.mxu0
      %v1562 = vadd.f32 0.0, %v1561
      %v1563 = vpop.f32.mrf.mxu0
      %v1564 = vpop.f32.mrf.mxu0
      %v1565 = vadd.f32 0.0, %v1564
      %v1566 = vpop.f32.mrf.mxu0
      %1567 = vdwg.mxu0
      %v1568 = vpack.c.bf16 %v1266, %v1263
      %v1569 = vpack.c.bf16 %v1274, %v1271
      %v1570 = vpack.c.bf16 %v1363, %v1360
      %v1571 = vpack.c.bf16 %v1371, %v1368
      %v1572 = vpack.c.bf16 %v1460, %v1457
      %v1573 = vpack.c.bf16 %v1468, %v1465
      %v1574 = vpack.c.bf16 %v1557, %v1554
      %v1575 = vpack.c.bf16 %v1565, %v1562
      %v1584 = vunpack.c.l.b16 %v1568
      %v1585 = vunpack.c.h.b16 %v1568
      %v1586 = vunpack.c.l.b16 %v1569
      %v1587 = vunpack.c.h.b16 %v1569
      %v1588 = vunpack.c.l.b16 %v1570
      %v1589 = vunpack.c.h.b16 %v1570
      %v1590 = vunpack.c.l.b16 %v1571
      %v1591 = vunpack.c.h.b16 %v1571
      %v1592 = vunpack.c.l.b16 %v1572
      %v1593 = vunpack.c.h.b16 %v1572
      %v1594 = vunpack.c.l.b16 %v1573
      %v1595 = vunpack.c.h.b16 %v1573
      %v1596 = vunpack.c.l.b16 %v1574
      %v1597 = vunpack.c.h.b16 %v1574
      %v1598 = vunpack.c.l.b16 %v1575
      %v1599 = vunpack.c.h.b16 %v1575
      %v1600 = vpack.c.b16 %v1584, %v1584
      %v1601 = vpack.c.b16 %v1585, %v1585
      %v1602 = vpack.c.b16 %v1586, %v1586
      %v1603 = vpack.c.b16 %v1587, %v1587
      %v1604 = vpack.c.b16 %v1588, %v1588
      %v1605 = vpack.c.b16 %v1589, %v1589
      %v1606 = vpack.c.b16 %v1590, %v1590
      %v1607 = vpack.c.b16 %v1591, %v1591
      %v1608 = vpack.c.b16 %v1592, %v1592
      %v1609 = vpack.c.b16 %v1593, %v1593
      %v1610 = vpack.c.b16 %v1594, %v1594
      %v1611 = vpack.c.b16 %v1595, %v1595
      %v1612 = vpack.c.b16 %v1596, %v1596
      %v1613 = vpack.c.b16 %v1597, %v1597
      %v1614 = vpack.c.b16 %v1598, %v1598
      %v1615 = vpack.c.b16 %v1599, %v1599
      %vm1632 = vcmask 60416
      %1633 = vst.msk [vmem:[%s254] sm:$0xf] %vm1632, %v1600
      %1634 = vst.msk [vmem:[%s254 + $0x4] sm:$0xf] %vm1632, %v1601
      %1635 = vst.msk [vmem:[%s254 + $0x8] sm:$0xf] %vm1632, %v1602
      %vm1636 = vcmask 57344
      %vm1637 = vsmask.f32 256
      %vm1638 = vmand %vm1636, %vm1637
      %v1639 = vld [vmem:[%s254 + $0xc] sm:$0x1]
      %v1640 = vsel %vm1638, %v1603, %v1639
      %1641 = vst [vmem:[%s254 + $0xc] sm:$0x1] %v1640
      %1642 = vst.msk [vmem:[%s254 + $0x10] sm:$0xf] %vm1632, %v1604
      %1643 = vst.msk [vmem:[%s254 + $0x14] sm:$0xf] %vm1632, %v1605
      %1644 = vst.msk [vmem:[%s254 + $0x18] sm:$0xf] %vm1632, %v1606
      %v1645 = vld [vmem:[%s254 + $0x1c] sm:$0x1]
      %v1646 = vsel %vm1638, %v1607, %v1645
      %1647 = vst [vmem:[%s254 + $0x1c] sm:$0x1] %v1646
      %1648 = vst.msk [vmem:[%s254 + $0x20] sm:$0xf] %vm1632, %v1608
      %1649 = vst.msk [vmem:[%s254 + $0x24] sm:$0xf] %vm1632, %v1609
      %1650 = vst.msk [vmem:[%s254 + $0x28] sm:$0xf] %vm1632, %v1610
      %v1651 = vld [vmem:[%s254 + $0x2c] sm:$0x1]
      %v1652 = vsel %vm1638, %v1611, %v1651
      %1653 = vst [vmem:[%s254 + $0x2c] sm:$0x1] %v1652
      %1654 = vst.msk [vmem:[%s254 + $0x30] sm:$0xf] %vm1632, %v1612
      %1655 = vst.msk [vmem:[%s254 + $0x34] sm:$0xf] %vm1632, %v1613
      %1656 = vst.msk [vmem:[%s254 + $0x38] sm:$0xf] %vm1632, %v1614
      %v1657 = vld [vmem:[%s254 + $0x3c] sm:$0x1]
      %v1658 = vsel %vm1638, %v1615, %v1657
      %1659 = vst [vmem:[%s254 + $0x3c] sm:$0x1] %v1658
      %1660 = vrot.lane.b32.xlu0 %v492, 120
      %v1661 = vpop.permute.xlu0 %1660
      %1662 = vrot.lane.b32.xlu0 %v493, 120
      %v1663 = vpop.permute.xlu0 %1662
      %1664 = vrot.lane.b32.xlu0 %v526, 120
      %v1665 = vpop.permute.xlu0 %1664
      %1666 = vrot.lane.b32.xlu0 %v527, 120
      %v1667 = vpop.permute.xlu0 %1666
      %1668 = vrot.lane.b32.xlu0 %v528, 120
      %v1669 = vpop.permute.xlu0 %1668
      %1670 = vrot.lane.b32.xlu0 %v529, 120
      %v1671 = vpop.permute.xlu0 %1670
      %1672 = vrot.lane.b32.xlu0 %v530, 120
      %v1673 = vpop.permute.xlu0 %1672
      %1674 = vrot.lane.b32.xlu0 %v531, 120
      %v1675 = vpop.permute.xlu0 %1674
      %1676 = vrot.lane.b32.xlu0 %v532, 120
      %v1677 = vpop.permute.xlu0 %1676
      %1678 = vrot.lane.b32.xlu0 %v533, 120
      %v1679 = vpop.permute.xlu0 %1678
      %v1681 = vsel %vm534, %v1661, 0
      %v1684 = vsel %vm534, %v1663, 0
      %v1687 = vsel %vm534, %v1665, 0
      %v1690 = vsel %vm534, %v1667, 0
      %v1693 = vsel %vm534, %v1669, 0
      %v1696 = vsel %vm534, %v1671, 0
      %v1699 = vsel %vm534, %v1673, 0
      %v1702 = vsel %vm534, %v1675, 0
      %v1705 = vsel %vm534, %v1677, 0
      %v1708 = vsel %vm534, %v1679, 0
      %1710 = vmatprep.subr.bf16.mxu0 0
      %1711 = vmatpush1.bf16.xpose.msra.mxu0 %v1708
      %1712 = vmatprep.subr.bf16.mxu0 0
      %1713 = vmatpush1.bf16.xpose.msra.mxu0 %v1705
      %1714 = vmatprep.subr.bf16.mxu0 0
      %1715 = vmatpush1.bf16.xpose.msra.mxu0 %v1702
      %1716 = vmatprep.subr.bf16.mxu0 0
      %1717 = vmatpush1.bf16.xpose.msra.mxu0 %v1699
      %1718 = vmatprep.subr.bf16.mxu0 0
      %1719 = vmatpush1.bf16.xpose.msra.mxu0 %v1696
      %1720 = vmatprep.subr.bf16.mxu0 0
      %1721 = vmatpush1.bf16.xpose.msra.mxu0 %v1693
      %1722 = vmatprep.subr.bf16.mxu0 0
      %1723 = vmatpush1.bf16.xpose.msra.mxu0 %v1690
      %1724 = vmatprep.subr.bf16.mxu0 0
      %1725 = vmatpush1.bf16.xpose.msra.mxu0 %v1687
      %1726 = vmatprep.subr.bf16.mxu0 0
      %1727 = vmatpush2.bf16.xpose.msra.mxu0 0
      %1728 = vmatprep.subr.bf16.mxu0 0
      %1729 = vmatpush2.bf16.xpose.msra.mxu0 0
      %1730 = vmatprep.subr.bf16.mxu0 0
      %1731 = vmatpush2.bf16.xpose.msra.mxu0 0
      %1732 = vmatprep.subr.bf16.mxu0 0
      %1733 = vmatpush2.bf16.xpose.msra.mxu0 0
      %1734 = vmatprep.subr.bf16.mxu0 0
      %1735 = vmatpush2.bf16.xpose.msra.mxu0 0
      %1736 = vmatprep.subr.bf16.mxu0 0
      %1737 = vmatpush2.bf16.xpose.msra.mxu0 0
      %1738 = vmatprep.subr.bf16.mxu0 0
      %1739 = vmatpush2.bf16.xpose.msra.mxu0 0
      %1740 = vmatprep.subr.bf16.mxu0 0
      %1741 = vmatpush2.bf16.xpose.msra.mxu0 0
      %1742 = vmatprep.mubr.bf16.mxu0 0
      %1743 = vmatmul.mubr.bf16.gmra.mxu0 %v1681
      %v1744 = vpop.f32.mrf.mxu0
      %v1745 = vadd.f32 0.0, %v1744
      %v1746 = vpop.f32.mrf.mxu0
      %v1747 = vpop.f32.mrf.mxu0
      %v1748 = vadd.f32 0.0, %v1747
      %v1749 = vpop.f32.mrf.mxu0
      %1750 = vmatprep.mubr.bf16.mxu0 0
      %1751 = vmatmul.mubr.bf16.gmra.mxu0 %v1684
      %v1752 = vpop.f32.mrf.mxu0
      %v1753 = vadd.f32 0.0, %v1752
      %v1754 = vpop.f32.mrf.mxu0
      %v1755 = vpop.f32.mrf.mxu0
      %v1756 = vadd.f32 0.0, %v1755
      %v1757 = vpop.f32.mrf.mxu0
      %1758 = vdwg.mxu0
      %1759 = vrot.lane.b32.xlu0 %v622, 120
      %v1760 = vpop.permute.xlu0 %1759
      %1761 = vrot.lane.b32.xlu0 %v623, 120
      %v1762 = vpop.permute.xlu0 %1761
      %1763 = vrot.lane.b32.xlu0 %v656, 120
      %v1764 = vpop.permute.xlu0 %1763
      %1765 = vrot.lane.b32.xlu0 %v657, 120
      %v1766 = vpop.permute.xlu0 %1765
      %1767 = vrot.lane.b32.xlu0 %v658, 120
      %v1768 = vpop.permute.xlu0 %1767
      %1769 = vrot.lane.b32.xlu0 %v659, 120
      %v1770 = vpop.permute.xlu0 %1769
      %1771 = vrot.lane.b32.xlu0 %v660, 120
      %v1772 = vpop.permute.xlu0 %1771
      %1773 = vrot.lane.b32.xlu0 %v661, 120
      %v1774 = vpop.permute.xlu0 %1773
      %1775 = vrot.lane.b32.xlu0 %v662, 120
      %v1776 = vpop.permute.xlu0 %1775
      %1777 = vrot.lane.b32.xlu0 %v663, 120
      %v1778 = vpop.permute.xlu0 %1777
      %v1780 = vsel %vm534, %v1760, 0
      %v1783 = vsel %vm534, %v1762, 0
      %v1786 = vsel %vm534, %v1764, 0
      %v1789 = vsel %vm534, %v1766, 0
      %v1792 = vsel %vm534, %v1768, 0
      %v1795 = vsel %vm534, %v1770, 0
      %v1798 = vsel %vm534, %v1772, 0
      %v1801 = vsel %vm534, %v1774, 0
      %v1804 = vsel %vm534, %v1776, 0
      %v1807 = vsel %vm534, %v1778, 0
      %1809 = vmatprep.subr.bf16.mxu0 0
      %1810 = vmatpush1.bf16.xpose.msra.mxu0 %v1807
      %1811 = vmatprep.subr.bf16.mxu0 0
      %1812 = vmatpush1.bf16.xpose.msra.mxu0 %v1804
      %1813 = vmatprep.subr.bf16.mxu0 0
      %1814 = vmatpush1.bf16.xpose.msra.mxu0 %v1801
      %1815 = vmatprep.subr.bf16.mxu0 0
      %1816 = vmatpush1.bf16.xpose.msra.mxu0 %v1798
      %1817 = vmatprep.subr.bf16.mxu0 0
      %1818 = vmatpush1.bf16.xpose.msra.mxu0 %v1795
      %1819 = vmatprep.subr.bf16.mxu0 0
      %1820 = vmatpush1.bf16.xpose.msra.mxu0 %v1792
      %1821 = vmatprep.subr.bf16.mxu0 0
      %1822 = vmatpush1.bf16.xpose.msra.mxu0 %v1789
      %1823 = vmatprep.subr.bf16.mxu0 0
      %1824 = vmatpush1.bf16.xpose.msra.mxu0 %v1786
      %1825 = vmatprep.subr.bf16.mxu0 0
      %1826 = vmatpush2.bf16.xpose.msra.mxu0 0
      %1827 = vmatprep.subr.bf16.mxu0 0
      %1828 = vmatpush2.bf16.xpose.msra.mxu0 0
      %1829 = vmatprep.subr.bf16.mxu0 0
      %1830 = vmatpush2.bf16.xpose.msra.mxu0 0
      %1831 = vmatprep.subr.bf16.mxu0 0
      %1832 = vmatpush2.bf16.xpose.msra.mxu0 0
      %1833 = vmatprep.subr.bf16.mxu0 0
      %1834 = vmatpush2.bf16.xpose.msra.mxu0 0
      %1835 = vmatprep.subr.bf16.mxu0 0
      %1836 = vmatpush2.bf16.xpose.msra.mxu0 0
      %1837 = vmatprep.subr.bf16.mxu0 0
      %1838 = vmatpush2.bf16.xpose.msra.mxu0 0
      %1839 = vmatprep.subr.bf16.mxu0 0
      %1840 = vmatpush2.bf16.xpose.msra.mxu0 0
      %1841 = vmatprep.mubr.bf16.mxu0 0
      %1842 = vmatmul.mubr.bf16.gmra.mxu0 %v1780
      %v1843 = vpop.f32.mrf.mxu0
      %v1844 = vadd.f32 0.0, %v1843
      %v1845 = vpop.f32.mrf.mxu0
      %v1846 = vpop.f32.mrf.mxu0
      %v1847 = vadd.f32 0.0, %v1846
      %v1848 = vpop.f32.mrf.mxu0
      %1849 = vmatprep.mubr.bf16.mxu0 0
      %1850 = vmatmul.mubr.bf16.gmra.mxu0 %v1783
      %v1851 = vpop.f32.mrf.mxu0
      %v1852 = vadd.f32 0.0, %v1851
      %v1853 = vpop.f32.mrf.mxu0
      %v1854 = vpop.f32.mrf.mxu0
      %v1855 = vadd.f32 0.0, %v1854
      %v1856 = vpop.f32.mrf.mxu0
      %1857 = vdwg.mxu0
      %1858 = vrot.lane.b32.xlu0 %v751, 120
      %v1859 = vpop.permute.xlu0 %1858
      %1860 = vrot.lane.b32.xlu0 %v752, 120
      %v1861 = vpop.permute.xlu0 %1860
      %1862 = vrot.lane.b32.xlu0 %v785, 120
      %v1863 = vpop.permute.xlu0 %1862
      %1864 = vrot.lane.b32.xlu0 %v786, 120
      %v1865 = vpop.permute.xlu0 %1864
      %1866 = vrot.lane.b32.xlu0 %v787, 120
      %v1867 = vpop.permute.xlu0 %1866
      %1868 = vrot.lane.b32.xlu0 %v788, 120
      %v1869 = vpop.permute.xlu0 %1868
      %1870 = vrot.lane.b32.xlu0 %v789, 120
      %v1871 = vpop.permute.xlu0 %1870
      %1872 = vrot.lane.b32.xlu0 %v790, 120
      %v1873 = vpop.permute.xlu0 %1872
      %1874 = vrot.lane.b32.xlu0 %v791, 120
      %v1875 = vpop.permute.xlu0 %1874
      %1876 = vrot.lane.b32.xlu0 %v792, 120
      %v1877 = vpop.permute.xlu0 %1876
      %v1879 = vsel %vm534, %v1859, 0
      %v1882 = vsel %vm534, %v1861, 0
      %v1885 = vsel %vm534, %v1863, 0
      %v1888 = vsel %vm534, %v1865, 0
      %v1891 = vsel %vm534, %v1867, 0
      %v1894 = vsel %vm534, %v1869, 0
      %v1897 = vsel %vm534, %v1871, 0
      %v1900 = vsel %vm534, %v1873, 0
      %v1903 = vsel %vm534, %v1875, 0
      %v1906 = vsel %vm534, %v1877, 0
      %1908 = vmatprep.subr.bf16.mxu0 0
      %1909 = vmatpush1.bf16.xpose.msra.mxu0 %v1906
      %1910 = vmatprep.subr.bf16.mxu0 0
      %1911 = vmatpush1.bf16.xpose.msra.mxu0 %v1903
      %1912 = vmatprep.subr.bf16.mxu0 0
      %1913 = vmatpush1.bf16.xpose.msra.mxu0 %v1900
      %1914 = vmatprep.subr.bf16.mxu0 0
      %1915 = vmatpush1.bf16.xpose.msra.mxu0 %v1897
      %1916 = vmatprep.subr.bf16.mxu0 0
      %1917 = vmatpush1.bf16.xpose.msra.mxu0 %v1894
      %1918 = vmatprep.subr.bf16.mxu0 0
      %1919 = vmatpush1.bf16.xpose.msra.mxu0 %v1891
      %1920 = vmatprep.subr.bf16.mxu0 0
      %1921 = vmatpush1.bf16.xpose.msra.mxu0 %v1888
      %1922 = vmatprep.subr.bf16.mxu0 0
      %1923 = vmatpush1.bf16.xpose.msra.mxu0 %v1885
      %1924 = vmatprep.subr.bf16.mxu0 0
      %1925 = vmatpush2.bf16.xpose.msra.mxu0 0
      %1926 = vmatprep.subr.bf16.mxu0 0
      %1927 = vmatpush2.bf16.xpose.msra.mxu0 0
      %1928 = vmatprep.subr.bf16.mxu0 0
      %1929 = vmatpush2.bf16.xpose.msra.mxu0 0
      %1930 = vmatprep.subr.bf16.mxu0 0
      %1931 = vmatpush2.bf16.xpose.msra.mxu0 0
      %1932 = vmatprep.subr.bf16.mxu0 0
      %1933 = vmatpush2.bf16.xpose.msra.mxu0 0
      %1934 = vmatprep.subr.bf16.mxu0 0
      %1935 = vmatpush2.bf16.xpose.msra.mxu0 0
      %1936 = vmatprep.subr.bf16.mxu0 0
      %1937 = vmatpush2.bf16.xpose.msra.mxu0 0
      %1938 = vmatprep.subr.bf16.mxu0 0
      %1939 = vmatpush2.bf16.xpose.msra.mxu0 0
      %1940 = vmatprep.mubr.bf16.mxu0 0
      %1941 = vmatmul.mubr.bf16.gmra.mxu0 %v1879
      %v1942 = vpop.f32.mrf.mxu0
      %v1943 = vadd.f32 0.0, %v1942
      %v1944 = vpop.f32.mrf.mxu0
      %v1945 = vpop.f32.mrf.mxu0
      %v1946 = vadd.f32 0.0, %v1945
      %v1947 = vpop.f32.mrf.mxu0
      %1948 = vmatprep.mubr.bf16.mxu0 0
      %1949 = vmatmul.mubr.bf16.gmra.mxu0 %v1882
      %v1950 = vpop.f32.mrf.mxu0
      %v1951 = vadd.f32 0.0, %v1950
      %v1952 = vpop.f32.mrf.mxu0
      %v1953 = vpop.f32.mrf.mxu0
      %v1954 = vadd.f32 0.0, %v1953
      %v1955 = vpop.f32.mrf.mxu0
      %1956 = vdwg.mxu0
      %1957 = vrot.lane.b32.xlu0 %v880, 120
      %v1958 = vpop.permute.xlu0 %1957
      %1959 = vrot.lane.b32.xlu0 %v881, 120
      %v1960 = vpop.permute.xlu0 %1959
      %1961 = vrot.lane.b32.xlu0 %v914, 120
      %v1962 = vpop.permute.xlu0 %1961
      %1963 = vrot.lane.b32.xlu0 %v915, 120
      %v1964 = vpop.permute.xlu0 %1963
      %1965 = vrot.lane.b32.xlu0 %v916, 120
      %v1966 = vpop.permute.xlu0 %1965
      %1967 = vrot.lane.b32.xlu0 %v917, 120
      %v1968 = vpop.permute.xlu0 %1967
      %1969 = vrot.lane.b32.xlu0 %v918, 120
      %v1970 = vpop.permute.xlu0 %1969
      %1971 = vrot.lane.b32.xlu0 %v919, 120
      %v1972 = vpop.permute.xlu0 %1971
      %1973 = vrot.lane.b32.xlu0 %v920, 120
      %v1974 = vpop.permute.xlu0 %1973
      %1975 = vrot.lane.b32.xlu0 %v921, 120
      %v1976 = vpop.permute.xlu0 %1975
      %v1978 = vsel %vm534, %v1958, 0
      %v1981 = vsel %vm534, %v1960, 0
      %v1984 = vsel %vm534, %v1962, 0
      %v1987 = vsel %vm534, %v1964, 0
      %v1990 = vsel %vm534, %v1966, 0
      %v1993 = vsel %vm534, %v1968, 0
      %v1996 = vsel %vm534, %v1970, 0
      %v1999 = vsel %vm534, %v1972, 0
      %v2002 = vsel %vm534, %v1974, 0
      %v2005 = vsel %vm534, %v1976, 0
      %2007 = vmatprep.subr.bf16.mxu0 0
      %2008 = vmatpush1.bf16.xpose.msra.mxu0 %v2005
      %2009 = vmatprep.subr.bf16.mxu0 0
      %2010 = vmatpush1.bf16.xpose.msra.mxu0 %v2002
      %2011 = vmatprep.subr.bf16.mxu0 0
      %2012 = vmatpush1.bf16.xpose.msra.mxu0 %v1999
      %2013 = vmatprep.subr.bf16.mxu0 0
      %2014 = vmatpush1.bf16.xpose.msra.mxu0 %v1996
      %2015 = vmatprep.subr.bf16.mxu0 0
      %2016 = vmatpush1.bf16.xpose.msra.mxu0 %v1993
      %2017 = vmatprep.subr.bf16.mxu0 0
      %2018 = vmatpush1.bf16.xpose.msra.mxu0 %v1990
      %2019 = vmatprep.subr.bf16.mxu0 0
      %2020 = vmatpush1.bf16.xpose.msra.mxu0 %v1987
      %2021 = vmatprep.subr.bf16.mxu0 0
      %2022 = vmatpush1.bf16.xpose.msra.mxu0 %v1984
      %2023 = vmatprep.subr.bf16.mxu0 0
      %2024 = vmatpush2.bf16.xpose.msra.mxu0 0
      %2025 = vmatprep.subr.bf16.mxu0 0
      %2026 = vmatpush2.bf16.xpose.msra.mxu0 0
      %2027 = vmatprep.subr.bf16.mxu0 0
      %2028 = vmatpush2.bf16.xpose.msra.mxu0 0
      %2029 = vmatprep.subr.bf16.mxu0 0
      %2030 = vmatpush2.bf16.xpose.msra.mxu0 0
      %2031 = vmatprep.subr.bf16.mxu0 0
      %2032 = vmatpush2.bf16.xpose.msra.mxu0 0
      %2033 = vmatprep.subr.bf16.mxu0 0
      %2034 = vmatpush2.bf16.xpose.msra.mxu0 0
      %2035 = vmatprep.subr.bf16.mxu0 0
      %2036 = vmatpush2.bf16.xpose.msra.mxu0 0
      %2037 = vmatprep.subr.bf16.mxu0 0
      %2038 = vmatpush2.bf16.xpose.msra.mxu0 0
      %2039 = vmatprep.mubr.bf16.mxu0 0
      %2040 = vmatmul.mubr.bf16.gmra.mxu0 %v1978
      %v2041 = vpop.f32.mrf.mxu0
      %v2042 = vadd.f32 0.0, %v2041
      %v2043 = vpop.f32.mrf.mxu0
      %v2044 = vpop.f32.mrf.mxu0
      %v2045 = vadd.f32 0.0, %v2044
      %v2046 = vpop.f32.mrf.mxu0
      %2047 = vmatprep.mubr.bf16.mxu0 0
      %2048 = vmatmul.mubr.bf16.gmra.mxu0 %v1981
      %v2049 = vpop.f32.mrf.mxu0
      %v2050 = vadd.f32 0.0, %v2049
      %v2051 = vpop.f32.mrf.mxu0
      %v2052 = vpop.f32.mrf.mxu0
      %v2053 = vadd.f32 0.0, %v2052
      %v2054 = vpop.f32.mrf.mxu0
      %2055 = vdwg.mxu0
      %v2056 = vsel %vm1002, %v1745, -1e+30
      %v2057 = vsel %vm1002, %v1748, -1e+30
      %v2058 = vsel %vm1002, %v1753, -1e+30
      %v2059 = vsel %vm1002, %v1756, -1e+30
      %v2060 = vsel %vm1002, %v1844, -1e+30
      %v2061 = vsel %vm1002, %v1847, -1e+30
      %v2062 = vsel %vm1002, %v1852, -1e+30
      %v2063 = vsel %vm1002, %v1855, -1e+30
      %v2064 = vsel %vm1002, %v1943, -1e+30
      %v2065 = vsel %vm1002, %v1946, -1e+30
      %v2066 = vsel %vm1002, %v1951, -1e+30
      %v2067 = vsel %vm1002, %v1954, -1e+30
      %v2068 = vsel %vm1002, %v2042, -1e+30
      %v2069 = vsel %vm1002, %v2045, -1e+30
      %v2070 = vsel %vm1002, %v2050, -1e+30
      %v2071 = vsel %vm1002, %v2053, -1e+30
      %2072 = vmax.xlane.f32.xlu0 %v2056
      %v2073 = vpop.xlane.xlu0 %2072
      %2074 = vmax.xlane.f32.xlu0 %v2057
      %v2075 = vpop.xlane.xlu0 %2074
      %2076 = vmax.xlane.f32.xlu0 %v2058
      %v2077 = vpop.xlane.xlu0 %2076
      %v2078 = vsel %vm1025, %v2059, -inf
      %2079 = vmax.xlane.f32.xlu0 %v2078
      %v2080 = vpop.xlane.xlu0 %2079
      %2081 = vmax.xlane.f32.xlu0 %v2060
      %v2082 = vpop.xlane.xlu0 %2081
      %2083 = vmax.xlane.f32.xlu0 %v2061
      %v2084 = vpop.xlane.xlu0 %2083
      %2085 = vmax.xlane.f32.xlu0 %v2062
      %v2086 = vpop.xlane.xlu0 %2085
      %v2087 = vsel %vm1025, %v2063, -inf
      %2088 = vmax.xlane.f32.xlu0 %v2087
      %v2089 = vpop.xlane.xlu0 %2088
      %2090 = vmax.xlane.f32.xlu0 %v2064
      %v2091 = vpop.xlane.xlu0 %2090
      %2092 = vmax.xlane.f32.xlu0 %v2065
      %v2093 = vpop.xlane.xlu0 %2092
      %2094 = vmax.xlane.f32.xlu0 %v2066
      %v2095 = vpop.xlane.xlu0 %2094
      %v2096 = vsel %vm1025, %v2067, -inf
      %2097 = vmax.xlane.f32.xlu0 %v2096
      %v2098 = vpop.xlane.xlu0 %2097
      %2099 = vmax.xlane.f32.xlu0 %v2068
      %v2100 = vpop.xlane.xlu0 %2099
      %2101 = vmax.xlane.f32.xlu0 %v2069
      %v2102 = vpop.xlane.xlu0 %2101
      %2103 = vmax.xlane.f32.xlu0 %v2070
      %v2104 = vpop.xlane.xlu0 %2103
      %v2105 = vsel %vm1025, %v2071, -inf
      %2106 = vmax.xlane.f32.xlu0 %v2105
      %v2107 = vpop.xlane.xlu0 %2106
      %v2108 = vsub.f32 %v2056, %v2073
      %v2109 = vsub.f32 %v2057, %v2075
      %v2110 = vsub.f32 %v2058, %v2077
      %v2111 = vsub.f32 %v2059, %v2080
      %v2112 = vsub.f32 %v2060, %v2082
      %v2113 = vsub.f32 %v2061, %v2084
      %v2114 = vsub.f32 %v2062, %v2086
      %v2115 = vsub.f32 %v2063, %v2089
      %v2116 = vsub.f32 %v2064, %v2091
      %v2117 = vsub.f32 %v2065, %v2093
      %v2118 = vsub.f32 %v2066, %v2095
      %v2119 = vsub.f32 %v2067, %v2098
      %v2120 = vsub.f32 %v2068, %v2100
      %v2121 = vsub.f32 %v2069, %v2102
      %v2122 = vsub.f32 %v2070, %v2104
      %v2123 = vsub.f32 %v2071, %v2107
      %v2124 = vmul.f32 %v2108, 1.442695
      %v2125 = vpow.pop %v2124
      %v2126 = vmul.f32 %v2109, 1.442695
      %v2127 = vpow.pop %v2126
      %v2128 = vmul.f32 %v2110, 1.442695
      %v2129 = vpow.pop %v2128
      %v2130 = vmul.f32 %v2111, 1.442695
      %v2131 = vpow.pop %v2130
      %v2132 = vmul.f32 %v2112, 1.442695
      %v2133 = vpow.pop %v2132
      %v2134 = vmul.f32 %v2113, 1.442695
      %v2135 = vpow.pop %v2134
      %v2136 = vmul.f32 %v2114, 1.442695
      %v2137 = vpow.pop %v2136
      %v2138 = vmul.f32 %v2115, 1.442695
      %v2139 = vpow.pop %v2138
      %v2140 = vmul.f32 %v2116, 1.442695
      %v2141 = vpow.pop %v2140
      %v2142 = vmul.f32 %v2117, 1.442695
      %v2143 = vpow.pop %v2142
      %v2144 = vmul.f32 %v2118, 1.442695
      %v2145 = vpow.pop %v2144
      %v2146 = vmul.f32 %v2119, 1.442695
      %v2147 = vpow.pop %v2146
      %v2148 = vmul.f32 %v2120, 1.442695
      %v2149 = vpow.pop %v2148
      %v2150 = vmul.f32 %v2121, 1.442695
      %v2151 = vpow.pop %v2150
      %v2152 = vmul.f32 %v2122, 1.442695
      %v2153 = vpow.pop %v2152
      %v2154 = vmul.f32 %v2123, 1.442695
      %v2155 = vpow.pop %v2154
      %2156 = vadd.xlane.f32.xlu0 %v2125
      %v2157 = vpop.xlane.xlu0 %2156
      %2158 = vadd.xlane.f32.xlu0 %v2127
      %v2159 = vpop.xlane.xlu0 %2158
      %2160 = vadd.xlane.f32.xlu0 %v2129
      %v2161 = vpop.xlane.xlu0 %2160
      %v2162 = vsel %vm1025, %v2131, 0.0
      %2163 = vadd.xlane.f32.xlu0 %v2162
      %v2164 = vpop.xlane.xlu0 %2163
      %2165 = vadd.xlane.f32.xlu0 %v2133
      %v2166 = vpop.xlane.xlu0 %2165
      %2167 = vadd.xlane.f32.xlu0 %v2135
      %v2168 = vpop.xlane.xlu0 %2167
      %2169 = vadd.xlane.f32.xlu0 %v2137
      %v2170 = vpop.xlane.xlu0 %2169
      %v2171 = vsel %vm1025, %v2139, 0.0
      %2172 = vadd.xlane.f32.xlu0 %v2171
      %v2173 = vpop.xlane.xlu0 %2172
      %2174 = vadd.xlane.f32.xlu0 %v2141
      %v2175 = vpop.xlane.xlu0 %2174
      %2176 = vadd.xlane.f32.xlu0 %v2143
      %v2177 = vpop.xlane.xlu0 %2176
      %2178 = vadd.xlane.f32.xlu0 %v2145
      %v2179 = vpop.xlane.xlu0 %2178
      %v2180 = vsel %vm1025, %v2147, 0.0
      %2181 = vadd.xlane.f32.xlu0 %v2180
      %v2182 = vpop.xlane.xlu0 %2181
      %2183 = vadd.xlane.f32.xlu0 %v2149
      %v2184 = vpop.xlane.xlu0 %2183
      %2185 = vadd.xlane.f32.xlu0 %v2151
      %v2186 = vpop.xlane.xlu0 %2185
      %2187 = vadd.xlane.f32.xlu0 %v2153
      %v2188 = vpop.xlane.xlu0 %2187
      %v2189 = vsel %vm1025, %v2155, 0.0
      %2190 = vadd.xlane.f32.xlu0 %v2189
      %v2191 = vpop.xlane.xlu0 %2190
      %v2192 = vrcp.pop %v2157
      %v2193 = vrcp.pop %v2159
      %v2194 = vrcp.pop %v2161
      %v2195 = vrcp.pop %v2164
      %v2196 = vrcp.pop %v2166
      %v2197 = vrcp.pop %v2168
      %v2198 = vrcp.pop %v2170
      %v2199 = vrcp.pop %v2173
      %v2200 = vrcp.pop %v2175
      %v2201 = vrcp.pop %v2177
      %v2202 = vrcp.pop %v2179
      %v2203 = vrcp.pop %v2182
      %v2204 = vrcp.pop %v2184
      %v2205 = vrcp.pop %v2186
      %v2206 = vrcp.pop %v2188
      %v2207 = vrcp.pop %v2191
      %v2208 = vmul.f32 %v2125, %v2192
      %v2209 = vmul.f32 %v2127, %v2193
      %v2210 = vmul.f32 %v2129, %v2194
      %v2211 = vmul.f32 %v2131, %v2195
      %v2212 = vmul.f32 %v2133, %v2196
      %v2213 = vmul.f32 %v2135, %v2197
      %v2214 = vmul.f32 %v2137, %v2198
      %v2215 = vmul.f32 %v2139, %v2199
      %v2216 = vmul.f32 %v2141, %v2200
      %v2217 = vmul.f32 %v2143, %v2201
      %v2218 = vmul.f32 %v2145, %v2202
      %v2219 = vmul.f32 %v2147, %v2203
      %v2220 = vmul.f32 %v2149, %v2204
      %v2221 = vmul.f32 %v2151, %v2205
      %v2222 = vmul.f32 %v2153, %v2206
      %v2223 = vmul.f32 %v2155, %v2207
      %v2224 = vpack.c.bf16 %v2209, %v2208
      %v2225 = vpack.c.bf16 %v2211, %v2210
      %v2226 = vpack.c.bf16 %v2213, %v2212
      %v2227 = vpack.c.bf16 %v2215, %v2214
      %v2228 = vpack.c.bf16 %v2217, %v2216
      %v2229 = vpack.c.bf16 %v2219, %v2218
      %v2230 = vpack.c.bf16 %v2221, %v2220
      %v2231 = vpack.c.bf16 %v2223, %v2222
      %2232 = vrot.lane.b32.xlu0 %v1212, 120
      %v2233 = vpop.permute.xlu0 %2232
      %2234 = vrot.lane.b32.xlu0 %v1213, 120
      %v2235 = vpop.permute.xlu0 %2234
      %2236 = vrot.lane.b32.xlu0 %v1214, 120
      %v2237 = vpop.permute.xlu0 %2236
      %2238 = vrot.lane.b32.xlu0 %v1215, 120
      %v2239 = vpop.permute.xlu0 %2238
      %2240 = vrot.lane.b32.xlu0 %v1216, 120
      %v2241 = vpop.permute.xlu0 %2240
      %2242 = vrot.lane.b32.xlu0 %v1217, 120
      %v2243 = vpop.permute.xlu0 %2242
      %2244 = vrot.lane.b32.xlu0 %v1218, 120
      %v2245 = vpop.permute.xlu0 %2244
      %2246 = vrot.lane.b32.xlu0 %v1219, 120
      %v2247 = vpop.permute.xlu0 %2246
      %2256 = vmatprep.subr.bf16.mxu0 0
      %2257 = vmatpush1.bf16.msra.mxu0 %v2247
      %2258 = vmatprep.subr.bf16.mxu0 0
      %2259 = vmatpush1.bf16.msra.mxu0 %v2245
      %2260 = vmatprep.subr.bf16.mxu0 0
      %2261 = vmatpush1.bf16.msra.mxu0 %v2243
      %2262 = vmatprep.subr.bf16.mxu0 0
      %2263 = vmatpush1.bf16.msra.mxu0 %v2241
      %2264 = vmatprep.subr.bf16.mxu0 0
      %2265 = vmatpush1.bf16.msra.mxu0 %v2239
      %2266 = vmatprep.subr.bf16.mxu0 0
      %2267 = vmatpush1.bf16.msra.mxu0 %v2237
      %2268 = vmatprep.subr.bf16.mxu0 0
      %2269 = vmatpush1.bf16.msra.mxu0 %v2235
      %2270 = vmatprep.subr.bf16.mxu0 0
      %2271 = vmatpush1.bf16.msra.mxu0 %v2233
      %2272 = vmatprep.subr.bf16.mxu0 0
      %2273 = vmatpush2.bf16.msra.mxu0 0
      %2274 = vmatprep.subr.bf16.mxu0 0
      %2275 = vmatpush2.bf16.msra.mxu0 0
      %2276 = vmatprep.subr.bf16.mxu0 0
      %2277 = vmatpush2.bf16.msra.mxu0 0
      %2278 = vmatprep.subr.bf16.mxu0 0
      %2279 = vmatpush2.bf16.msra.mxu0 0
      %2280 = vmatprep.subr.bf16.mxu0 0
      %2281 = vmatpush2.bf16.msra.mxu0 0
      %2282 = vmatprep.subr.bf16.mxu0 0
      %2283 = vmatpush2.bf16.msra.mxu0 0
      %2284 = vmatprep.subr.bf16.mxu0 0
      %2285 = vmatpush2.bf16.msra.mxu0 0
      %2286 = vmatprep.subr.bf16.mxu0 0
      %2287 = vmatpush2.bf16.msra.mxu0 0
      %2288 = vmatprep.mubr.bf16.mxu0 0
      %2289 = vmatmul.mubr.bf16.gmra.mxu0 %v2224
      %v2290 = vpop.f32.mrf.mxu0
      %v2291 = vadd.f32 0.0, %v2290
      %v2292 = vpop.f32.mrf.mxu0
      %v2293 = vpop.f32.mrf.mxu0
      %v2294 = vadd.f32 0.0, %v2293
      %v2295 = vpop.f32.mrf.mxu0
      %2296 = vmatprep.mubr.bf16.mxu0 0
      %2297 = vmatmul.mubr.bf16.gmra.mxu0 %v2225
      %v2298 = vpop.f32.mrf.mxu0
      %v2299 = vadd.f32 0.0, %v2298
      %v2300 = vpop.f32.mrf.mxu0
      %v2301 = vpop.f32.mrf.mxu0
      %v2302 = vadd.f32 0.0, %v2301
      %v2303 = vpop.f32.mrf.mxu0
      %2304 = vdwg.mxu0
      %2305 = vrot.lane.b32.xlu0 %v1309, 120
      %v2306 = vpop.permute.xlu0 %2305
      %2307 = vrot.lane.b32.xlu0 %v1310, 120
      %v2308 = vpop.permute.xlu0 %2307
      %2309 = vrot.lane.b32.xlu0 %v1311, 120
      %v2310 = vpop.permute.xlu0 %2309
      %2311 = vrot.lane.b32.xlu0 %v1312, 120
      %v2312 = vpop.permute.xlu0 %2311
      %2313 = vrot.lane.b32.xlu0 %v1313, 120
      %v2314 = vpop.permute.xlu0 %2313
      %2315 = vrot.lane.b32.xlu0 %v1314, 120
      %v2316 = vpop.permute.xlu0 %2315
      %2317 = vrot.lane.b32.xlu0 %v1315, 120
      %v2318 = vpop.permute.xlu0 %2317
      %2319 = vrot.lane.b32.xlu0 %v1316, 120
      %v2320 = vpop.permute.xlu0 %2319
      %2329 = vmatprep.subr.bf16.mxu0 0
      %2330 = vmatpush1.bf16.msra.mxu0 %v2320
      %2331 = vmatprep.subr.bf16.mxu0 0
      %2332 = vmatpush1.bf16.msra.mxu0 %v2318
      %2333 = vmatprep.subr.bf16.mxu0 0
      %2334 = vmatpush1.bf16.msra.mxu0 %v2316
      %2335 = vmatprep.subr.bf16.mxu0 0
      %2336 = vmatpush1.bf16.msra.mxu0 %v2314
      %2337 = vmatprep.subr.bf16.mxu0 0
      %2338 = vmatpush1.bf16.msra.mxu0 %v2312
      %2339 = vmatprep.subr.bf16.mxu0 0
      %2340 = vmatpush1.bf16.msra.mxu0 %v2310
      %2341 = vmatprep.subr.bf16.mxu0 0
      %2342 = vmatpush1.bf16.msra.mxu0 %v2308
      %2343 = vmatprep.subr.bf16.mxu0 0
      %2344 = vmatpush1.bf16.msra.mxu0 %v2306
      %2345 = vmatprep.subr.bf16.mxu0 0
      %2346 = vmatpush2.bf16.msra.mxu0 0
      %2347 = vmatprep.subr.bf16.mxu0 0
      %2348 = vmatpush2.bf16.msra.mxu0 0
      %2349 = vmatprep.subr.bf16.mxu0 0
      %2350 = vmatpush2.bf16.msra.mxu0 0
      %2351 = vmatprep.subr.bf16.mxu0 0
      %2352 = vmatpush2.bf16.msra.mxu0 0
      %2353 = vmatprep.subr.bf16.mxu0 0
      %2354 = vmatpush2.bf16.msra.mxu0 0
      %2355 = vmatprep.subr.bf16.mxu0 0
      %2356 = vmatpush2.bf16.msra.mxu0 0
      %2357 = vmatprep.subr.bf16.mxu0 0
      %2358 = vmatpush2.bf16.msra.mxu0 0
      %2359 = vmatprep.subr.bf16.mxu0 0
      %2360 = vmatpush2.bf16.msra.mxu0 0
      %2361 = vmatprep.mubr.bf16.mxu0 0
      %2362 = vmatmul.mubr.bf16.gmra.mxu0 %v2226
      %v2363 = vpop.f32.mrf.mxu0
      %v2364 = vadd.f32 0.0, %v2363
      %v2365 = vpop.f32.mrf.mxu0
      %v2366 = vpop.f32.mrf.mxu0
      %v2367 = vadd.f32 0.0, %v2366
      %v2368 = vpop.f32.mrf.mxu0
      %2369 = vmatprep.mubr.bf16.mxu0 0
      %2370 = vmatmul.mubr.bf16.gmra.mxu0 %v2227
      %v2371 = vpop.f32.mrf.mxu0
      %v2372 = vadd.f32 0.0, %v2371
      %v2373 = vpop.f32.mrf.mxu0
      %v2374 = vpop.f32.mrf.mxu0
      %v2375 = vadd.f32 0.0, %v2374
      %v2376 = vpop.f32.mrf.mxu0
      %2377 = vdwg.mxu0
      %2378 = vrot.lane.b32.xlu0 %v1406, 120
      %v2379 = vpop.permute.xlu0 %2378
      %2380 = vrot.lane.b32.xlu0 %v1407, 120
      %v2381 = vpop.permute.xlu0 %2380
      %2382 = vrot.lane.b32.xlu0 %v1408, 120
      %v2383 = vpop.permute.xlu0 %2382
      %2384 = vrot.lane.b32.xlu0 %v1409, 120
      %v2385 = vpop.permute.xlu0 %2384
      %2386 = vrot.lane.b32.xlu0 %v1410, 120
      %v2387 = vpop.permute.xlu0 %2386
      %2388 = vrot.lane.b32.xlu0 %v1411, 120
      %v2389 = vpop.permute.xlu0 %2388
      %2390 = vrot.lane.b32.xlu0 %v1412, 120
      %v2391 = vpop.permute.xlu0 %2390
      %2392 = vrot.lane.b32.xlu0 %v1413, 120
      %v2393 = vpop.permute.xlu0 %2392
      %2402 = vmatprep.subr.bf16.mxu0 0
      %2403 = vmatpush1.bf16.msra.mxu0 %v2393
      %2404 = vmatprep.subr.bf16.mxu0 0
      %2405 = vmatpush1.bf16.msra.mxu0 %v2391
      %2406 = vmatprep.subr.bf16.mxu0 0
      %2407 = vmatpush1.bf16.msra.mxu0 %v2389
      %2408 = vmatprep.subr.bf16.mxu0 0
      %2409 = vmatpush1.bf16.msra.mxu0 %v2387
      %2410 = vmatprep.subr.bf16.mxu0 0
      %2411 = vmatpush1.bf16.msra.mxu0 %v2385
      %2412 = vmatprep.subr.bf16.mxu0 0
      %2413 = vmatpush1.bf16.msra.mxu0 %v2383
      %2414 = vmatprep.subr.bf16.mxu0 0
      %2415 = vmatpush1.bf16.msra.mxu0 %v2381
      %2416 = vmatprep.subr.bf16.mxu0 0
      %2417 = vmatpush1.bf16.msra.mxu0 %v2379
      %2418 = vmatprep.subr.bf16.mxu0 0
      %2419 = vmatpush2.bf16.msra.mxu0 0
      %2420 = vmatprep.subr.bf16.mxu0 0
      %2421 = vmatpush2.bf16.msra.mxu0 0
      %2422 = vmatprep.subr.bf16.mxu0 0
      %2423 = vmatpush2.bf16.msra.mxu0 0
      %2424 = vmatprep.subr.bf16.mxu0 0
      %2425 = vmatpush2.bf16.msra.mxu0 0
      %2426 = vmatprep.subr.bf16.mxu0 0
      %2427 = vmatpush2.bf16.msra.mxu0 0
      %2428 = vmatprep.subr.bf16.mxu0 0
      %2429 = vmatpush2.bf16.msra.mxu0 0
      %2430 = vmatprep.subr.bf16.mxu0 0
      %2431 = vmatpush2.bf16.msra.mxu0 0
      %2432 = vmatprep.subr.bf16.mxu0 0
      %2433 = vmatpush2.bf16.msra.mxu0 0
      %2434 = vmatprep.mubr.bf16.mxu0 0
      %2435 = vmatmul.mubr.bf16.gmra.mxu0 %v2228
      %v2436 = vpop.f32.mrf.mxu0
      %v2437 = vadd.f32 0.0, %v2436
      %v2438 = vpop.f32.mrf.mxu0
      %v2439 = vpop.f32.mrf.mxu0
      %v2440 = vadd.f32 0.0, %v2439
      %v2441 = vpop.f32.mrf.mxu0
      %2442 = vmatprep.mubr.bf16.mxu0 0
      %2443 = vmatmul.mubr.bf16.gmra.mxu0 %v2229
      %v2444 = vpop.f32.mrf.mxu0
      %v2445 = vadd.f32 0.0, %v2444
      %v2446 = vpop.f32.mrf.mxu0
      %v2447 = vpop.f32.mrf.mxu0
      %v2448 = vadd.f32 0.0, %v2447
      %v2449 = vpop.f32.mrf.mxu0
      %2450 = vdwg.mxu0
      %2451 = vrot.lane.b32.xlu0 %v1503, 120
      %v2452 = vpop.permute.xlu0 %2451
      %2453 = vrot.lane.b32.xlu0 %v1504, 120
      %v2454 = vpop.permute.xlu0 %2453
      %2455 = vrot.lane.b32.xlu0 %v1505, 120
      %v2456 = vpop.permute.xlu0 %2455
      %2457 = vrot.lane.b32.xlu0 %v1506, 120
      %v2458 = vpop.permute.xlu0 %2457
      %2459 = vrot.lane.b32.xlu0 %v1507, 120
      %v2460 = vpop.permute.xlu0 %2459
      %2461 = vrot.lane.b32.xlu0 %v1508, 120
      %v2462 = vpop.permute.xlu0 %2461
      %2463 = vrot.lane.b32.xlu0 %v1509, 120
      %v2464 = vpop.permute.xlu0 %2463
      %2465 = vrot.lane.b32.xlu0 %v1510, 120
      %v2466 = vpop.permute.xlu0 %2465
      %2475 = vmatprep.subr.bf16.mxu0 0
      %2476 = vmatpush1.bf16.msra.mxu0 %v2466
      %2477 = vmatprep.subr.bf16.mxu0 0
      %2478 = vmatpush1.bf16.msra.mxu0 %v2464
      %2479 = vmatprep.subr.bf16.mxu0 0
      %2480 = vmatpush1.bf16.msra.mxu0 %v2462
      %2481 = vmatprep.subr.bf16.mxu0 0
      %2482 = vmatpush1.bf16.msra.mxu0 %v2460
      %2483 = vmatprep.subr.bf16.mxu0 0
      %2484 = vmatpush1.bf16.msra.mxu0 %v2458
      %2485 = vmatprep.subr.bf16.mxu0 0
      %2486 = vmatpush1.bf16.msra.mxu0 %v2456
      %2487 = vmatprep.subr.bf16.mxu0 0
      %2488 = vmatpush1.bf16.msra.mxu0 %v2454
      %2489 = vmatprep.subr.bf16.mxu0 0
      %2490 = vmatpush1.bf16.msra.mxu0 %v2452
      %2491 = vmatprep.subr.bf16.mxu0 0
      %2492 = vmatpush2.bf16.msra.mxu0 0
      %2493 = vmatprep.subr.bf16.mxu0 0
      %2494 = vmatpush2.bf16.msra.mxu0 0
      %2495 = vmatprep.subr.bf16.mxu0 0
      %2496 = vmatpush2.bf16.msra.mxu0 0
      %2497 = vmatprep.subr.bf16.mxu0 0
      %2498 = vmatpush2.bf16.msra.mxu0 0
      %2499 = vmatprep.subr.bf16.mxu0 0
      %2500 = vmatpush2.bf16.msra.mxu0 0
      %2501 = vmatprep.subr.bf16.mxu0 0
      %2502 = vmatpush2.bf16.msra.mxu0 0
      %2503 = vmatprep.subr.bf16.mxu0 0
      %2504 = vmatpush2.bf16.msra.mxu0 0
      %2505 = vmatprep.subr.bf16.mxu0 0
      %2506 = vmatpush2.bf16.msra.mxu0 0
      %2507 = vmatprep.mubr.bf16.mxu0 0
      %2508 = vmatmul.mubr.bf16.gmra.mxu0 %v2230
      %v2509 = vpop.f32.mrf.mxu0
      %v2510 = vadd.f32 0.0, %v2509
      %v2511 = vpop.f32.mrf.mxu0
      %v2512 = vpop.f32.mrf.mxu0
      %v2513 = vadd.f32 0.0, %v2512
      %v2514 = vpop.f32.mrf.mxu0
      %2515 = vmatprep.mubr.bf16.mxu0 0
      %2516 = vmatmul.mubr.bf16.gmra.mxu0 %v2231
      %v2517 = vpop.f32.mrf.mxu0
      %v2518 = vadd.f32 0.0, %v2517
      %v2519 = vpop.f32.mrf.mxu0
      %v2520 = vpop.f32.mrf.mxu0
      %v2521 = vadd.f32 0.0, %v2520
      %v2522 = vpop.f32.mrf.mxu0
      %2523 = vdwg.mxu0
      %v2524 = vpack.c.bf16 %v2294, %v2291
      %v2525 = vpack.c.bf16 %v2302, %v2299
      %v2526 = vpack.c.bf16 %v2367, %v2364
      %v2527 = vpack.c.bf16 %v2375, %v2372
      %v2528 = vpack.c.bf16 %v2440, %v2437
      %v2529 = vpack.c.bf16 %v2448, %v2445
      %v2530 = vpack.c.bf16 %v2513, %v2510
      %v2531 = vpack.c.bf16 %v2521, %v2518
      %v2540 = vunpack.c.l.b16 %v2524
      %v2541 = vunpack.c.h.b16 %v2524
      %v2542 = vunpack.c.l.b16 %v2525
      %v2543 = vunpack.c.h.b16 %v2525
      %v2544 = vunpack.c.l.b16 %v2526
      %v2545 = vunpack.c.h.b16 %v2526
      %v2546 = vunpack.c.l.b16 %v2527
      %v2547 = vunpack.c.h.b16 %v2527
      %v2548 = vunpack.c.l.b16 %v2528
      %v2549 = vunpack.c.h.b16 %v2528
      %v2550 = vunpack.c.l.b16 %v2529
      %v2551 = vunpack.c.h.b16 %v2529
      %v2552 = vunpack.c.l.b16 %v2530
      %v2553 = vunpack.c.h.b16 %v2530
      %v2554 = vunpack.c.l.b16 %v2531
      %v2555 = vunpack.c.h.b16 %v2531
      %v2556 = vpack.c.b16 %v2540, %v2540
      %v2557 = vpack.c.b16 %v2541, %v2541
      %v2558 = vpack.c.b16 %v2542, %v2542
      %v2559 = vpack.c.b16 %v2543, %v2543
      %v2560 = vpack.c.b16 %v2544, %v2544
      %v2561 = vpack.c.b16 %v2545, %v2545
      %v2562 = vpack.c.b16 %v2546, %v2546
      %v2563 = vpack.c.b16 %v2547, %v2547
      %v2564 = vpack.c.b16 %v2548, %v2548
      %v2565 = vpack.c.b16 %v2549, %v2549
      %v2566 = vpack.c.b16 %v2550, %v2550
      %v2567 = vpack.c.b16 %v2551, %v2551
      %v2568 = vpack.c.b16 %v2552, %v2552
      %v2569 = vpack.c.b16 %v2553, %v2553
      %v2570 = vpack.c.b16 %v2554, %v2554
      %v2571 = vpack.c.b16 %v2555, %v2555
      %2572 = vrot.lane.b32.xlu0 %v2556, 8
      %v2573 = vpop.permute.xlu0 %2572
      %2574 = vrot.lane.b32.xlu0 %v2557, 8
      %v2575 = vpop.permute.xlu0 %2574
      %2576 = vrot.lane.b32.xlu0 %v2558, 8
      %v2577 = vpop.permute.xlu0 %2576
      %2578 = vrot.lane.b32.xlu0 %v2559, 8
      %v2579 = vpop.permute.xlu0 %2578
      %2580 = vrot.lane.b32.xlu0 %v2560, 8
      %v2581 = vpop.permute.xlu0 %2580
      %2582 = vrot.lane.b32.xlu0 %v2561, 8
      %v2583 = vpop.permute.xlu0 %2582
      %2584 = vrot.lane.b32.xlu0 %v2562, 8
      %v2585 = vpop.permute.xlu0 %2584
      %2586 = vrot.lane.b32.xlu0 %v2563, 8
      %v2587 = vpop.permute.xlu0 %2586
      %2588 = vrot.lane.b32.xlu0 %v2564, 8
      %v2589 = vpop.permute.xlu0 %2588
      %2590 = vrot.lane.b32.xlu0 %v2565, 8
      %v2591 = vpop.permute.xlu0 %2590
      %2592 = vrot.lane.b32.xlu0 %v2566, 8
      %v2593 = vpop.permute.xlu0 %2592
      %2594 = vrot.lane.b32.xlu0 %v2567, 8
      %v2595 = vpop.permute.xlu0 %2594
      %2596 = vrot.lane.b32.xlu0 %v2568, 8
      %v2597 = vpop.permute.xlu0 %2596
      %2598 = vrot.lane.b32.xlu0 %v2569, 8
      %v2599 = vpop.permute.xlu0 %2598
      %2600 = vrot.lane.b32.xlu0 %v2570, 8
      %v2601 = vpop.permute.xlu0 %2600
      %2602 = vrot.lane.b32.xlu0 %v2571, 8
      %v2603 = vpop.permute.xlu0 %2602
      %vm2620 = vcmask 126016
      %2621 = vst.msk [vmem:[%s254] sm:$0xf] %vm2620, %v2573
      %2622 = vst.msk [vmem:[%s254 + $0x4] sm:$0xf] %vm2620, %v2575
      %2623 = vst.msk [vmem:[%s254 + $0x8] sm:$0xf] %vm2620, %v2577
      %vm2624 = vcmask 122944
      %vm2625 = vmand %vm2624, %vm1637
      %v2626 = vld [vmem:[%s254 + $0xc] sm:$0x1]
      %v2627 = vsel %vm2625, %v2579, %v2626
      %2628 = vst [vmem:[%s254 + $0xc] sm:$0x1] %v2627
      %2629 = vst.msk [vmem:[%s254 + $0x10] sm:$0xf] %vm2620, %v2581
      %2630 = vst.msk [vmem:[%s254 + $0x14] sm:$0xf] %vm2620, %v2583
      %2631 = vst.msk [vmem:[%s254 + $0x18] sm:$0xf] %vm2620, %v2585
      %v2632 = vld [vmem:[%s254 + $0x1c] sm:$0x1]
      %v2633 = vsel %vm2625, %v2587, %v2632
      %2634 = vst [vmem:[%s254 + $0x1c] sm:$0x1] %v2633
      %2635 = vst.msk [vmem:[%s254 + $0x20] sm:$0xf] %vm2620, %v2589
      %2636 = vst.msk [vmem:[%s254 + $0x24] sm:$0xf] %vm2620, %v2591
      %2637 = vst.msk [vmem:[%s254 + $0x28] sm:$0xf] %vm2620, %v2593
      %v2638 = vld [vmem:[%s254 + $0x2c] sm:$0x1]
      %v2639 = vsel %vm2625, %v2595, %v2638
      %2640 = vst [vmem:[%s254 + $0x2c] sm:$0x1] %v2639
      %2641 = vst.msk [vmem:[%s254 + $0x30] sm:$0xf] %vm2620, %v2597
      %2642 = vst.msk [vmem:[%s254 + $0x34] sm:$0xf] %vm2620, %v2599
      %2643 = vst.msk [vmem:[%s254 + $0x38] sm:$0xf] %vm2620, %v2601
      %v2644 = vld [vmem:[%s254 + $0x3c] sm:$0x1]
      %v2645 = vsel %vm2625, %v2603, %v2644
      %2646 = vst [vmem:[%s254 + $0x3c] sm:$0x1] %v2645
      %2647 = vrot.lane.b32.xlu0 %v492, 112
      %v2648 = vpop.permute.xlu0 %2647
      %2649 = vrot.lane.b32.xlu0 %v493, 112
      %v2650 = vpop.permute.xlu0 %2649
      %2651 = vrot.lane.b32.xlu0 %v526, 112
      %v2652 = vpop.permute.xlu0 %2651
      %2653 = vrot.lane.b32.xlu0 %v527, 112
      %v2654 = vpop.permute.xlu0 %2653
      %2655 = vrot.lane.b32.xlu0 %v528, 112
      %v2656 = vpop.permute.xlu0 %2655
      %2657 = vrot.lane.b32.xlu0 %v529, 112
      %v2658 = vpop.permute.xlu0 %2657
      %2659 = vrot.lane.b32.xlu0 %v530, 112
      %v2660 = vpop.permute.xlu0 %2659
      %2661 = vrot.lane.b32.xlu0 %v531, 112
      %v2662 = vpop.permute.xlu0 %2661
      %2663 = vrot.lane.b32.xlu0 %v532, 112
      %v2664 = vpop.permute.xlu0 %2663
      %2665 = vrot.lane.b32.xlu0 %v533, 112
      %v2666 = vpop.permute.xlu0 %2665
      %v2668 = vsel %vm534, %v2648, 0
      %v2671 = vsel %vm534, %v2650, 0
      %v2674 = vsel %vm534, %v2652, 0
      %v2677 = vsel %vm534, %v2654, 0
      %v2680 = vsel %vm534, %v2656, 0
      %v2683 = vsel %vm534, %v2658, 0
      %v2686 = vsel %vm534, %v2660, 0
      %v2689 = vsel %vm534, %v2662, 0
      %v2692 = vsel %vm534, %v2664, 0
      %v2695 = vsel %vm534, %v2666, 0
      %2697 = vmatprep.subr.bf16.mxu0 0
      %2698 = vmatpush1.bf16.xpose.msra.mxu0 %v2695
      %2699 = vmatprep.subr.bf16.mxu0 0
      %2700 = vmatpush1.bf16.xpose.msra.mxu0 %v2692
      %2701 = vmatprep.subr.bf16.mxu0 0
      %2702 = vmatpush1.bf16.xpose.msra.mxu0 %v2689
      %2703 = vmatprep.subr.bf16.mxu0 0
      %2704 = vmatpush1.bf16.xpose.msra.mxu0 %v2686
      %2705 = vmatprep.subr.bf16.mxu0 0
      %2706 = vmatpush1.bf16.xpose.msra.mxu0 %v2683
      %2707 = vmatprep.subr.bf16.mxu0 0
      %2708 = vmatpush1.bf16.xpose.msra.mxu0 %v2680
      %2709 = vmatprep.subr.bf16.mxu0 0
      %2710 = vmatpush1.bf16.xpose.msra.mxu0 %v2677
      %2711 = vmatprep.subr.bf16.mxu0 0
      %2712 = vmatpush1.bf16.xpose.msra.mxu0 %v2674
      %2713 = vmatprep.subr.bf16.mxu0 0
      %2714 = vmatpush2.bf16.xpose.msra.mxu0 0
      %2715 = vmatprep.subr.bf16.mxu0 0
      %2716 = vmatpush2.bf16.xpose.msra.mxu0 0
      %2717 = vmatprep.subr.bf16.mxu0 0
      %2718 = vmatpush2.bf16.xpose.msra.mxu0 0
      %2719 = vmatprep.subr.bf16.mxu0 0
      %2720 = vmatpush2.bf16.xpose.msra.mxu0 0
      %2721 = vmatprep.subr.bf16.mxu0 0
      %2722 = vmatpush2.bf16.xpose.msra.mxu0 0
      %2723 = vmatprep.subr.bf16.mxu0 0
      %2724 = vmatpush2.bf16.xpose.msra.mxu0 0
      %2725 = vmatprep.subr.bf16.mxu0 0
      %2726 = vmatpush2.bf16.xpose.msra.mxu0 0
      %2727 = vmatprep.subr.bf16.mxu0 0
      %2728 = vmatpush2.bf16.xpose.msra.mxu0 0
      %2729 = vmatprep.mubr.bf16.mxu0 0
      %2730 = vmatmul.mubr.bf16.gmra.mxu0 %v2668
      %v2731 = vpop.f32.mrf.mxu0
      %v2732 = vadd.f32 0.0, %v2731
      %v2733 = vpop.f32.mrf.mxu0
      %v2734 = vpop.f32.mrf.mxu0
      %v2735 = vadd.f32 0.0, %v2734
      %v2736 = vpop.f32.mrf.mxu0
      %2737 = vmatprep.mubr.bf16.mxu0 0
      %2738 = vmatmul.mubr.bf16.gmra.mxu0 %v2671
      %v2739 = vpop.f32.mrf.mxu0
      %v2740 = vadd.f32 0.0, %v2739
      %v2741 = vpop.f32.mrf.mxu0
      %v2742 = vpop.f32.mrf.mxu0
      %v2743 = vadd.f32 0.0, %v2742
      %v2744 = vpop.f32.mrf.mxu0
      %2745 = vdwg.mxu0
      %2746 = vrot.lane.b32.xlu0 %v622, 112
      %v2747 = vpop.permute.xlu0 %2746
      %2748 = vrot.lane.b32.xlu0 %v623, 112
      %v2749 = vpop.permute.xlu0 %2748
      %2750 = vrot.lane.b32.xlu0 %v656, 112
      %v2751 = vpop.permute.xlu0 %2750
      %2752 = vrot.lane.b32.xlu0 %v657, 112
      %v2753 = vpop.permute.xlu0 %2752
      %2754 = vrot.lane.b32.xlu0 %v658, 112
      %v2755 = vpop.permute.xlu0 %2754
      %2756 = vrot.lane.b32.xlu0 %v659, 112
      %v2757 = vpop.permute.xlu0 %2756
      %2758 = vrot.lane.b32.xlu0 %v660, 112
      %v2759 = vpop.permute.xlu0 %2758
      %2760 = vrot.lane.b32.xlu0 %v661, 112
      %v2761 = vpop.permute.xlu0 %2760
      %2762 = vrot.lane.b32.xlu0 %v662, 112
      %v2763 = vpop.permute.xlu0 %2762
      %2764 = vrot.lane.b32.xlu0 %v663, 112
      %v2765 = vpop.permute.xlu0 %2764
      %v2767 = vsel %vm534, %v2747, 0
      %v2770 = vsel %vm534, %v2749, 0
      %v2773 = vsel %vm534, %v2751, 0
      %v2776 = vsel %vm534, %v2753, 0
      %v2779 = vsel %vm534, %v2755, 0
      %v2782 = vsel %vm534, %v2757, 0
      %v2785 = vsel %vm534, %v2759, 0
      %v2788 = vsel %vm534, %v2761, 0
      %v2791 = vsel %vm534, %v2763, 0
      %v2794 = vsel %vm534, %v2765, 0
      %2796 = vmatprep.subr.bf16.mxu0 0
      %2797 = vmatpush1.bf16.xpose.msra.mxu0 %v2794
      %2798 = vmatprep.subr.bf16.mxu0 0
      %2799 = vmatpush1.bf16.xpose.msra.mxu0 %v2791
      %2800 = vmatprep.subr.bf16.mxu0 0
      %2801 = vmatpush1.bf16.xpose.msra.mxu0 %v2788
      %2802 = vmatprep.subr.bf16.mxu0 0
      %2803 = vmatpush1.bf16.xpose.msra.mxu0 %v2785
      %2804 = vmatprep.subr.bf16.mxu0 0
      %2805 = vmatpush1.bf16.xpose.msra.mxu0 %v2782
      %2806 = vmatprep.subr.bf16.mxu0 0
      %2807 = vmatpush1.bf16.xpose.msra.mxu0 %v2779
      %2808 = vmatprep.subr.bf16.mxu0 0
      %2809 = vmatpush1.bf16.xpose.msra.mxu0 %v2776
      %2810 = vmatprep.subr.bf16.mxu0 0
      %2811 = vmatpush1.bf16.xpose.msra.mxu0 %v2773
      %2812 = vmatprep.subr.bf16.mxu0 0
      %2813 = vmatpush2.bf16.xpose.msra.mxu0 0
      %2814 = vmatprep.subr.bf16.mxu0 0
      %2815 = vmatpush2.bf16.xpose.msra.mxu0 0
      %2816 = vmatprep.subr.bf16.mxu0 0
      %2817 = vmatpush2.bf16.xpose.msra.mxu0 0
      %2818 = vmatprep.subr.bf16.mxu0 0
      %2819 = vmatpush2.bf16.xpose.msra.mxu0 0
      %2820 = vmatprep.subr.bf16.mxu0 0
      %2821 = vmatpush2.bf16.xpose.msra.mxu0 0
      %2822 = vmatprep.subr.bf16.mxu0 0
      %2823 = vmatpush2.bf16.xpose.msra.mxu0 0
      %2824 = vmatprep.subr.bf16.mxu0 0
      %2825 = vmatpush2.bf16.xpose.msra.mxu0 0
      %2826 = vmatprep.subr.bf16.mxu0 0
      %2827 = vmatpush2.bf16.xpose.msra.mxu0 0
      %2828 = vmatprep.mubr.bf16.mxu0 0
      %2829 = vmatmul.mubr.bf16.gmra.mxu0 %v2767
      %v2830 = vpop.f32.mrf.mxu0
      %v2831 = vadd.f32 0.0, %v2830
      %v2832 = vpop.f32.mrf.mxu0
      %v2833 = vpop.f32.mrf.mxu0
      %v2834 = vadd.f32 0.0, %v2833
      %v2835 = vpop.f32.mrf.mxu0
      %2836 = vmatprep.mubr.bf16.mxu0 0
      %2837 = vmatmul.mubr.bf16.gmra.mxu0 %v2770
      %v2838 = vpop.f32.mrf.mxu0
      %v2839 = vadd.f32 0.0, %v2838
      %v2840 = vpop.f32.mrf.mxu0
      %v2841 = vpop.f32.mrf.mxu0
      %v2842 = vadd.f32 0.0, %v2841
      %v2843 = vpop.f32.mrf.mxu0
      %2844 = vdwg.mxu0
      %2845 = vrot.lane.b32.xlu0 %v751, 112
      %v2846 = vpop.permute.xlu0 %2845
      %2847 = vrot.lane.b32.xlu0 %v752, 112
      %v2848 = vpop.permute.xlu0 %2847
      %2849 = vrot.lane.b32.xlu0 %v785, 112
      %v2850 = vpop.permute.xlu0 %2849
      %2851 = vrot.lane.b32.xlu0 %v786, 112
      %v2852 = vpop.permute.xlu0 %2851
      %2853 = vrot.lane.b32.xlu0 %v787, 112
      %v2854 = vpop.permute.xlu0 %2853
      %2855 = vrot.lane.b32.xlu0 %v788, 112
      %v2856 = vpop.permute.xlu0 %2855
      %2857 = vrot.lane.b32.xlu0 %v789, 112
      %v2858 = vpop.permute.xlu0 %2857
      %2859 = vrot.lane.b32.xlu0 %v790, 112
      %v2860 = vpop.permute.xlu0 %2859
      %2861 = vrot.lane.b32.xlu0 %v791, 112
      %v2862 = vpop.permute.xlu0 %2861
      %2863 = vrot.lane.b32.xlu0 %v792, 112
      %v2864 = vpop.permute.xlu0 %2863
      %v2866 = vsel %vm534, %v2846, 0
      %v2869 = vsel %vm534, %v2848, 0
      %v2872 = vsel %vm534, %v2850, 0
      %v2875 = vsel %vm534, %v2852, 0
      %v2878 = vsel %vm534, %v2854, 0
      %v2881 = vsel %vm534, %v2856, 0
      %v2884 = vsel %vm534, %v2858, 0
      %v2887 = vsel %vm534, %v2860, 0
      %v2890 = vsel %vm534, %v2862, 0
      %v2893 = vsel %vm534, %v2864, 0
      %2895 = vmatprep.subr.bf16.mxu0 0
      %2896 = vmatpush1.bf16.xpose.msra.mxu0 %v2893
      %2897 = vmatprep.subr.bf16.mxu0 0
      %2898 = vmatpush1.bf16.xpose.msra.mxu0 %v2890
      %2899 = vmatprep.subr.bf16.mxu0 0
      %2900 = vmatpush1.bf16.xpose.msra.mxu0 %v2887
      %2901 = vmatprep.subr.bf16.mxu0 0
      %2902 = vmatpush1.bf16.xpose.msra.mxu0 %v2884
      %2903 = vmatprep.subr.bf16.mxu0 0
      %2904 = vmatpush1.bf16.xpose.msra.mxu0 %v2881
      %2905 = vmatprep.subr.bf16.mxu0 0
      %2906 = vmatpush1.bf16.xpose.msra.mxu0 %v2878
      %2907 = vmatprep.subr.bf16.mxu0 0
      %2908 = vmatpush1.bf16.xpose.msra.mxu0 %v2875
      %2909 = vmatprep.subr.bf16.mxu0 0
      %2910 = vmatpush1.bf16.xpose.msra.mxu0 %v2872
      %2911 = vmatprep.subr.bf16.mxu0 0
      %2912 = vmatpush2.bf16.xpose.msra.mxu0 0
      %2913 = vmatprep.subr.bf16.mxu0 0
      %2914 = vmatpush2.bf16.xpose.msra.mxu0 0
      %2915 = vmatprep.subr.bf16.mxu0 0
      %2916 = vmatpush2.bf16.xpose.msra.mxu0 0
      %2917 = vmatprep.subr.bf16.mxu0 0
      %2918 = vmatpush2.bf16.xpose.msra.mxu0 0
      %2919 = vmatprep.subr.bf16.mxu0 0
      %2920 = vmatpush2.bf16.xpose.msra.mxu0 0
      %2921 = vmatprep.subr.bf16.mxu0 0
      %2922 = vmatpush2.bf16.xpose.msra.mxu0 0
      %2923 = vmatprep.subr.bf16.mxu0 0
      %2924 = vmatpush2.bf16.xpose.msra.mxu0 0
      %2925 = vmatprep.subr.bf16.mxu0 0
      %2926 = vmatpush2.bf16.xpose.msra.mxu0 0
      %2927 = vmatprep.mubr.bf16.mxu0 0
      %2928 = vmatmul.mubr.bf16.gmra.mxu0 %v2866
      %v2929 = vpop.f32.mrf.mxu0
      %v2930 = vadd.f32 0.0, %v2929
      %v2931 = vpop.f32.mrf.mxu0
      %v2932 = vpop.f32.mrf.mxu0
      %v2933 = vadd.f32 0.0, %v2932
      %v2934 = vpop.f32.mrf.mxu0
      %2935 = vmatprep.mubr.bf16.mxu0 0
      %2936 = vmatmul.mubr.bf16.gmra.mxu0 %v2869
      %v2937 = vpop.f32.mrf.mxu0
      %v2938 = vadd.f32 0.0, %v2937
      %v2939 = vpop.f32.mrf.mxu0
      %v2940 = vpop.f32.mrf.mxu0
      %v2941 = vadd.f32 0.0, %v2940
      %v2942 = vpop.f32.mrf.mxu0
      %2943 = vdwg.mxu0
      %2944 = vrot.lane.b32.xlu0 %v880, 112
      %v2945 = vpop.permute.xlu0 %2944
      %2946 = vrot.lane.b32.xlu0 %v881, 112
      %v2947 = vpop.permute.xlu0 %2946
      %2948 = vrot.lane.b32.xlu0 %v914, 112
      %v2949 = vpop.permute.xlu0 %2948
      %2950 = vrot.lane.b32.xlu0 %v915, 112
      %v2951 = vpop.permute.xlu0 %2950
      %2952 = vrot.lane.b32.xlu0 %v916, 112
      %v2953 = vpop.permute.xlu0 %2952
      %2954 = vrot.lane.b32.xlu0 %v917, 112
      %v2955 = vpop.permute.xlu0 %2954
      %2956 = vrot.lane.b32.xlu0 %v918, 112
      %v2957 = vpop.permute.xlu0 %2956
      %2958 = vrot.lane.b32.xlu0 %v919, 112
      %v2959 = vpop.permute.xlu0 %2958
      %2960 = vrot.lane.b32.xlu0 %v920, 112
      %v2961 = vpop.permute.xlu0 %2960
      %2962 = vrot.lane.b32.xlu0 %v921, 112
      %v2963 = vpop.permute.xlu0 %2962
      %v2965 = vsel %vm534, %v2945, 0
      %v2968 = vsel %vm534, %v2947, 0
      %v2971 = vsel %vm534, %v2949, 0
      %v2974 = vsel %vm534, %v2951, 0
      %v2977 = vsel %vm534, %v2953, 0
      %v2980 = vsel %vm534, %v2955, 0
      %v2983 = vsel %vm534, %v2957, 0
      %v2986 = vsel %vm534, %v2959, 0
      %v2989 = vsel %vm534, %v2961, 0
      %v2992 = vsel %vm534, %v2963, 0
      %2994 = vmatprep.subr.bf16.mxu0 0
      %2995 = vmatpush1.bf16.xpose.msra.mxu0 %v2992
      %2996 = vmatprep.subr.bf16.mxu0 0
      %2997 = vmatpush1.bf16.xpose.msra.mxu0 %v2989
      %2998 = vmatprep.subr.bf16.mxu0 0
      %2999 = vmatpush1.bf16.xpose.msra.mxu0 %v2986
      %3000 = vmatprep.subr.bf16.mxu0 0
      %3001 = vmatpush1.bf16.xpose.msra.mxu0 %v2983
      %3002 = vmatprep.subr.bf16.mxu0 0
      %3003 = vmatpush1.bf16.xpose.msra.mxu0 %v2980
      %3004 = vmatprep.subr.bf16.mxu0 0
      %3005 = vmatpush1.bf16.xpose.msra.mxu0 %v2977
      %3006 = vmatprep.subr.bf16.mxu0 0
      %3007 = vmatpush1.bf16.xpose.msra.mxu0 %v2974
      %3008 = vmatprep.subr.bf16.mxu0 0
      %3009 = vmatpush1.bf16.xpose.msra.mxu0 %v2971
      %3010 = vmatprep.subr.bf16.mxu0 0
      %3011 = vmatpush2.bf16.xpose.msra.mxu0 0
      %3012 = vmatprep.subr.bf16.mxu0 0
      %3013 = vmatpush2.bf16.xpose.msra.mxu0 0
      %3014 = vmatprep.subr.bf16.mxu0 0
      %3015 = vmatpush2.bf16.xpose.msra.mxu0 0
      %3016 = vmatprep.subr.bf16.mxu0 0
      %3017 = vmatpush2.bf16.xpose.msra.mxu0 0
      %3018 = vmatprep.subr.bf16.mxu0 0
      %3019 = vmatpush2.bf16.xpose.msra.mxu0 0
      %3020 = vmatprep.subr.bf16.mxu0 0
      %3021 = vmatpush2.bf16.xpose.msra.mxu0 0
      %3022 = vmatprep.subr.bf16.mxu0 0
      %3023 = vmatpush2.bf16.xpose.msra.mxu0 0
      %3024 = vmatprep.subr.bf16.mxu0 0
      %3025 = vmatpush2.bf16.xpose.msra.mxu0 0
      %3026 = vmatprep.mubr.bf16.mxu0 0
      %3027 = vmatmul.mubr.bf16.gmra.mxu0 %v2965
      %v3028 = vpop.f32.mrf.mxu0
      %v3029 = vadd.f32 0.0, %v3028
      %v3030 = vpop.f32.mrf.mxu0
      %v3031 = vpop.f32.mrf.mxu0
      %v3032 = vadd.f32 0.0, %v3031
      %v3033 = vpop.f32.mrf.mxu0
      %3034 = vmatprep.mubr.bf16.mxu0 0
      %3035 = vmatmul.mubr.bf16.gmra.mxu0 %v2968
      %v3036 = vpop.f32.mrf.mxu0
      %v3037 = vadd.f32 0.0, %v3036
      %v3038 = vpop.f32.mrf.mxu0
      %v3039 = vpop.f32.mrf.mxu0
      %v3040 = vadd.f32 0.0, %v3039
      %v3041 = vpop.f32.mrf.mxu0
      %3042 = vdwg.mxu0
      %v3043 = vsel %vm1002, %v2732, -1e+30
      %v3044 = vsel %vm1002, %v2735, -1e+30
      %v3045 = vsel %vm1002, %v2740, -1e+30
      %v3046 = vsel %vm1002, %v2743, -1e+30
      %v3047 = vsel %vm1002, %v2831, -1e+30
      %v3048 = vsel %vm1002, %v2834, -1e+30
      %v3049 = vsel %vm1002, %v2839, -1e+30
      %v3050 = vsel %vm1002, %v2842, -1e+30
      %v3051 = vsel %vm1002, %v2930, -1e+30
      %v3052 = vsel %vm1002, %v2933, -1e+30
      %v3053 = vsel %vm1002, %v2938, -1e+30
      %v3054 = vsel %vm1002, %v2941, -1e+30
      %v3055 = vsel %vm1002, %v3029, -1e+30
      %v3056 = vsel %vm1002, %v3032, -1e+30
      %v3057 = vsel %vm1002, %v3037, -1e+30
      %v3058 = vsel %vm1002, %v3040, -1e+30
      %3059 = vmax.xlane.f32.xlu0 %v3043
      %v3060 = vpop.xlane.xlu0 %3059
      %3061 = vmax.xlane.f32.xlu0 %v3044
      %v3062 = vpop.xlane.xlu0 %3061
      %3063 = vmax.xlane.f32.xlu0 %v3045
      %v3064 = vpop.xlane.xlu0 %3063
      %v3065 = vsel %vm1025, %v3046, -inf
      %3066 = vmax.xlane.f32.xlu0 %v3065
      %v3067 = vpop.xlane.xlu0 %3066
      %3068 = vmax.xlane.f32.xlu0 %v3047
      %v3069 = vpop.xlane.xlu0 %3068
      %3070 = vmax.xlane.f32.xlu0 %v3048
      %v3071 = vpop.xlane.xlu0 %3070
      %3072 = vmax.xlane.f32.xlu0 %v3049
      %v3073 = vpop.xlane.xlu0 %3072
      %v3074 = vsel %vm1025, %v3050, -inf
      %3075 = vmax.xlane.f32.xlu0 %v3074
      %v3076 = vpop.xlane.xlu0 %3075
      %3077 = vmax.xlane.f32.xlu0 %v3051
      %v3078 = vpop.xlane.xlu0 %3077
      %3079 = vmax.xlane.f32.xlu0 %v3052
      %v3080 = vpop.xlane.xlu0 %3079
      %3081 = vmax.xlane.f32.xlu0 %v3053
      %v3082 = vpop.xlane.xlu0 %3081
      %v3083 = vsel %vm1025, %v3054, -inf
      %3084 = vmax.xlane.f32.xlu0 %v3083
      %v3085 = vpop.xlane.xlu0 %3084
      %3086 = vmax.xlane.f32.xlu0 %v3055
      %v3087 = vpop.xlane.xlu0 %3086
      %3088 = vmax.xlane.f32.xlu0 %v3056
      %v3089 = vpop.xlane.xlu0 %3088
      %3090 = vmax.xlane.f32.xlu0 %v3057
      %v3091 = vpop.xlane.xlu0 %3090
      %v3092 = vsel %vm1025, %v3058, -inf
      %3093 = vmax.xlane.f32.xlu0 %v3092
      %v3094 = vpop.xlane.xlu0 %3093
      %v3095 = vsub.f32 %v3043, %v3060
      %v3096 = vsub.f32 %v3044, %v3062
      %v3097 = vsub.f32 %v3045, %v3064
      %v3098 = vsub.f32 %v3046, %v3067
      %v3099 = vsub.f32 %v3047, %v3069
      %v3100 = vsub.f32 %v3048, %v3071
      %v3101 = vsub.f32 %v3049, %v3073
      %v3102 = vsub.f32 %v3050, %v3076
      %v3103 = vsub.f32 %v3051, %v3078
      %v3104 = vsub.f32 %v3052, %v3080
      %v3105 = vsub.f32 %v3053, %v3082
      %v3106 = vsub.f32 %v3054, %v3085
      %v3107 = vsub.f32 %v3055, %v3087
      %v3108 = vsub.f32 %v3056, %v3089
      %v3109 = vsub.f32 %v3057, %v3091
      %v3110 = vsub.f32 %v3058, %v3094
      %v3111 = vmul.f32 %v3095, 1.442695
      %v3112 = vpow.pop %v3111
      %v3113 = vmul.f32 %v3096, 1.442695
      %v3114 = vpow.pop %v3113
      %v3115 = vmul.f32 %v3097, 1.442695
      %v3116 = vpow.pop %v3115
      %v3117 = vmul.f32 %v3098, 1.442695
      %v3118 = vpow.pop %v3117
      %v3119 = vmul.f32 %v3099, 1.442695
      %v3120 = vpow.pop %v3119
      %v3121 = vmul.f32 %v3100, 1.442695
      %v3122 = vpow.pop %v3121
      %v3123 = vmul.f32 %v3101, 1.442695
      %v3124 = vpow.pop %v3123
      %v3125 = vmul.f32 %v3102, 1.442695
      %v3126 = vpow.pop %v3125
      %v3127 = vmul.f32 %v3103, 1.442695
      %v3128 = vpow.pop %v3127
      %v3129 = vmul.f32 %v3104, 1.442695
      %v3130 = vpow.pop %v3129
      %v3131 = vmul.f32 %v3105, 1.442695
      %v3132 = vpow.pop %v3131
      %v3133 = vmul.f32 %v3106, 1.442695
      %v3134 = vpow.pop %v3133
      %v3135 = vmul.f32 %v3107, 1.442695
      %v3136 = vpow.pop %v3135
      %v3137 = vmul.f32 %v3108, 1.442695
      %v3138 = vpow.pop %v3137
      %v3139 = vmul.f32 %v3109, 1.442695
      %v3140 = vpow.pop %v3139
      %v3141 = vmul.f32 %v3110, 1.442695
      %v3142 = vpow.pop %v3141
      %3143 = vadd.xlane.f32.xlu0 %v3112
      %v3144 = vpop.xlane.xlu0 %3143
      %3145 = vadd.xlane.f32.xlu0 %v3114
      %v3146 = vpop.xlane.xlu0 %3145
      %3147 = vadd.xlane.f32.xlu0 %v3116
      %v3148 = vpop.xlane.xlu0 %3147
      %v3149 = vsel %vm1025, %v3118, 0.0
      %3150 = vadd.xlane.f32.xlu0 %v3149
      %v3151 = vpop.xlane.xlu0 %3150
      %3152 = vadd.xlane.f32.xlu0 %v3120
      %v3153 = vpop.xlane.xlu0 %3152
      %3154 = vadd.xlane.f32.xlu0 %v3122
      %v3155 = vpop.xlane.xlu0 %3154
      %3156 = vadd.xlane.f32.xlu0 %v3124
      %v3157 = vpop.xlane.xlu0 %3156
      %v3158 = vsel %vm1025, %v3126, 0.0
      %3159 = vadd.xlane.f32.xlu0 %v3158
      %v3160 = vpop.xlane.xlu0 %3159
      %3161 = vadd.xlane.f32.xlu0 %v3128
      %v3162 = vpop.xlane.xlu0 %3161
      %3163 = vadd.xlane.f32.xlu0 %v3130
      %v3164 = vpop.xlane.xlu0 %3163
      %3165 = vadd.xlane.f32.xlu0 %v3132
      %v3166 = vpop.xlane.xlu0 %3165
      %v3167 = vsel %vm1025, %v3134, 0.0
      %3168 = vadd.xlane.f32.xlu0 %v3167
      %v3169 = vpop.xlane.xlu0 %3168
      %3170 = vadd.xlane.f32.xlu0 %v3136
      %v3171 = vpop.xlane.xlu0 %3170
      %3172 = vadd.xlane.f32.xlu0 %v3138
      %v3173 = vpop.xlane.xlu0 %3172
      %3174 = vadd.xlane.f32.xlu0 %v3140
      %v3175 = vpop.xlane.xlu0 %3174
      %v3176 = vsel %vm1025, %v3142, 0.0
      %3177 = vadd.xlane.f32.xlu0 %v3176
      %v3178 = vpop.xlane.xlu0 %3177
      %v3179 = vrcp.pop %v3144
      %v3180 = vrcp.pop %v3146
      %v3181 = vrcp.pop %v3148
      %v3182 = vrcp.pop %v3151
      %v3183 = vrcp.pop %v3153
      %v3184 = vrcp.pop %v3155
      %v3185 = vrcp.pop %v3157
      %v3186 = vrcp.pop %v3160
      %v3187 = vrcp.pop %v3162
      %v3188 = vrcp.pop %v3164
      %v3189 = vrcp.pop %v3166
      %v3190 = vrcp.pop %v3169
      %v3191 = vrcp.pop %v3171
      %v3192 = vrcp.pop %v3173
      %v3193 = vrcp.pop %v3175
      %v3194 = vrcp.pop %v3178
      %v3195 = vmul.f32 %v3112, %v3179
      %v3196 = vmul.f32 %v3114, %v3180
      %v3197 = vmul.f32 %v3116, %v3181
      %v3198 = vmul.f32 %v3118, %v3182
      %v3199 = vmul.f32 %v3120, %v3183
      %v3200 = vmul.f32 %v3122, %v3184
      %v3201 = vmul.f32 %v3124, %v3185
      %v3202 = vmul.f32 %v3126, %v3186
      %v3203 = vmul.f32 %v3128, %v3187
      %v3204 = vmul.f32 %v3130, %v3188
      %v3205 = vmul.f32 %v3132, %v3189
      %v3206 = vmul.f32 %v3134, %v3190
      %v3207 = vmul.f32 %v3136, %v3191
      %v3208 = vmul.f32 %v3138, %v3192
      %v3209 = vmul.f32 %v3140, %v3193
      %v3210 = vmul.f32 %v3142, %v3194
      %v3211 = vpack.c.bf16 %v3196, %v3195
      %v3212 = vpack.c.bf16 %v3198, %v3197
      %v3213 = vpack.c.bf16 %v3200, %v3199
      %v3214 = vpack.c.bf16 %v3202, %v3201
      %v3215 = vpack.c.bf16 %v3204, %v3203
      %v3216 = vpack.c.bf16 %v3206, %v3205
      %v3217 = vpack.c.bf16 %v3208, %v3207
      %v3218 = vpack.c.bf16 %v3210, %v3209
      %3219 = vrot.lane.b32.xlu0 %v1212, 112
      %v3220 = vpop.permute.xlu0 %3219
      %3221 = vrot.lane.b32.xlu0 %v1213, 112
      %v3222 = vpop.permute.xlu0 %3221
      %3223 = vrot.lane.b32.xlu0 %v1214, 112
      %v3224 = vpop.permute.xlu0 %3223
      %3225 = vrot.lane.b32.xlu0 %v1215, 112
      %v3226 = vpop.permute.xlu0 %3225
      %3227 = vrot.lane.b32.xlu0 %v1216, 112
      %v3228 = vpop.permute.xlu0 %3227
      %3229 = vrot.lane.b32.xlu0 %v1217, 112
      %v3230 = vpop.permute.xlu0 %3229
      %3231 = vrot.lane.b32.xlu0 %v1218, 112
      %v3232 = vpop.permute.xlu0 %3231
      %3233 = vrot.lane.b32.xlu0 %v1219, 112
      %v3234 = vpop.permute.xlu0 %3233
      %3243 = vmatprep.subr.bf16.mxu0 0
      %3244 = vmatpush1.bf16.msra.mxu0 %v3234
      %3245 = vmatprep.subr.bf16.mxu0 0
      %3246 = vmatpush1.bf16.msra.mxu0 %v3232
      %3247 = vmatprep.subr.bf16.mxu0 0
      %3248 = vmatpush1.bf16.msra.mxu0 %v3230
      %3249 = vmatprep.subr.bf16.mxu0 0
      %3250 = vmatpush1.bf16.msra.mxu0 %v3228
      %3251 = vmatprep.subr.bf16.mxu0 0
      %3252 = vmatpush1.bf16.msra.mxu0 %v3226
      %3253 = vmatprep.subr.bf16.mxu0 0
      %3254 = vmatpush1.bf16.msra.mxu0 %v3224
      %3255 = vmatprep.subr.bf16.mxu0 0
      %3256 = vmatpush1.bf16.msra.mxu0 %v3222
      %3257 = vmatprep.subr.bf16.mxu0 0
      %3258 = vmatpush1.bf16.msra.mxu0 %v3220
      %3259 = vmatprep.subr.bf16.mxu0 0
      %3260 = vmatpush2.bf16.msra.mxu0 0
      %3261 = vmatprep.subr.bf16.mxu0 0
      %3262 = vmatpush2.bf16.msra.mxu0 0
      %3263 = vmatprep.subr.bf16.mxu0 0
      %3264 = vmatpush2.bf16.msra.mxu0 0
      %3265 = vmatprep.subr.bf16.mxu0 0
      %3266 = vmatpush2.bf16.msra.mxu0 0
      %3267 = vmatprep.subr.bf16.mxu0 0
      %3268 = vmatpush2.bf16.msra.mxu0 0
      %3269 = vmatprep.subr.bf16.mxu0 0
      %3270 = vmatpush2.bf16.msra.mxu0 0
      %3271 = vmatprep.subr.bf16.mxu0 0
      %3272 = vmatpush2.bf16.msra.mxu0 0
      %3273 = vmatprep.subr.bf16.mxu0 0
      %3274 = vmatpush2.bf16.msra.mxu0 0
      %3275 = vmatprep.mubr.bf16.mxu0 0
      %3276 = vmatmul.mubr.bf16.gmra.mxu0 %v3211
      %v3277 = vpop.f32.mrf.mxu0
      %v3278 = vadd.f32 0.0, %v3277
      %v3279 = vpop.f32.mrf.mxu0
      %v3280 = vpop.f32.mrf.mxu0
      %v3281 = vadd.f32 0.0, %v3280
      %v3282 = vpop.f32.mrf.mxu0
      %3283 = vmatprep.mubr.bf16.mxu0 0
      %3284 = vmatmul.mubr.bf16.gmra.mxu0 %v3212
      %v3285 = vpop.f32.mrf.mxu0
      %v3286 = vadd.f32 0.0, %v3285
      %v3287 = vpop.f32.mrf.mxu0
      %v3288 = vpop.f32.mrf.mxu0
      %v3289 = vadd.f32 0.0, %v3288
      %v3290 = vpop.f32.mrf.mxu0
      %3291 = vdwg.mxu0
      %3292 = vrot.lane.b32.xlu0 %v1309, 112
      %v3293 = vpop.permute.xlu0 %3292
      %3294 = vrot.lane.b32.xlu0 %v1310, 112
      %v3295 = vpop.permute.xlu0 %3294
      %3296 = vrot.lane.b32.xlu0 %v1311, 112
      %v3297 = vpop.permute.xlu0 %3296
      %3298 = vrot.lane.b32.xlu0 %v1312, 112
      %v3299 = vpop.permute.xlu0 %3298
      %3300 = vrot.lane.b32.xlu0 %v1313, 112
      %v3301 = vpop.permute.xlu0 %3300
      %3302 = vrot.lane.b32.xlu0 %v1314, 112
      %v3303 = vpop.permute.xlu0 %3302
      %3304 = vrot.lane.b32.xlu0 %v1315, 112
      %v3305 = vpop.permute.xlu0 %3304
      %3306 = vrot.lane.b32.xlu0 %v1316, 112
      %v3307 = vpop.permute.xlu0 %3306
      %3316 = vmatprep.subr.bf16.mxu0 0
      %3317 = vmatpush1.bf16.msra.mxu0 %v3307
      %3318 = vmatprep.subr.bf16.mxu0 0
      %3319 = vmatpush1.bf16.msra.mxu0 %v3305
      %3320 = vmatprep.subr.bf16.mxu0 0
      %3321 = vmatpush1.bf16.msra.mxu0 %v3303
      %3322 = vmatprep.subr.bf16.mxu0 0
      %3323 = vmatpush1.bf16.msra.mxu0 %v3301
      %3324 = vmatprep.subr.bf16.mxu0 0
      %3325 = vmatpush1.bf16.msra.mxu0 %v3299
      %3326 = vmatprep.subr.bf16.mxu0 0
      %3327 = vmatpush1.bf16.msra.mxu0 %v3297
      %3328 = vmatprep.subr.bf16.mxu0 0
      %3329 = vmatpush1.bf16.msra.mxu0 %v3295
      %3330 = vmatprep.subr.bf16.mxu0 0
      %3331 = vmatpush1.bf16.msra.mxu0 %v3293
      %3332 = vmatprep.subr.bf16.mxu0 0
      %3333 = vmatpush2.bf16.msra.mxu0 0
      %3334 = vmatprep.subr.bf16.mxu0 0
      %3335 = vmatpush2.bf16.msra.mxu0 0
      %3336 = vmatprep.subr.bf16.mxu0 0
      %3337 = vmatpush2.bf16.msra.mxu0 0
      %3338 = vmatprep.subr.bf16.mxu0 0
      %3339 = vmatpush2.bf16.msra.mxu0 0
      %3340 = vmatprep.subr.bf16.mxu0 0
      %3341 = vmatpush2.bf16.msra.mxu0 0
      %3342 = vmatprep.subr.bf16.mxu0 0
      %3343 = vmatpush2.bf16.msra.mxu0 0
      %3344 = vmatprep.subr.bf16.mxu0 0
      %3345 = vmatpush2.bf16.msra.mxu0 0
      %3346 = vmatprep.subr.bf16.mxu0 0
      %3347 = vmatpush2.bf16.msra.mxu0 0
      %3348 = vmatprep.mubr.bf16.mxu0 0
      %3349 = vmatmul.mubr.bf16.gmra.mxu0 %v3213
      %v3350 = vpop.f32.mrf.mxu0
      %v3351 = vadd.f32 0.0, %v3350
      %v3352 = vpop.f32.mrf.mxu0
      %v3353 = vpop.f32.mrf.mxu0
      %v3354 = vadd.f32 0.0, %v3353
      %v3355 = vpop.f32.mrf.mxu0
      %3356 = vmatprep.mubr.bf16.mxu0 0
      %3357 = vmatmul.mubr.bf16.gmra.mxu0 %v3214
      %v3358 = vpop.f32.mrf.mxu0
      %v3359 = vadd.f32 0.0, %v3358
      %v3360 = vpop.f32.mrf.mxu0
      %v3361 = vpop.f32.mrf.mxu0
      %v3362 = vadd.f32 0.0, %v3361
      %v3363 = vpop.f32.mrf.mxu0
      %3364 = vdwg.mxu0
      %3365 = vrot.lane.b32.xlu0 %v1406, 112
      %v3366 = vpop.permute.xlu0 %3365
      %3367 = vrot.lane.b32.xlu0 %v1407, 112
      %v3368 = vpop.permute.xlu0 %3367
      %3369 = vrot.lane.b32.xlu0 %v1408, 112
      %v3370 = vpop.permute.xlu0 %3369
      %3371 = vrot.lane.b32.xlu0 %v1409, 112
      %v3372 = vpop.permute.xlu0 %3371
      %3373 = vrot.lane.b32.xlu0 %v1410, 112
      %v3374 = vpop.permute.xlu0 %3373
      %3375 = vrot.lane.b32.xlu0 %v1411, 112
      %v3376 = vpop.permute.xlu0 %3375
      %3377 = vrot.lane.b32.xlu0 %v1412, 112
      %v3378 = vpop.permute.xlu0 %3377
      %3379 = vrot.lane.b32.xlu0 %v1413, 112
      %v3380 = vpop.permute.xlu0 %3379
      %3389 = vmatprep.subr.bf16.mxu0 0
      %3390 = vmatpush1.bf16.msra.mxu0 %v3380
      %3391 = vmatprep.subr.bf16.mxu0 0
      %3392 = vmatpush1.bf16.msra.mxu0 %v3378
      %3393 = vmatprep.subr.bf16.mxu0 0
      %3394 = vmatpush1.bf16.msra.mxu0 %v3376
      %3395 = vmatprep.subr.bf16.mxu0 0
      %3396 = vmatpush1.bf16.msra.mxu0 %v3374
      %3397 = vmatprep.subr.bf16.mxu0 0
      %3398 = vmatpush1.bf16.msra.mxu0 %v3372
      %3399 = vmatprep.subr.bf16.mxu0 0
      %3400 = vmatpush1.bf16.msra.mxu0 %v3370
      %3401 = vmatprep.subr.bf16.mxu0 0
      %3402 = vmatpush1.bf16.msra.mxu0 %v3368
      %3403 = vmatprep.subr.bf16.mxu0 0
      %3404 = vmatpush1.bf16.msra.mxu0 %v3366
      %3405 = vmatprep.subr.bf16.mxu0 0
      %3406 = vmatpush2.bf16.msra.mxu0 0
      %3407 = vmatprep.subr.bf16.mxu0 0
      %3408 = vmatpush2.bf16.msra.mxu0 0
      %3409 = vmatprep.subr.bf16.mxu0 0
      %3410 = vmatpush2.bf16.msra.mxu0 0
      %3411 = vmatprep.subr.bf16.mxu0 0
      %3412 = vmatpush2.bf16.msra.mxu0 0
      %3413 = vmatprep.subr.bf16.mxu0 0
      %3414 = vmatpush2.bf16.msra.mxu0 0
      %3415 = vmatprep.subr.bf16.mxu0 0
      %3416 = vmatpush2.bf16.msra.mxu0 0
      %3417 = vmatprep.subr.bf16.mxu0 0
      %3418 = vmatpush2.bf16.msra.mxu0 0
      %3419 = vmatprep.subr.bf16.mxu0 0
      %3420 = vmatpush2.bf16.msra.mxu0 0
      %3421 = vmatprep.mubr.bf16.mxu0 0
      %3422 = vmatmul.mubr.bf16.gmra.mxu0 %v3215
      %v3423 = vpop.f32.mrf.mxu0
      %v3424 = vadd.f32 0.0, %v3423
      %v3425 = vpop.f32.mrf.mxu0
      %v3426 = vpop.f32.mrf.mxu0
      %v3427 = vadd.f32 0.0, %v3426
      %v3428 = vpop.f32.mrf.mxu0
      %3429 = vmatprep.mubr.bf16.mxu0 0
      %3430 = vmatmul.mubr.bf16.gmra.mxu0 %v3216
      %v3431 = vpop.f32.mrf.mxu0
      %v3432 = vadd.f32 0.0, %v3431
      %v3433 = vpop.f32.mrf.mxu0
      %v3434 = vpop.f32.mrf.mxu0
      %v3435 = vadd.f32 0.0, %v3434
      %v3436 = vpop.f32.mrf.mxu0
      %3437 = vdwg.mxu0
      %3438 = vrot.lane.b32.xlu0 %v1503, 112
      %v3439 = vpop.permute.xlu0 %3438
      %3440 = vrot.lane.b32.xlu0 %v1504, 112
      %v3441 = vpop.permute.xlu0 %3440
      %3442 = vrot.lane.b32.xlu0 %v1505, 112
      %v3443 = vpop.permute.xlu0 %3442
      %3444 = vrot.lane.b32.xlu0 %v1506, 112
      %v3445 = vpop.permute.xlu0 %3444
      %3446 = vrot.lane.b32.xlu0 %v1507, 112
      %v3447 = vpop.permute.xlu0 %3446
      %3448 = vrot.lane.b32.xlu0 %v1508, 112
      %v3449 = vpop.permute.xlu0 %3448
      %3450 = vrot.lane.b32.xlu0 %v1509, 112
      %v3451 = vpop.permute.xlu0 %3450
      %3452 = vrot.lane.b32.xlu0 %v1510, 112
      %v3453 = vpop.permute.xlu0 %3452
      %3462 = vmatprep.subr.bf16.mxu0 0
      %3463 = vmatpush1.bf16.msra.mxu0 %v3453
      %3464 = vmatprep.subr.bf16.mxu0 0
      %3465 = vmatpush1.bf16.msra.mxu0 %v3451
      %3466 = vmatprep.subr.bf16.mxu0 0
      %3467 = vmatpush1.bf16.msra.mxu0 %v3449
      %3468 = vmatprep.subr.bf16.mxu0 0
      %3469 = vmatpush1.bf16.msra.mxu0 %v3447
      %3470 = vmatprep.subr.bf16.mxu0 0
      %3471 = vmatpush1.bf16.msra.mxu0 %v3445
      %3472 = vmatprep.subr.bf16.mxu0 0
      %3473 = vmatpush1.bf16.msra.mxu0 %v3443
      %3474 = vmatprep.subr.bf16.mxu0 0
      %3475 = vmatpush1.bf16.msra.mxu0 %v3441
      %3476 = vmatprep.subr.bf16.mxu0 0
      %3477 = vmatpush1.bf16.msra.mxu0 %v3439
      %3478 = vmatprep.subr.bf16.mxu0 0
      %3479 = vmatpush2.bf16.msra.mxu0 0
      %3480 = vmatprep.subr.bf16.mxu0 0
      %3481 = vmatpush2.bf16.msra.mxu0 0
      %3482 = vmatprep.subr.bf16.mxu0 0
      %3483 = vmatpush2.bf16.msra.mxu0 0
      %3484 = vmatprep.subr.bf16.mxu0 0
      %3485 = vmatpush2.bf16.msra.mxu0 0
      %3486 = vmatprep.subr.bf16.mxu0 0
      %3487 = vmatpush2.bf16.msra.mxu0 0
      %3488 = vmatprep.subr.bf16.mxu0 0
      %3489 = vmatpush2.bf16.msra.mxu0 0
      %3490 = vmatprep.subr.bf16.mxu0 0
      %3491 = vmatpush2.bf16.msra.mxu0 0
      %3492 = vmatprep.subr.bf16.mxu0 0
      %3493 = vmatpush2.bf16.msra.mxu0 0
      %3494 = vmatprep.mubr.bf16.mxu0 0
      %3495 = vmatmul.mubr.bf16.gmra.mxu0 %v3217
      %v3496 = vpop.f32.mrf.mxu0
      %v3497 = vadd.f32 0.0, %v3496
      %v3498 = vpop.f32.mrf.mxu0
      %v3499 = vpop.f32.mrf.mxu0
      %v3500 = vadd.f32 0.0, %v3499
      %v3501 = vpop.f32.mrf.mxu0
      %3502 = vmatprep.mubr.bf16.mxu0 0
      %3503 = vmatmul.mubr.bf16.gmra.mxu0 %v3218
      %v3504 = vpop.f32.mrf.mxu0
      %v3505 = vadd.f32 0.0, %v3504
      %v3506 = vpop.f32.mrf.mxu0
      %v3507 = vpop.f32.mrf.mxu0
      %v3508 = vadd.f32 0.0, %v3507
      %v3509 = vpop.f32.mrf.mxu0
      %3510 = vdwg.mxu0
      %v3511 = vpack.c.bf16 %v3281, %v3278
      %v3512 = vpack.c.bf16 %v3289, %v3286
      %v3513 = vpack.c.bf16 %v3354, %v3351
      %v3514 = vpack.c.bf16 %v3362, %v3359
      %v3515 = vpack.c.bf16 %v3427, %v3424
      %v3516 = vpack.c.bf16 %v3435, %v3432
      %v3517 = vpack.c.bf16 %v3500, %v3497
      %v3518 = vpack.c.bf16 %v3508, %v3505
      %v3527 = vunpack.c.l.b16 %v3511
      %v3528 = vunpack.c.h.b16 %v3511
      %v3529 = vunpack.c.l.b16 %v3512
      %v3530 = vunpack.c.h.b16 %v3512
      %v3531 = vunpack.c.l.b16 %v3513
      %v3532 = vunpack.c.h.b16 %v3513
      %v3533 = vunpack.c.l.b16 %v3514
      %v3534 = vunpack.c.h.b16 %v3514
      %v3535 = vunpack.c.l.b16 %v3515
      %v3536 = vunpack.c.h.b16 %v3515
      %v3537 = vunpack.c.l.b16 %v3516
      %v3538 = vunpack.c.h.b16 %v3516
      %v3539 = vunpack.c.l.b16 %v3517
      %v3540 = vunpack.c.h.b16 %v3517
      %v3541 = vunpack.c.l.b16 %v3518
      %v3542 = vunpack.c.h.b16 %v3518
      %v3543 = vpack.c.b16 %v3527, %v3527
      %v3544 = vpack.c.b16 %v3528, %v3528
      %v3545 = vpack.c.b16 %v3529, %v3529
      %v3546 = vpack.c.b16 %v3530, %v3530
      %v3547 = vpack.c.b16 %v3531, %v3531
      %v3548 = vpack.c.b16 %v3532, %v3532
      %v3549 = vpack.c.b16 %v3533, %v3533
      %v3550 = vpack.c.b16 %v3534, %v3534
      %v3551 = vpack.c.b16 %v3535, %v3535
      %v3552 = vpack.c.b16 %v3536, %v3536
      %v3553 = vpack.c.b16 %v3537, %v3537
      %v3554 = vpack.c.b16 %v3538, %v3538
      %v3555 = vpack.c.b16 %v3539, %v3539
      %v3556 = vpack.c.b16 %v3540, %v3540
      %v3557 = vpack.c.b16 %v3541, %v3541
      %v3558 = vpack.c.b16 %v3542, %v3542
      %3559 = vrot.lane.b32.xlu0 %v3543, 16
      %v3560 = vpop.permute.xlu0 %3559
      %3561 = vrot.lane.b32.xlu0 %v3544, 16
      %v3562 = vpop.permute.xlu0 %3561
      %3563 = vrot.lane.b32.xlu0 %v3545, 16
      %v3564 = vpop.permute.xlu0 %3563
      %3565 = vrot.lane.b32.xlu0 %v3546, 16
      %v3566 = vpop.permute.xlu0 %3565
      %3567 = vrot.lane.b32.xlu0 %v3547, 16
      %v3568 = vpop.permute.xlu0 %3567
      %3569 = vrot.lane.b32.xlu0 %v3548, 16
      %v3570 = vpop.permute.xlu0 %3569
      %3571 = vrot.lane.b32.xlu0 %v3549, 16
      %v3572 = vpop.permute.xlu0 %3571
      %3573 = vrot.lane.b32.xlu0 %v3550, 16
      %v3574 = vpop.permute.xlu0 %3573
      %3575 = vrot.lane.b32.xlu0 %v3551, 16
      %v3576 = vpop.permute.xlu0 %3575
      %3577 = vrot.lane.b32.xlu0 %v3552, 16
      %v3578 = vpop.permute.xlu0 %3577
      %3579 = vrot.lane.b32.xlu0 %v3553, 16
      %v3580 = vpop.permute.xlu0 %3579
      %3581 = vrot.lane.b32.xlu0 %v3554, 16
      %v3582 = vpop.permute.xlu0 %3581
      %3583 = vrot.lane.b32.xlu0 %v3555, 16
      %v3584 = vpop.permute.xlu0 %3583
      %3585 = vrot.lane.b32.xlu0 %v3556, 16
      %v3586 = vpop.permute.xlu0 %3585
      %3587 = vrot.lane.b32.xlu0 %v3557, 16
      %v3588 = vpop.permute.xlu0 %3587
      %3589 = vrot.lane.b32.xlu0 %v3558, 16
      %v3590 = vpop.permute.xlu0 %3589
      %vm3607 = vcmask 191616
      %3608 = vst.msk [vmem:[%s254] sm:$0xf] %vm3607, %v3560
      %3609 = vst.msk [vmem:[%s254 + $0x4] sm:$0xf] %vm3607, %v3562
      %3610 = vst.msk [vmem:[%s254 + $0x8] sm:$0xf] %vm3607, %v3564
      %vm3611 = vcmask 188544
      %vm3612 = vmand %vm3611, %vm1637
      %v3613 = vld [vmem:[%s254 + $0xc] sm:$0x1]
      %v3614 = vsel %vm3612, %v3566, %v3613
      %3615 = vst [vmem:[%s254 + $0xc] sm:$0x1] %v3614
      %3616 = vst.msk [vmem:[%s254 + $0x10] sm:$0xf] %vm3607, %v3568
      %3617 = vst.msk [vmem:[%s254 + $0x14] sm:$0xf] %vm3607, %v3570
      %3618 = vst.msk [vmem:[%s254 + $0x18] sm:$0xf] %vm3607, %v3572
      %v3619 = vld [vmem:[%s254 + $0x1c] sm:$0x1]
      %v3620 = vsel %vm3612, %v3574, %v3619
      %3621 = vst [vmem:[%s254 + $0x1c] sm:$0x1] %v3620
      %3622 = vst.msk [vmem:[%s254 + $0x20] sm:$0xf] %vm3607, %v3576
      %3623 = vst.msk [vmem:[%s254 + $0x24] sm:$0xf] %vm3607, %v3578
      %3624 = vst.msk [vmem:[%s254 + $0x28] sm:$0xf] %vm3607, %v3580
      %v3625 = vld [vmem:[%s254 + $0x2c] sm:$0x1]
      %v3626 = vsel %vm3612, %v3582, %v3625
      %3627 = vst [vmem:[%s254 + $0x2c] sm:$0x1] %v3626
      %3628 = vst.msk [vmem:[%s254 + $0x30] sm:$0xf] %vm3607, %v3584
      %3629 = vst.msk [vmem:[%s254 + $0x34] sm:$0xf] %vm3607, %v3586
      %3630 = vst.msk [vmem:[%s254 + $0x38] sm:$0xf] %vm3607, %v3588
      %v3631 = vld [vmem:[%s254 + $0x3c] sm:$0x1]
      %v3632 = vsel %vm3612, %v3590, %v3631
      %3633 = vst [vmem:[%s254 + $0x3c] sm:$0x1] %v3632
      %3634 = vrot.lane.b32.xlu0 %v492, 104
      %v3635 = vpop.permute.xlu0 %3634
      %3636 = vrot.lane.b32.xlu0 %v493, 104
      %v3637 = vpop.permute.xlu0 %3636
      %3638 = vrot.lane.b32.xlu0 %v526, 104
      %v3639 = vpop.permute.xlu0 %3638
      %3640 = vrot.lane.b32.xlu0 %v527, 104
      %v3641 = vpop.permute.xlu0 %3640
      %3642 = vrot.lane.b32.xlu0 %v528, 104
      %v3643 = vpop.permute.xlu0 %3642
      %3644 = vrot.lane.b32.xlu0 %v529, 104
      %v3645 = vpop.permute.xlu0 %3644
      %3646 = vrot.lane.b32.xlu0 %v530, 104
      %v3647 = vpop.permute.xlu0 %3646
      %3648 = vrot.lane.b32.xlu0 %v531, 104
      %v3649 = vpop.permute.xlu0 %3648
      %3650 = vrot.lane.b32.xlu0 %v532, 104
      %v3651 = vpop.permute.xlu0 %3650
      %3652 = vrot.lane.b32.xlu0 %v533, 104
      %v3653 = vpop.permute.xlu0 %3652
      %v3655 = vsel %vm534, %v3635, 0
      %v3658 = vsel %vm534, %v3637, 0
      %v3661 = vsel %vm534, %v3639, 0
      %v3664 = vsel %vm534, %v3641, 0
      %v3667 = vsel %vm534, %v3643, 0
      %v3670 = vsel %vm534, %v3645, 0
      %v3673 = vsel %vm534, %v3647, 0
      %v3676 = vsel %vm534, %v3649, 0
      %v3679 = vsel %vm534, %v3651, 0
      %v3682 = vsel %vm534, %v3653, 0
      %3684 = vmatprep.subr.bf16.mxu0 0
      %3685 = vmatpush1.bf16.xpose.msra.mxu0 %v3682
      %3686 = vmatprep.subr.bf16.mxu0 0
      %3687 = vmatpush1.bf16.xpose.msra.mxu0 %v3679
      %3688 = vmatprep.subr.bf16.mxu0 0
      %3689 = vmatpush1.bf16.xpose.msra.mxu0 %v3676
      %3690 = vmatprep.subr.bf16.mxu0 0
      %3691 = vmatpush1.bf16.xpose.msra.mxu0 %v3673
      %3692 = vmatprep.subr.bf16.mxu0 0
      %3693 = vmatpush1.bf16.xpose.msra.mxu0 %v3670
      %3694 = vmatprep.subr.bf16.mxu0 0
      %3695 = vmatpush1.bf16.xpose.msra.mxu0 %v3667
      %3696 = vmatprep.subr.bf16.mxu0 0
      %3697 = vmatpush1.bf16.xpose.msra.mxu0 %v3664
      %3698 = vmatprep.subr.bf16.mxu0 0
      %3699 = vmatpush1.bf16.xpose.msra.mxu0 %v3661
      %3700 = vmatprep.subr.bf16.mxu0 0
      %3701 = vmatpush2.bf16.xpose.msra.mxu0 0
      %3702 = vmatprep.subr.bf16.mxu0 0
      %3703 = vmatpush2.bf16.xpose.msra.mxu0 0
      %3704 = vmatprep.subr.bf16.mxu0 0
      %3705 = vmatpush2.bf16.xpose.msra.mxu0 0
      %3706 = vmatprep.subr.bf16.mxu0 0
      %3707 = vmatpush2.bf16.xpose.msra.mxu0 0
      %3708 = vmatprep.subr.bf16.mxu0 0
      %3709 = vmatpush2.bf16.xpose.msra.mxu0 0
      %3710 = vmatprep.subr.bf16.mxu0 0
      %3711 = vmatpush2.bf16.xpose.msra.mxu0 0
      %3712 = vmatprep.subr.bf16.mxu0 0
      %3713 = vmatpush2.bf16.xpose.msra.mxu0 0
      %3714 = vmatprep.subr.bf16.mxu0 0
      %3715 = vmatpush2.bf16.xpose.msra.mxu0 0
      %3716 = vmatprep.mubr.bf16.mxu0 0
      %3717 = vmatmul.mubr.bf16.gmra.mxu0 %v3655
      %v3718 = vpop.f32.mrf.mxu0
      %v3719 = vadd.f32 0.0, %v3718
      %v3720 = vpop.f32.mrf.mxu0
      %v3721 = vpop.f32.mrf.mxu0
      %v3722 = vadd.f32 0.0, %v3721
      %v3723 = vpop.f32.mrf.mxu0
      %3724 = vmatprep.mubr.bf16.mxu0 0
      %3725 = vmatmul.mubr.bf16.gmra.mxu0 %v3658
      %v3726 = vpop.f32.mrf.mxu0
      %v3727 = vadd.f32 0.0, %v3726
      %v3728 = vpop.f32.mrf.mxu0
      %v3729 = vpop.f32.mrf.mxu0
      %v3730 = vadd.f32 0.0, %v3729
      %v3731 = vpop.f32.mrf.mxu0
      %3732 = vdwg.mxu0
      %3733 = vrot.lane.b32.xlu0 %v622, 104
      %v3734 = vpop.permute.xlu0 %3733
      %3735 = vrot.lane.b32.xlu0 %v623, 104
      %v3736 = vpop.permute.xlu0 %3735
      %3737 = vrot.lane.b32.xlu0 %v656, 104
      %v3738 = vpop.permute.xlu0 %3737
      %3739 = vrot.lane.b32.xlu0 %v657, 104
      %v3740 = vpop.permute.xlu0 %3739
      %3741 = vrot.lane.b32.xlu0 %v658, 104
      %v3742 = vpop.permute.xlu0 %3741
      %3743 = vrot.lane.b32.xlu0 %v659, 104
      %v3744 = vpop.permute.xlu0 %3743
      %3745 = vrot.lane.b32.xlu0 %v660, 104
      %v3746 = vpop.permute.xlu0 %3745
      %3747 = vrot.lane.b32.xlu0 %v661, 104
      %v3748 = vpop.permute.xlu0 %3747
      %3749 = vrot.lane.b32.xlu0 %v662, 104
      %v3750 = vpop.permute.xlu0 %3749
      %3751 = vrot.lane.b32.xlu0 %v663, 104
      %v3752 = vpop.permute.xlu0 %3751
      %v3754 = vsel %vm534, %v3734, 0
      %v3757 = vsel %vm534, %v3736, 0
      %v3760 = vsel %vm534, %v3738, 0
      %v3763 = vsel %vm534, %v3740, 0
      %v3766 = vsel %vm534, %v3742, 0
      %v3769 = vsel %vm534, %v3744, 0
      %v3772 = vsel %vm534, %v3746, 0
      %v3775 = vsel %vm534, %v3748, 0
      %v3778 = vsel %vm534, %v3750, 0
      %v3781 = vsel %vm534, %v3752, 0
      %3783 = vmatprep.subr.bf16.mxu0 0
      %3784 = vmatpush1.bf16.xpose.msra.mxu0 %v3781
      %3785 = vmatprep.subr.bf16.mxu0 0
      %3786 = vmatpush1.bf16.xpose.msra.mxu0 %v3778
      %3787 = vmatprep.subr.bf16.mxu0 0
      %3788 = vmatpush1.bf16.xpose.msra.mxu0 %v3775
      %3789 = vmatprep.subr.bf16.mxu0 0
      %3790 = vmatpush1.bf16.xpose.msra.mxu0 %v3772
      %3791 = vmatprep.subr.bf16.mxu0 0
      %3792 = vmatpush1.bf16.xpose.msra.mxu0 %v3769
      %3793 = vmatprep.subr.bf16.mxu0 0
      %3794 = vmatpush1.bf16.xpose.msra.mxu0 %v3766
      %3795 = vmatprep.subr.bf16.mxu0 0
      %3796 = vmatpush1.bf16.xpose.msra.mxu0 %v3763
      %3797 = vmatprep.subr.bf16.mxu0 0
      %3798 = vmatpush1.bf16.xpose.msra.mxu0 %v3760
      %3799 = vmatprep.subr.bf16.mxu0 0
      %3800 = vmatpush2.bf16.xpose.msra.mxu0 0
      %3801 = vmatprep.subr.bf16.mxu0 0
      %3802 = vmatpush2.bf16.xpose.msra.mxu0 0
      %3803 = vmatprep.subr.bf16.mxu0 0
      %3804 = vmatpush2.bf16.xpose.msra.mxu0 0
      %3805 = vmatprep.subr.bf16.mxu0 0
      %3806 = vmatpush2.bf16.xpose.msra.mxu0 0
      %3807 = vmatprep.subr.bf16.mxu0 0
      %3808 = vmatpush2.bf16.xpose.msra.mxu0 0
      %3809 = vmatprep.subr.bf16.mxu0 0
      %3810 = vmatpush2.bf16.xpose.msra.mxu0 0
      %3811 = vmatprep.subr.bf16.mxu0 0
      %3812 = vmatpush2.bf16.xpose.msra.mxu0 0
      %3813 = vmatprep.subr.bf16.mxu0 0
      %3814 = vmatpush2.bf16.xpose.msra.mxu0 0
      %3815 = vmatprep.mubr.bf16.mxu0 0
      %3816 = vmatmul.mubr.bf16.gmra.mxu0 %v3754
      %v3817 = vpop.f32.mrf.mxu0
      %v3818 = vadd.f32 0.0, %v3817
      %v3819 = vpop.f32.mrf.mxu0
      %v3820 = vpop.f32.mrf.mxu0
      %v3821 = vadd.f32 0.0, %v3820
      %v3822 = vpop.f32.mrf.mxu0
      %3823 = vmatprep.mubr.bf16.mxu0 0
      %3824 = vmatmul.mubr.bf16.gmra.mxu0 %v3757
      %v3825 = vpop.f32.mrf.mxu0
      %v3826 = vadd.f32 0.0, %v3825
      %v3827 = vpop.f32.mrf.mxu0
      %v3828 = vpop.f32.mrf.mxu0
      %v3829 = vadd.f32 0.0, %v3828
      %v3830 = vpop.f32.mrf.mxu0
      %3831 = vdwg.mxu0
      %3832 = vrot.lane.b32.xlu0 %v751, 104
      %v3833 = vpop.permute.xlu0 %3832
      %3834 = vrot.lane.b32.xlu0 %v752, 104
      %v3835 = vpop.permute.xlu0 %3834
      %3836 = vrot.lane.b32.xlu0 %v785, 104
      %v3837 = vpop.permute.xlu0 %3836
      %3838 = vrot.lane.b32.xlu0 %v786, 104
      %v3839 = vpop.permute.xlu0 %3838
      %3840 = vrot.lane.b32.xlu0 %v787, 104
      %v3841 = vpop.permute.xlu0 %3840
      %3842 = vrot.lane.b32.xlu0 %v788, 104
      %v3843 = vpop.permute.xlu0 %3842
      %3844 = vrot.lane.b32.xlu0 %v789, 104
      %v3845 = vpop.permute.xlu0 %3844
      %3846 = vrot.lane.b32.xlu0 %v790, 104
      %v3847 = vpop.permute.xlu0 %3846
      %3848 = vrot.lane.b32.xlu0 %v791, 104
      %v3849 = vpop.permute.xlu0 %3848
      %3850 = vrot.lane.b32.xlu0 %v792, 104
      %v3851 = vpop.permute.xlu0 %3850
      %v3853 = vsel %vm534, %v3833, 0
      %v3856 = vsel %vm534, %v3835, 0
      %v3859 = vsel %vm534, %v3837, 0
      %v3862 = vsel %vm534, %v3839, 0
      %v3865 = vsel %vm534, %v3841, 0
      %v3868 = vsel %vm534, %v3843, 0
      %v3871 = vsel %vm534, %v3845, 0
      %v3874 = vsel %vm534, %v3847, 0
      %v3877 = vsel %vm534, %v3849, 0
      %v3880 = vsel %vm534, %v3851, 0
      %3882 = vmatprep.subr.bf16.mxu0 0
      %3883 = vmatpush1.bf16.xpose.msra.mxu0 %v3880
      %3884 = vmatprep.subr.bf16.mxu0 0
      %3885 = vmatpush1.bf16.xpose.msra.mxu0 %v3877
      %3886 = vmatprep.subr.bf16.mxu0 0
      %3887 = vmatpush1.bf16.xpose.msra.mxu0 %v3874
      %3888 = vmatprep.subr.bf16.mxu0 0
      %3889 = vmatpush1.bf16.xpose.msra.mxu0 %v3871
      %3890 = vmatprep.subr.bf16.mxu0 0
      %3891 = vmatpush1.bf16.xpose.msra.mxu0 %v3868
      %3892 = vmatprep.subr.bf16.mxu0 0
      %3893 = vmatpush1.bf16.xpose.msra.mxu0 %v3865
      %3894 = vmatprep.subr.bf16.mxu0 0
      %3895 = vmatpush1.bf16.xpose.msra.mxu0 %v3862
      %3896 = vmatprep.subr.bf16.mxu0 0
      %3897 = vmatpush1.bf16.xpose.msra.mxu0 %v3859
      %3898 = vmatprep.subr.bf16.mxu0 0
      %3899 = vmatpush2.bf16.xpose.msra.mxu0 0
      %3900 = vmatprep.subr.bf16.mxu0 0
      %3901 = vmatpush2.bf16.xpose.msra.mxu0 0
      %3902 = vmatprep.subr.bf16.mxu0 0
      %3903 = vmatpush2.bf16.xpose.msra.mxu0 0
      %3904 = vmatprep.subr.bf16.mxu0 0
      %3905 = vmatpush2.bf16.xpose.msra.mxu0 0
      %3906 = vmatprep.subr.bf16.mxu0 0
      %3907 = vmatpush2.bf16.xpose.msra.mxu0 0
      %3908 = vmatprep.subr.bf16.mxu0 0
      %3909 = vmatpush2.bf16.xpose.msra.mxu0 0
      %3910 = vmatprep.subr.bf16.mxu0 0
      %3911 = vmatpush2.bf16.xpose.msra.mxu0 0
      %3912 = vmatprep.subr.bf16.mxu0 0
      %3913 = vmatpush2.bf16.xpose.msra.mxu0 0
      %3914 = vmatprep.mubr.bf16.mxu0 0
      %3915 = vmatmul.mubr.bf16.gmra.mxu0 %v3853
      %v3916 = vpop.f32.mrf.mxu0
      %v3917 = vadd.f32 0.0, %v3916
      %v3918 = vpop.f32.mrf.mxu0
      %v3919 = vpop.f32.mrf.mxu0
      %v3920 = vadd.f32 0.0, %v3919
      %v3921 = vpop.f32.mrf.mxu0
      %3922 = vmatprep.mubr.bf16.mxu0 0
      %3923 = vmatmul.mubr.bf16.gmra.mxu0 %v3856
      %v3924 = vpop.f32.mrf.mxu0
      %v3925 = vadd.f32 0.0, %v3924
      %v3926 = vpop.f32.mrf.mxu0
      %v3927 = vpop.f32.mrf.mxu0
      %v3928 = vadd.f32 0.0, %v3927
      %v3929 = vpop.f32.mrf.mxu0
      %3930 = vdwg.mxu0
      %3931 = vrot.lane.b32.xlu0 %v880, 104
      %v3932 = vpop.permute.xlu0 %3931
      %3933 = vrot.lane.b32.xlu0 %v881, 104
      %v3934 = vpop.permute.xlu0 %3933
      %3935 = vrot.lane.b32.xlu0 %v914, 104
      %v3936 = vpop.permute.xlu0 %3935
      %3937 = vrot.lane.b32.xlu0 %v915, 104
      %v3938 = vpop.permute.xlu0 %3937
      %3939 = vrot.lane.b32.xlu0 %v916, 104
      %v3940 = vpop.permute.xlu0 %3939
      %3941 = vrot.lane.b32.xlu0 %v917, 104
      %v3942 = vpop.permute.xlu0 %3941
      %3943 = vrot.lane.b32.xlu0 %v918, 104
      %v3944 = vpop.permute.xlu0 %3943
      %3945 = vrot.lane.b32.xlu0 %v919, 104
      %v3946 = vpop.permute.xlu0 %3945
      %3947 = vrot.lane.b32.xlu0 %v920, 104
      %v3948 = vpop.permute.xlu0 %3947
      %3949 = vrot.lane.b32.xlu0 %v921, 104
      %v3950 = vpop.permute.xlu0 %3949
      %v3952 = vsel %vm534, %v3932, 0
      %v3955 = vsel %vm534, %v3934, 0
      %v3958 = vsel %vm534, %v3936, 0
      %v3961 = vsel %vm534, %v3938, 0
      %v3964 = vsel %vm534, %v3940, 0
      %v3967 = vsel %vm534, %v3942, 0
      %v3970 = vsel %vm534, %v3944, 0
      %v3973 = vsel %vm534, %v3946, 0
      %v3976 = vsel %vm534, %v3948, 0
      %v3979 = vsel %vm534, %v3950, 0
      %3981 = vmatprep.subr.bf16.mxu0 0
      %3982 = vmatpush1.bf16.xpose.msra.mxu0 %v3979
      %3983 = vmatprep.subr.bf16.mxu0 0
      %3984 = vmatpush1.bf16.xpose.msra.mxu0 %v3976
      %3985 = vmatprep.subr.bf16.mxu0 0
      %3986 = vmatpush1.bf16.xpose.msra.mxu0 %v3973
      %3987 = vmatprep.subr.bf16.mxu0 0
      %3988 = vmatpush1.bf16.xpose.msra.mxu0 %v3970
      %3989 = vmatprep.subr.bf16.mxu0 0
      %3990 = vmatpush1.bf16.xpose.msra.mxu0 %v3967
      %3991 = vmatprep.subr.bf16.mxu0 0
      %3992 = vmatpush1.bf16.xpose.msra.mxu0 %v3964
      %3993 = vmatprep.subr.bf16.mxu0 0
      %3994 = vmatpush1.bf16.xpose.msra.mxu0 %v3961
      %3995 = vmatprep.subr.bf16.mxu0 0
      %3996 = vmatpush1.bf16.xpose.msra.mxu0 %v3958
      %3997 = vmatprep.subr.bf16.mxu0 0
      %3998 = vmatpush2.bf16.xpose.msra.mxu0 0
      %3999 = vmatprep.subr.bf16.mxu0 0
      %4000 = vmatpush2.bf16.xpose.msra.mxu0 0
      %4001 = vmatprep.subr.bf16.mxu0 0
      %4002 = vmatpush2.bf16.xpose.msra.mxu0 0
      %4003 = vmatprep.subr.bf16.mxu0 0
      %4004 = vmatpush2.bf16.xpose.msra.mxu0 0
      %4005 = vmatprep.subr.bf16.mxu0 0
      %4006 = vmatpush2.bf16.xpose.msra.mxu0 0
      %4007 = vmatprep.subr.bf16.mxu0 0
      %4008 = vmatpush2.bf16.xpose.msra.mxu0 0
      %4009 = vmatprep.subr.bf16.mxu0 0
      %4010 = vmatpush2.bf16.xpose.msra.mxu0 0
      %4011 = vmatprep.subr.bf16.mxu0 0
      %4012 = vmatpush2.bf16.xpose.msra.mxu0 0
      %4013 = vmatprep.mubr.bf16.mxu0 0
      %4014 = vmatmul.mubr.bf16.gmra.mxu0 %v3952
      %v4015 = vpop.f32.mrf.mxu0
      %v4016 = vadd.f32 0.0, %v4015
      %v4017 = vpop.f32.mrf.mxu0
      %v4018 = vpop.f32.mrf.mxu0
      %v4019 = vadd.f32 0.0, %v4018
      %v4020 = vpop.f32.mrf.mxu0
      %4021 = vmatprep.mubr.bf16.mxu0 0
      %4022 = vmatmul.mubr.bf16.gmra.mxu0 %v3955
      %v4023 = vpop.f32.mrf.mxu0
      %v4024 = vadd.f32 0.0, %v4023
      %v4025 = vpop.f32.mrf.mxu0
      %v4026 = vpop.f32.mrf.mxu0
      %v4027 = vadd.f32 0.0, %v4026
      %v4028 = vpop.f32.mrf.mxu0
      %4029 = vdwg.mxu0
      %v4030 = vsel %vm1002, %v3719, -1e+30
      %v4031 = vsel %vm1002, %v3722, -1e+30
      %v4032 = vsel %vm1002, %v3727, -1e+30
      %v4033 = vsel %vm1002, %v3730, -1e+30
      %v4034 = vsel %vm1002, %v3818, -1e+30
      %v4035 = vsel %vm1002, %v3821, -1e+30
      %v4036 = vsel %vm1002, %v3826, -1e+30
      %v4037 = vsel %vm1002, %v3829, -1e+30
      %v4038 = vsel %vm1002, %v3917, -1e+30
      %v4039 = vsel %vm1002, %v3920, -1e+30
      %v4040 = vsel %vm1002, %v3925, -1e+30
      %v4041 = vsel %vm1002, %v3928, -1e+30
      %v4042 = vsel %vm1002, %v4016, -1e+30
      %v4043 = vsel %vm1002, %v4019, -1e+30
      %v4044 = vsel %vm1002, %v4024, -1e+30
      %v4045 = vsel %vm1002, %v4027, -1e+30
      %4046 = vmax.xlane.f32.xlu0 %v4030
      %v4047 = vpop.xlane.xlu0 %4046
      %4048 = vmax.xlane.f32.xlu0 %v4031
      %v4049 = vpop.xlane.xlu0 %4048
      %4050 = vmax.xlane.f32.xlu0 %v4032
      %v4051 = vpop.xlane.xlu0 %4050
      %v4052 = vsel %vm1025, %v4033, -inf
      %4053 = vmax.xlane.f32.xlu0 %v4052
      %v4054 = vpop.xlane.xlu0 %4053
      %4055 = vmax.xlane.f32.xlu0 %v4034
      %v4056 = vpop.xlane.xlu0 %4055
      %4057 = vmax.xlane.f32.xlu0 %v4035
      %v4058 = vpop.xlane.xlu0 %4057
      %4059 = vmax.xlane.f32.xlu0 %v4036
      %v4060 = vpop.xlane.xlu0 %4059
      %v4061 = vsel %vm1025, %v4037, -inf
      %4062 = vmax.xlane.f32.xlu0 %v4061
      %v4063 = vpop.xlane.xlu0 %4062
      %4064 = vmax.xlane.f32.xlu0 %v4038
      %v4065 = vpop.xlane.xlu0 %4064
      %4066 = vmax.xlane.f32.xlu0 %v4039
      %v4067 = vpop.xlane.xlu0 %4066
      %4068 = vmax.xlane.f32.xlu0 %v4040
      %v4069 = vpop.xlane.xlu0 %4068
      %v4070 = vsel %vm1025, %v4041, -inf
      %4071 = vmax.xlane.f32.xlu0 %v4070
      %v4072 = vpop.xlane.xlu0 %4071
      %4073 = vmax.xlane.f32.xlu0 %v4042
      %v4074 = vpop.xlane.xlu0 %4073
      %4075 = vmax.xlane.f32.xlu0 %v4043
      %v4076 = vpop.xlane.xlu0 %4075
      %4077 = vmax.xlane.f32.xlu0 %v4044
      %v4078 = vpop.xlane.xlu0 %4077
      %v4079 = vsel %vm1025, %v4045, -inf
      %4080 = vmax.xlane.f32.xlu0 %v4079
      %v4081 = vpop.xlane.xlu0 %4080
      %v4082 = vsub.f32 %v4030, %v4047
      %v4083 = vsub.f32 %v4031, %v4049
      %v4084 = vsub.f32 %v4032, %v4051
      %v4085 = vsub.f32 %v4033, %v4054
      %v4086 = vsub.f32 %v4034, %v4056
      %v4087 = vsub.f32 %v4035, %v4058
      %v4088 = vsub.f32 %v4036, %v4060
      %v4089 = vsub.f32 %v4037, %v4063
      %v4090 = vsub.f32 %v4038, %v4065
      %v4091 = vsub.f32 %v4039, %v4067
      %v4092 = vsub.f32 %v4040, %v4069
      %v4093 = vsub.f32 %v4041, %v4072
      %v4094 = vsub.f32 %v4042, %v4074
      %v4095 = vsub.f32 %v4043, %v4076
      %v4096 = vsub.f32 %v4044, %v4078
      %v4097 = vsub.f32 %v4045, %v4081
      %v4098 = vmul.f32 %v4082, 1.442695
      %v4099 = vpow.pop %v4098
      %v4100 = vmul.f32 %v4083, 1.442695
      %v4101 = vpow.pop %v4100
      %v4102 = vmul.f32 %v4084, 1.442695
      %v4103 = vpow.pop %v4102
      %v4104 = vmul.f32 %v4085, 1.442695
      %v4105 = vpow.pop %v4104
      %v4106 = vmul.f32 %v4086, 1.442695
      %v4107 = vpow.pop %v4106
      %v4108 = vmul.f32 %v4087, 1.442695
      %v4109 = vpow.pop %v4108
      %v4110 = vmul.f32 %v4088, 1.442695
      %v4111 = vpow.pop %v4110
      %v4112 = vmul.f32 %v4089, 1.442695
      %v4113 = vpow.pop %v4112
      %v4114 = vmul.f32 %v4090, 1.442695
      %v4115 = vpow.pop %v4114
      %v4116 = vmul.f32 %v4091, 1.442695
      %v4117 = vpow.pop %v4116
      %v4118 = vmul.f32 %v4092, 1.442695
      %v4119 = vpow.pop %v4118
      %v4120 = vmul.f32 %v4093, 1.442695
      %v4121 = vpow.pop %v4120
      %v4122 = vmul.f32 %v4094, 1.442695
      %v4123 = vpow.pop %v4122
      %v4124 = vmul.f32 %v4095, 1.442695
      %v4125 = vpow.pop %v4124
      %v4126 = vmul.f32 %v4096, 1.442695
      %v4127 = vpow.pop %v4126
      %v4128 = vmul.f32 %v4097, 1.442695
      %v4129 = vpow.pop %v4128
      %4130 = vadd.xlane.f32.xlu0 %v4099
      %v4131 = vpop.xlane.xlu0 %4130
      %4132 = vadd.xlane.f32.xlu0 %v4101
      %v4133 = vpop.xlane.xlu0 %4132
      %4134 = vadd.xlane.f32.xlu0 %v4103
      %v4135 = vpop.xlane.xlu0 %4134
      %v4136 = vsel %vm1025, %v4105, 0.0
      %4137 = vadd.xlane.f32.xlu0 %v4136
      %v4138 = vpop.xlane.xlu0 %4137
      %4139 = vadd.xlane.f32.xlu0 %v4107
      %v4140 = vpop.xlane.xlu0 %4139
      %4141 = vadd.xlane.f32.xlu0 %v4109
      %v4142 = vpop.xlane.xlu0 %4141
      %4143 = vadd.xlane.f32.xlu0 %v4111
      %v4144 = vpop.xlane.xlu0 %4143
      %v4145 = vsel %vm1025, %v4113, 0.0
      %4146 = vadd.xlane.f32.xlu0 %v4145
      %v4147 = vpop.xlane.xlu0 %4146
      %4148 = vadd.xlane.f32.xlu0 %v4115
      %v4149 = vpop.xlane.xlu0 %4148
      %4150 = vadd.xlane.f32.xlu0 %v4117
      %v4151 = vpop.xlane.xlu0 %4150
      %4152 = vadd.xlane.f32.xlu0 %v4119
      %v4153 = vpop.xlane.xlu0 %4152
      %v4154 = vsel %vm1025, %v4121, 0.0
      %4155 = vadd.xlane.f32.xlu0 %v4154
      %v4156 = vpop.xlane.xlu0 %4155
      %4157 = vadd.xlane.f32.xlu0 %v4123
      %v4158 = vpop.xlane.xlu0 %4157
      %4159 = vadd.xlane.f32.xlu0 %v4125
      %v4160 = vpop.xlane.xlu0 %4159
      %4161 = vadd.xlane.f32.xlu0 %v4127
      %v4162 = vpop.xlane.xlu0 %4161
      %v4163 = vsel %vm1025, %v4129, 0.0
      %4164 = vadd.xlane.f32.xlu0 %v4163
      %v4165 = vpop.xlane.xlu0 %4164
      %v4166 = vrcp.pop %v4131
      %v4167 = vrcp.pop %v4133
      %v4168 = vrcp.pop %v4135
      %v4169 = vrcp.pop %v4138
      %v4170 = vrcp.pop %v4140
      %v4171 = vrcp.pop %v4142
      %v4172 = vrcp.pop %v4144
      %v4173 = vrcp.pop %v4147
      %v4174 = vrcp.pop %v4149
      %v4175 = vrcp.pop %v4151
      %v4176 = vrcp.pop %v4153
      %v4177 = vrcp.pop %v4156
      %v4178 = vrcp.pop %v4158
      %v4179 = vrcp.pop %v4160
      %v4180 = vrcp.pop %v4162
      %v4181 = vrcp.pop %v4165
      %v4182 = vmul.f32 %v4099, %v4166
      %v4183 = vmul.f32 %v4101, %v4167
      %v4184 = vmul.f32 %v4103, %v4168
      %v4185 = vmul.f32 %v4105, %v4169
      %v4186 = vmul.f32 %v4107, %v4170
      %v4187 = vmul.f32 %v4109, %v4171
      %v4188 = vmul.f32 %v4111, %v4172
      %v4189 = vmul.f32 %v4113, %v4173
      %v4190 = vmul.f32 %v4115, %v4174
      %v4191 = vmul.f32 %v4117, %v4175
      %v4192 = vmul.f32 %v4119, %v4176
      %v4193 = vmul.f32 %v4121, %v4177
      %v4194 = vmul.f32 %v4123, %v4178
      %v4195 = vmul.f32 %v4125, %v4179
      %v4196 = vmul.f32 %v4127, %v4180
      %v4197 = vmul.f32 %v4129, %v4181
      %v4198 = vpack.c.bf16 %v4183, %v4182
      %v4199 = vpack.c.bf16 %v4185, %v4184
      %v4200 = vpack.c.bf16 %v4187, %v4186
      %v4201 = vpack.c.bf16 %v4189, %v4188
      %v4202 = vpack.c.bf16 %v4191, %v4190
      %v4203 = vpack.c.bf16 %v4193, %v4192
      %v4204 = vpack.c.bf16 %v4195, %v4194
      %v4205 = vpack.c.bf16 %v4197, %v4196
      %4206 = vrot.lane.b32.xlu0 %v1212, 104
      %v4207 = vpop.permute.xlu0 %4206
      %4208 = vrot.lane.b32.xlu0 %v1213, 104
      %v4209 = vpop.permute.xlu0 %4208
      %4210 = vrot.lane.b32.xlu0 %v1214, 104
      %v4211 = vpop.permute.xlu0 %4210
      %4212 = vrot.lane.b32.xlu0 %v1215, 104
      %v4213 = vpop.permute.xlu0 %4212
      %4214 = vrot.lane.b32.xlu0 %v1216, 104
      %v4215 = vpop.permute.xlu0 %4214
      %4216 = vrot.lane.b32.xlu0 %v1217, 104
      %v4217 = vpop.permute.xlu0 %4216
      %4218 = vrot.lane.b32.xlu0 %v1218, 104
      %v4219 = vpop.permute.xlu0 %4218
      %4220 = vrot.lane.b32.xlu0 %v1219, 104
      %v4221 = vpop.permute.xlu0 %4220
      %4230 = vmatprep.subr.bf16.mxu0 0
      %4231 = vmatpush1.bf16.msra.mxu0 %v4221
      %4232 = vmatprep.subr.bf16.mxu0 0
      %4233 = vmatpush1.bf16.msra.mxu0 %v4219
      %4234 = vmatprep.subr.bf16.mxu0 0
      %4235 = vmatpush1.bf16.msra.mxu0 %v4217
      %4236 = vmatprep.subr.bf16.mxu0 0
      %4237 = vmatpush1.bf16.msra.mxu0 %v4215
      %4238 = vmatprep.subr.bf16.mxu0 0
      %4239 = vmatpush1.bf16.msra.mxu0 %v4213
      %4240 = vmatprep.subr.bf16.mxu0 0
      %4241 = vmatpush1.bf16.msra.mxu0 %v4211
      %4242 = vmatprep.subr.bf16.mxu0 0
      %4243 = vmatpush1.bf16.msra.mxu0 %v4209
      %4244 = vmatprep.subr.bf16.mxu0 0
      %4245 = vmatpush1.bf16.msra.mxu0 %v4207
      %4246 = vmatprep.subr.bf16.mxu0 0
      %4247 = vmatpush2.bf16.msra.mxu0 0
      %4248 = vmatprep.subr.bf16.mxu0 0
      %4249 = vmatpush2.bf16.msra.mxu0 0
      %4250 = vmatprep.subr.bf16.mxu0 0
      %4251 = vmatpush2.bf16.msra.mxu0 0
      %4252 = vmatprep.subr.bf16.mxu0 0
      %4253 = vmatpush2.bf16.msra.mxu0 0
      %4254 = vmatprep.subr.bf16.mxu0 0
      %4255 = vmatpush2.bf16.msra.mxu0 0
      %4256 = vmatprep.subr.bf16.mxu0 0
      %4257 = vmatpush2.bf16.msra.mxu0 0
      %4258 = vmatprep.subr.bf16.mxu0 0
      %4259 = vmatpush2.bf16.msra.mxu0 0
      %4260 = vmatprep.subr.bf16.mxu0 0
      %4261 = vmatpush2.bf16.msra.mxu0 0
      %4262 = vmatprep.mubr.bf16.mxu0 0
      %4263 = vmatmul.mubr.bf16.gmra.mxu0 %v4198
      %v4264 = vpop.f32.mrf.mxu0
      %v4265 = vadd.f32 0.0, %v4264
      %v4266 = vpop.f32.mrf.mxu0
      %v4267 = vpop.f32.mrf.mxu0
      %v4268 = vadd.f32 0.0, %v4267
      %v4269 = vpop.f32.mrf.mxu0
      %4270 = vmatprep.mubr.bf16.mxu0 0
      %4271 = vmatmul.mubr.bf16.gmra.mxu0 %v4199
      %v4272 = vpop.f32.mrf.mxu0
      %v4273 = vadd.f32 0.0, %v4272
      %v4274 = vpop.f32.mrf.mxu0
      %v4275 = vpop.f32.mrf.mxu0
      %v4276 = vadd.f32 0.0, %v4275
      %v4277 = vpop.f32.mrf.mxu0
      %4278 = vdwg.mxu0
      %4279 = vrot.lane.b32.xlu0 %v1309, 104
      %v4280 = vpop.permute.xlu0 %4279
      %4281 = vrot.lane.b32.xlu0 %v1310, 104
      %v4282 = vpop.permute.xlu0 %4281
      %4283 = vrot.lane.b32.xlu0 %v1311, 104
      %v4284 = vpop.permute.xlu0 %4283
      %4285 = vrot.lane.b32.xlu0 %v1312, 104
      %v4286 = vpop.permute.xlu0 %4285
      %4287 = vrot.lane.b32.xlu0 %v1313, 104
      %v4288 = vpop.permute.xlu0 %4287
      %4289 = vrot.lane.b32.xlu0 %v1314, 104
      %v4290 = vpop.permute.xlu0 %4289
      %4291 = vrot.lane.b32.xlu0 %v1315, 104
      %v4292 = vpop.permute.xlu0 %4291
      %4293 = vrot.lane.b32.xlu0 %v1316, 104
      %v4294 = vpop.permute.xlu0 %4293
      %4303 = vmatprep.subr.bf16.mxu0 0
      %4304 = vmatpush1.bf16.msra.mxu0 %v4294
      %4305 = vmatprep.subr.bf16.mxu0 0
      %4306 = vmatpush1.bf16.msra.mxu0 %v4292
      %4307 = vmatprep.subr.bf16.mxu0 0
      %4308 = vmatpush1.bf16.msra.mxu0 %v4290
      %4309 = vmatprep.subr.bf16.mxu0 0
      %4310 = vmatpush1.bf16.msra.mxu0 %v4288
      %4311 = vmatprep.subr.bf16.mxu0 0
      %4312 = vmatpush1.bf16.msra.mxu0 %v4286
      %4313 = vmatprep.subr.bf16.mxu0 0
      %4314 = vmatpush1.bf16.msra.mxu0 %v4284
      %4315 = vmatprep.subr.bf16.mxu0 0
      %4316 = vmatpush1.bf16.msra.mxu0 %v4282
      %4317 = vmatprep.subr.bf16.mxu0 0
      %4318 = vmatpush1.bf16.msra.mxu0 %v4280
      %4319 = vmatprep.subr.bf16.mxu0 0
      %4320 = vmatpush2.bf16.msra.mxu0 0
      %4321 = vmatprep.subr.bf16.mxu0 0
      %4322 = vmatpush2.bf16.msra.mxu0 0
      %4323 = vmatprep.subr.bf16.mxu0 0
      %4324 = vmatpush2.bf16.msra.mxu0 0
      %4325 = vmatprep.subr.bf16.mxu0 0
      %4326 = vmatpush2.bf16.msra.mxu0 0
      %4327 = vmatprep.subr.bf16.mxu0 0
      %4328 = vmatpush2.bf16.msra.mxu0 0
      %4329 = vmatprep.subr.bf16.mxu0 0
      %4330 = vmatpush2.bf16.msra.mxu0 0
      %4331 = vmatprep.subr.bf16.mxu0 0
      %4332 = vmatpush2.bf16.msra.mxu0 0
      %4333 = vmatprep.subr.bf16.mxu0 0
      %4334 = vmatpush2.bf16.msra.mxu0 0
      %4335 = vmatprep.mubr.bf16.mxu0 0
      %4336 = vmatmul.mubr.bf16.gmra.mxu0 %v4200
      %v4337 = vpop.f32.mrf.mxu0
      %v4338 = vadd.f32 0.0, %v4337
      %v4339 = vpop.f32.mrf.mxu0
      %v4340 = vpop.f32.mrf.mxu0
      %v4341 = vadd.f32 0.0, %v4340
      %v4342 = vpop.f32.mrf.mxu0
      %4343 = vmatprep.mubr.bf16.mxu0 0
      %4344 = vmatmul.mubr.bf16.gmra.mxu0 %v4201
      %v4345 = vpop.f32.mrf.mxu0
      %v4346 = vadd.f32 0.0, %v4345
      %v4347 = vpop.f32.mrf.mxu0
      %v4348 = vpop.f32.mrf.mxu0
      %v4349 = vadd.f32 0.0, %v4348
      %v4350 = vpop.f32.mrf.mxu0
      %4351 = vdwg.mxu0
      %4352 = vrot.lane.b32.xlu0 %v1406, 104
      %v4353 = vpop.permute.xlu0 %4352
      %4354 = vrot.lane.b32.xlu0 %v1407, 104
      %v4355 = vpop.permute.xlu0 %4354
      %4356 = vrot.lane.b32.xlu0 %v1408, 104
      %v4357 = vpop.permute.xlu0 %4356
      %4358 = vrot.lane.b32.xlu0 %v1409, 104
      %v4359 = vpop.permute.xlu0 %4358
      %4360 = vrot.lane.b32.xlu0 %v1410, 104
      %v4361 = vpop.permute.xlu0 %4360
      %4362 = vrot.lane.b32.xlu0 %v1411, 104
      %v4363 = vpop.permute.xlu0 %4362
      %4364 = vrot.lane.b32.xlu0 %v1412, 104
      %v4365 = vpop.permute.xlu0 %4364
      %4366 = vrot.lane.b32.xlu0 %v1413, 104
      %v4367 = vpop.permute.xlu0 %4366
      %4376 = vmatprep.subr.bf16.mxu0 0
      %4377 = vmatpush1.bf16.msra.mxu0 %v4367
      %4378 = vmatprep.subr.bf16.mxu0 0
      %4379 = vmatpush1.bf16.msra.mxu0 %v4365
      %4380 = vmatprep.subr.bf16.mxu0 0
      %4381 = vmatpush1.bf16.msra.mxu0 %v4363
      %4382 = vmatprep.subr.bf16.mxu0 0
      %4383 = vmatpush1.bf16.msra.mxu0 %v4361
      %4384 = vmatprep.subr.bf16.mxu0 0
      %4385 = vmatpush1.bf16.msra.mxu0 %v4359
      %4386 = vmatprep.subr.bf16.mxu0 0
      %4387 = vmatpush1.bf16.msra.mxu0 %v4357
      %4388 = vmatprep.subr.bf16.mxu0 0
      %4389 = vmatpush1.bf16.msra.mxu0 %v4355
      %4390 = vmatprep.subr.bf16.mxu0 0
      %4391 = vmatpush1.bf16.msra.mxu0 %v4353
      %4392 = vmatprep.subr.bf16.mxu0 0
      %4393 = vmatpush2.bf16.msra.mxu0 0
      %4394 = vmatprep.subr.bf16.mxu0 0
      %4395 = vmatpush2.bf16.msra.mxu0 0
      %4396 = vmatprep.subr.bf16.mxu0 0
      %4397 = vmatpush2.bf16.msra.mxu0 0
      %4398 = vmatprep.subr.bf16.mxu0 0
      %4399 = vmatpush2.bf16.msra.mxu0 0
      %4400 = vmatprep.subr.bf16.mxu0 0
      %4401 = vmatpush2.bf16.msra.mxu0 0
      %4402 = vmatprep.subr.bf16.mxu0 0
      %4403 = vmatpush2.bf16.msra.mxu0 0
      %4404 = vmatprep.subr.bf16.mxu0 0
      %4405 = vmatpush2.bf16.msra.mxu0 0
      %4406 = vmatprep.subr.bf16.mxu0 0
      %4407 = vmatpush2.bf16.msra.mxu0 0
      %4408 = vmatprep.mubr.bf16.mxu0 0
      %4409 = vmatmul.mubr.bf16.gmra.mxu0 %v4202
      %v4410 = vpop.f32.mrf.mxu0
      %v4411 = vadd.f32 0.0, %v4410
      %v4412 = vpop.f32.mrf.mxu0
      %v4413 = vpop.f32.mrf.mxu0
      %v4414 = vadd.f32 0.0, %v4413
      %v4415 = vpop.f32.mrf.mxu0
      %4416 = vmatprep.mubr.bf16.mxu0 0
      %4417 = vmatmul.mubr.bf16.gmra.mxu0 %v4203
      %v4418 = vpop.f32.mrf.mxu0
      %v4419 = vadd.f32 0.0, %v4418
      %v4420 = vpop.f32.mrf.mxu0
      %v4421 = vpop.f32.mrf.mxu0
      %v4422 = vadd.f32 0.0, %v4421
      %v4423 = vpop.f32.mrf.mxu0
      %4424 = vdwg.mxu0
      %4425 = vrot.lane.b32.xlu0 %v1503, 104
      %v4426 = vpop.permute.xlu0 %4425
      %4427 = vrot.lane.b32.xlu0 %v1504, 104
      %v4428 = vpop.permute.xlu0 %4427
      %4429 = vrot.lane.b32.xlu0 %v1505, 104
      %v4430 = vpop.permute.xlu0 %4429
      %4431 = vrot.lane.b32.xlu0 %v1506, 104
      %v4432 = vpop.permute.xlu0 %4431
      %4433 = vrot.lane.b32.xlu0 %v1507, 104
      %v4434 = vpop.permute.xlu0 %4433
      %4435 = vrot.lane.b32.xlu0 %v1508, 104
      %v4436 = vpop.permute.xlu0 %4435
      %4437 = vrot.lane.b32.xlu0 %v1509, 104
      %v4438 = vpop.permute.xlu0 %4437
      %4439 = vrot.lane.b32.xlu0 %v1510, 104
      %v4440 = vpop.permute.xlu0 %4439
      %4449 = vmatprep.subr.bf16.mxu0 0
      %4450 = vmatpush1.bf16.msra.mxu0 %v4440
      %4451 = vmatprep.subr.bf16.mxu0 0
      %4452 = vmatpush1.bf16.msra.mxu0 %v4438
      %4453 = vmatprep.subr.bf16.mxu0 0
      %4454 = vmatpush1.bf16.msra.mxu0 %v4436
      %4455 = vmatprep.subr.bf16.mxu0 0
      %4456 = vmatpush1.bf16.msra.mxu0 %v4434
      %4457 = vmatprep.subr.bf16.mxu0 0
      %4458 = vmatpush1.bf16.msra.mxu0 %v4432
      %4459 = vmatprep.subr.bf16.mxu0 0
      %4460 = vmatpush1.bf16.msra.mxu0 %v4430
      %4461 = vmatprep.subr.bf16.mxu0 0
      %4462 = vmatpush1.bf16.msra.mxu0 %v4428
      %4463 = vmatprep.subr.bf16.mxu0 0
      %4464 = vmatpush1.bf16.msra.mxu0 %v4426
      %4465 = vmatprep.subr.bf16.mxu0 0
      %4466 = vmatpush2.bf16.msra.mxu0 0
      %4467 = vmatprep.subr.bf16.mxu0 0
      %4468 = vmatpush2.bf16.msra.mxu0 0
      %4469 = vmatprep.subr.bf16.mxu0 0
      %4470 = vmatpush2.bf16.msra.mxu0 0
      %4471 = vmatprep.subr.bf16.mxu0 0
      %4472 = vmatpush2.bf16.msra.mxu0 0
      %4473 = vmatprep.subr.bf16.mxu0 0
      %4474 = vmatpush2.bf16.msra.mxu0 0
      %4475 = vmatprep.subr.bf16.mxu0 0
      %4476 = vmatpush2.bf16.msra.mxu0 0
      %4477 = vmatprep.subr.bf16.mxu0 0
      %4478 = vmatpush2.bf16.msra.mxu0 0
      %4479 = vmatprep.subr.bf16.mxu0 0
      %4480 = vmatpush2.bf16.msra.mxu0 0
      %4481 = vmatprep.mubr.bf16.mxu0 0
      %4482 = vmatmul.mubr.bf16.gmra.mxu0 %v4204
      %v4483 = vpop.f32.mrf.mxu0
      %v4484 = vadd.f32 0.0, %v4483
      %v4485 = vpop.f32.mrf.mxu0
      %v4486 = vpop.f32.mrf.mxu0
      %v4487 = vadd.f32 0.0, %v4486
      %v4488 = vpop.f32.mrf.mxu0
      %4489 = vmatprep.mubr.bf16.mxu0 0
      %4490 = vmatmul.mubr.bf16.gmra.mxu0 %v4205
      %v4491 = vpop.f32.mrf.mxu0
      %v4492 = vadd.f32 0.0, %v4491
      %v4493 = vpop.f32.mrf.mxu0
      %v4494 = vpop.f32.mrf.mxu0
      %v4495 = vadd.f32 0.0, %v4494
      %v4496 = vpop.f32.mrf.mxu0
      %4497 = vdwg.mxu0
      %v4498 = vpack.c.bf16 %v4268, %v4265
      %v4499 = vpack.c.bf16 %v4276, %v4273
      %v4500 = vpack.c.bf16 %v4341, %v4338
      %v4501 = vpack.c.bf16 %v4349, %v4346
      %v4502 = vpack.c.bf16 %v4414, %v4411
      %v4503 = vpack.c.bf16 %v4422, %v4419
      %v4504 = vpack.c.bf16 %v4487, %v4484
      %v4505 = vpack.c.bf16 %v4495, %v4492
      %v4514 = vunpack.c.l.b16 %v4498
      %v4515 = vunpack.c.h.b16 %v4498
      %v4516 = vunpack.c.l.b16 %v4499
      %v4517 = vunpack.c.h.b16 %v4499
      %v4518 = vunpack.c.l.b16 %v4500
      %v4519 = vunpack.c.h.b16 %v4500
      %v4520 = vunpack.c.l.b16 %v4501
      %v4521 = vunpack.c.h.b16 %v4501
      %v4522 = vunpack.c.l.b16 %v4502
      %v4523 = vunpack.c.h.b16 %v4502
      %v4524 = vunpack.c.l.b16 %v4503
      %v4525 = vunpack.c.h.b16 %v4503
      %v4526 = vunpack.c.l.b16 %v4504
      %v4527 = vunpack.c.h.b16 %v4504
      %v4528 = vunpack.c.l.b16 %v4505
      %v4529 = vunpack.c.h.b16 %v4505
      %v4530 = vpack.c.b16 %v4514, %v4514
      %v4531 = vpack.c.b16 %v4515, %v4515
      %v4532 = vpack.c.b16 %v4516, %v4516
      %v4533 = vpack.c.b16 %v4517, %v4517
      %v4534 = vpack.c.b16 %v4518, %v4518
      %v4535 = vpack.c.b16 %v4519, %v4519
      %v4536 = vpack.c.b16 %v4520, %v4520
      %v4537 = vpack.c.b16 %v4521, %v4521
      %v4538 = vpack.c.b16 %v4522, %v4522
      %v4539 = vpack.c.b16 %v4523, %v4523
      %v4540 = vpack.c.b16 %v4524, %v4524
      %v4541 = vpack.c.b16 %v4525, %v4525
      %v4542 = vpack.c.b16 %v4526, %v4526
      %v4543 = vpack.c.b16 %v4527, %v4527
      %v4544 = vpack.c.b16 %v4528, %v4528
      %v4545 = vpack.c.b16 %v4529, %v4529
      %4546 = vrot.lane.b32.xlu0 %v4530, 24
      %v4547 = vpop.permute.xlu0 %4546
      %4548 = vrot.lane.b32.xlu0 %v4531, 24
      %v4549 = vpop.permute.xlu0 %4548
      %4550 = vrot.lane.b32.xlu0 %v4532, 24
      %v4551 = vpop.permute.xlu0 %4550
      %4552 = vrot.lane.b32.xlu0 %v4533, 24
      %v4553 = vpop.permute.xlu0 %4552
      %4554 = vrot.lane.b32.xlu0 %v4534, 24
      %v4555 = vpop.permute.xlu0 %4554
      %4556 = vrot.lane.b32.xlu0 %v4535, 24
      %v4557 = vpop.permute.xlu0 %4556
      %4558 = vrot.lane.b32.xlu0 %v4536, 24
      %v4559 = vpop.permute.xlu0 %4558
      %4560 = vrot.lane.b32.xlu0 %v4537, 24
      %v4561 = vpop.permute.xlu0 %4560
      %4562 = vrot.lane.b32.xlu0 %v4538, 24
      %v4563 = vpop.permute.xlu0 %4562
      %4564 = vrot.lane.b32.xlu0 %v4539, 24
      %v4565 = vpop.permute.xlu0 %4564
      %4566 = vrot.lane.b32.xlu0 %v4540, 24
      %v4567 = vpop.permute.xlu0 %4566
      %4568 = vrot.lane.b32.xlu0 %v4541, 24
      %v4569 = vpop.permute.xlu0 %4568
      %4570 = vrot.lane.b32.xlu0 %v4542, 24
      %v4571 = vpop.permute.xlu0 %4570
      %4572 = vrot.lane.b32.xlu0 %v4543, 24
      %v4573 = vpop.permute.xlu0 %4572
      %4574 = vrot.lane.b32.xlu0 %v4544, 24
      %v4575 = vpop.permute.xlu0 %4574
      %4576 = vrot.lane.b32.xlu0 %v4545, 24
      %v4577 = vpop.permute.xlu0 %4576
      %vm4594 = vcmask 257216
      %4595 = vst.msk [vmem:[%s254] sm:$0xf] %vm4594, %v4547
      %4596 = vst.msk [vmem:[%s254 + $0x4] sm:$0xf] %vm4594, %v4549
      %4597 = vst.msk [vmem:[%s254 + $0x8] sm:$0xf] %vm4594, %v4551
      %vm4598 = vcmask 254144
      %vm4599 = vmand %vm4598, %vm1637
      %v4600 = vld [vmem:[%s254 + $0xc] sm:$0x1]
      %v4601 = vsel %vm4599, %v4553, %v4600
      %4602 = vst [vmem:[%s254 + $0xc] sm:$0x1] %v4601
      %4603 = vst.msk [vmem:[%s254 + $0x10] sm:$0xf] %vm4594, %v4555
      %4604 = vst.msk [vmem:[%s254 + $0x14] sm:$0xf] %vm4594, %v4557
      %4605 = vst.msk [vmem:[%s254 + $0x18] sm:$0xf] %vm4594, %v4559
      %v4606 = vld [vmem:[%s254 + $0x1c] sm:$0x1]
      %v4607 = vsel %vm4599, %v4561, %v4606
      %4608 = vst [vmem:[%s254 + $0x1c] sm:$0x1] %v4607
      %4609 = vst.msk [vmem:[%s254 + $0x20] sm:$0xf] %vm4594, %v4563
      %4610 = vst.msk [vmem:[%s254 + $0x24] sm:$0xf] %vm4594, %v4565
      %4611 = vst.msk [vmem:[%s254 + $0x28] sm:$0xf] %vm4594, %v4567
      %v4612 = vld [vmem:[%s254 + $0x2c] sm:$0x1]
      %v4613 = vsel %vm4599, %v4569, %v4612
      %4614 = vst [vmem:[%s254 + $0x2c] sm:$0x1] %v4613
      %4615 = vst.msk [vmem:[%s254 + $0x30] sm:$0xf] %vm4594, %v4571
      %4616 = vst.msk [vmem:[%s254 + $0x34] sm:$0xf] %vm4594, %v4573
      %4617 = vst.msk [vmem:[%s254 + $0x38] sm:$0xf] %vm4594, %v4575
      %v4618 = vld [vmem:[%s254 + $0x3c] sm:$0x1]
      %v4619 = vsel %vm4599, %v4577, %v4618
      %4620 = vst [vmem:[%s254 + $0x3c] sm:$0x1] %v4619
      %s4621 = smul.u32 4, %s15
      %p4622 = scmp.lt.s32.totalorder %s4621, 7
      %s4623 = scalar_select %p4622, %s4621, 7
      %s4624 = smul.addr %s4623, 4
      %s4625 = smul.addr %s4624, 4
      %s4626 = scalar_lea.vmem %s4, %s4625
      // Predicated region
      $region37: #{afgsa_forward.3} parent=35 // pred_check
        %p4627 = pneg %p132
      $region38: #{afgsa_forward.3} parent=35 // pred_check_branch
        %4629 = sbr.rel (%p4627) target = $region40
      $region39: #{afgsa_forward.3} parent=35 // pred_region
        %s4630 = smul.u32 4, %s15
      $region40: #{afgsa_forward.3} parent=35 // pred_fallthru
        _
    $region36: #{afgsa_forward.3} parent=5 // pred_fallthru
      _
    %p4631 = scmp.le.s32.totalorder 2, %s10
    // Predicated region
    $region41: #{afgsa_forward.3} parent=5 // pred_check
      %p4632 = pneg %p4631
    $region42: #{afgsa_forward.3} parent=5 // pred_check_branch
      %4634 = sbr.rel (%p4632) target = $region44
    $region43: #{afgsa_forward.3} parent=5 // pred_region
      %s4635 = ssub.s32 %s10, 2
      // Predicated region
      $region45: #{afgsa_forward.3} parent=43 // pred_check
        %p4636 = pneg %p138
      $region46: #{afgsa_forward.3} parent=43 // pred_check_branch
        %4638 = sbr.rel (%p4636) target = $region48
      $region47: #{afgsa_forward.3} parent=43 // pred_region
        %s4639 = smul.u32 4, %s16
        %p4640 = scmp.lt.s32.totalorder %s4639, 7
        %s4641 = scalar_select %p4640, %s4639, 7
        %s4642 = smul.addr %s4641, 4
        %s4643 = smul.addr %s4642, 4
        %s4644 = scalar_lea.vmem %s4, %s4643
      $region48: #{afgsa_forward.3} parent=43 // pred_fallthru
        _
    $region44: #{afgsa_forward.3} parent=5 // pred_fallthru
      _
  $region6: #{afgsa_forward.3} parent=0 // loop_footer
    %s14 = sadd.s32 1, %s10
  $region7: #{afgsa_forward.3} parent=0 // loop_footer_branch
    %9 = sbr.rel target = $region3
  $region8: #{afgsa_forward.3} parent=0 // loop_exit
    _

</llo_original>
